<compile_context>
chip_gen: v5e
topology: v5e:2x2
jax: 0.10.0
libtpu: 0.0.40
codegen_flags: <defaults>
</compile_context>

<pallas_src>
import jax
import jax.numpy as jnp
from jax.experimental import pallas as pl
from jax.experimental.pallas import tpu as pltpu

EPS = 1e-5
COMPUTE_DTYPE = jnp.bfloat16           # MXU operand / intermediate-activation dtype


# --------------------------- generation-aware VMEM budget ---------------------------
_VMEM_LIMIT_CACHE = None


def _vmem_limit_bytes():
    """~75% of physical per-core VMEM: 48 MiB on v7x (64 MiB), 96 MiB on v5e/v6e (128 MiB)."""
    global _VMEM_LIMIT_CACHE
    if _VMEM_LIMIT_CACHE is None:
        try:
            cap = int(pltpu.get_tpu_info().vmem_capacity_bytes)
        except Exception:
            cap = 64 * 1024 * 1024
        _VMEM_LIMIT_CACHE = max(32 * 1024 * 1024,
                                min((cap * 3) // 4, 96 * 1024 * 1024))
    return _VMEM_LIMIT_CACHE


def _pick_th(ho, w, wo, cin, cout, vmem_limit):
    """Rows per pass-1 grid step: largest divisor of Ho that fits the VMEM budget (<=32)."""
    budget = vmem_limit // 3
    per_row = (2 * (w * cin * 2 + wo * cout * 2)   # double-buffered x-main + bf16 conv-out
               + 2 * wo * 9 * cin * 2              # im2col patches (bf16, with slack)
               + wo * cout * 4)                    # f32 accumulator
    fixed = 2 * (2 * w * cin * 2 + 9 * cin * cout * 2 + 2 * cout * 4)
    cap = max(1, (budget - fixed) // max(per_row, 1))
    cap = int(min(cap, ho, 32))
    for th in range(cap, 0, -1):
        if ho % th == 0:
            return th
    return 1


def _pick_tm(r, l, vmem_limit):
    """Rows per pass-2 grid step (multiple of 8), VMEM-budgeted, >=2 steps when possible."""
    budget = vmem_limit // 3
    per_row = l * 16                               # bf16 in + f32 compute + out, buffered
    tm = max(8, (budget // max(per_row, 1)) // 8 * 8)
    if r >= 16:
        half = -(-r // 2)
        tm = min(tm, ((half + 7) // 8) * 8)        # at least 2 grid steps for megacore
    if tm >= r:
        return r                                   # single full-extent block
    return tm


# ----------------------- pass 1: conv row-tile + partial BN stats -----------------------
def _conv_stats_kernel(xm_ref, h0_ref, h1_ref, w_ref, conv_ref, stats_ref):
    """One TH-row tile of a 3x3 VALID conv + per-tile BN partial sums.

    xm_ref   : (TH, W, Cin)       bf16   main input rows [t*TH, (t+1)*TH)
    h0_ref   : (1, W, Cin)        bf16   halo row (t+1)*TH
    h1_ref   : (1, W, Cin)        bf16   halo row (t+1)*TH + 1
    w_ref    : (9*Cin, Cout)      bf16   weights, flat index = kw*3*Cin + kh*Cin + ci
    conv_ref : (TH*Wo, Cout)      bf16   raw conv output tile (pre-BN, pre-ReLU)
    stats_ref: (2, Cout)          f32    [sum ; sum of squares] over the tile
    """
    th = xm_ref.shape[0]
    w_px = xm_ref.shape[1]
    wo = w_px - 2

    # All rows of the (TH+2)-row halo window, each a 2-D (W, Cin) slab.
    rows = [xm_ref[r] for r in range(th)] + [h0_ref[0], h1_ref[0]]

    # In-VMEM im2col: per output row build a (Wo, 9*Cin) patch from 2-D slices/concats
    # only (no reshapes), then stack all rows into one (TH*Wo, 9*Cin) matrix.
    patch_list = []
    for r in range(th):
        row3 = jnp.concatenate([rows[r], rows[r + 1], rows[r + 2]], axis=-1)   # (W, 3*Cin)
        patch_list.append(jnp.concatenate(
            [row3[kw:kw + wo, :] for kw in range(3)], axis=-1))                # (Wo, 9*Cin)
    patches = jnp.concatenate(patch_list, axis=0)                              # (TH*Wo, 9*Cin)

    # Single MXU matmul with contraction dim K = 9*Cin, f32 accumulation.
    acc = jnp.dot(patches, w_ref[...], preferred_element_type=jnp.float32)     # (TH*Wo, Cout)

    conv_ref[...] = acc.astype(conv_ref.dtype)
    s1 = jnp.sum(acc, axis=0, keepdims=True)
    s2 = jnp.sum(acc * acc, axis=0, keepdims=True)
    stats_ref[...] = jnp.concatenate([s1, s2], axis=0)


# ----------------------- pass 2: normalize + affine + ReLU -----------------------
def _bn_relu_kernel(y_ref, scale_ref, shift_ref, o_ref):
    """y_ref: (TM, L) bf16; scale/shift: (1, L) f32; o_ref: (TM, L) bf16 or f32."""
    y = y_ref[...].astype(jnp.float32)
    o_ref[...] = jnp.maximum(y * scale_ref[...] + shift_ref[...], 0.0).astype(o_ref.dtype)


def _conv_bn_relu_stage(x_nhwc, w_hwio, gamma, beta, out_dtype):
    """One Conv3x3(valid) + BatchNorm(batch stats) + ReLU stage. x: (N,H,W,Cin)."""
    N, H, W, Cin = x_nhwc.shape
    KH, KW, _, Cout = w_hwio.shape
    Ho, Wo = H - KH + 1, W - KW + 1

    vmem_limit = _vmem_limit_bytes()
    TH = _pick_th(Ho, W, Wo, Cin, Cout, vmem_limit)
    T = Ho // TH

    x_lo = x_nhwc.astype(COMPUTE_DTYPE)
    # Weight flattened to (9*Cin, Cout) with flat index kw*3*Cin + kh*Cin + ci,
    # matching the in-kernel im2col channel ordering. Done once in the wrapper.
    w_flat = jnp.transpose(w_hwio, (1, 0, 2, 3)).reshape(KH * KW * Cin, Cout)
    w_flat = w_flat.astype(COMPUTE_DTYPE)

    # ---- pass 1: (N, T) row-tile grid; halo expressed as two extra 1-row views ----
    conv, stats = pl.pallas_call(
        _conv_stats_kernel,
        out_shape=(
            jax.ShapeDtypeStruct((N, T, TH * Wo, Cout), COMPUTE_DTYPE),
            jax.ShapeDtypeStruct((N, T, 2, Cout), jnp.float32),
        ),
        grid=(N, T),
        in_specs=[
            pl.BlockSpec((None, TH, W, Cin), lambda n, t: (n, t, 0, 0)),
            pl.BlockSpec((None, 1, W, Cin), lambda n, t: (n, (t + 1) * TH, 0, 0)),
            pl.BlockSpec((None, 1, W, Cin), lambda n, t: (n, (t + 1) * TH + 1, 0, 0)),
            pl.BlockSpec((KH * KW * Cin, Cout), lambda n, t: (0, 0)),
        ],
        out_specs=(
            pl.BlockSpec((None, None, TH * Wo, Cout), lambda n, t: (n, t, 0, 0)),
            pl.BlockSpec((None, None, 2, Cout), lambda n, t: (n, t, 0, 0)),
        ),
        compiler_params=pltpu.CompilerParams(
            dimension_semantics=("parallel", "parallel"),
            vmem_limit_bytes=vmem_limit,
        ),
    )(x_lo, x_lo, x_lo, w_flat)

    # ---- tiny global BN reduction (C channels) in plain-JAX glue ----
    m = N * Ho * Wo
    sums = jnp.sum(stats, axis=(0, 1))                    # (2, Cout) f32
    mean = sums[0] / m
    # TODO(synk): switch to shifted moments if used at very large N*H*W (cancellation).
    var = jnp.maximum(sums[1] / m - mean * mean, 0.0)     # biased variance
    scale = gamma * jax.lax.rsqrt(var + EPS)
    shift = beta - mean * scale                           # conv bias cancels under batch BN

    # ---- pass 2: lane-dense (N*Ho, Wo*Cout) normalize + affine + ReLU ----
    R, L = N * Ho, Wo * Cout
    y2d = conv.reshape(R, L)                              # contiguous view, no data movement
    scale_row = jnp.tile(scale, Wo).reshape(1, L).astype(jnp.float32)
    shift_row = jnp.tile(shift, Wo).reshape(1, L).astype(jnp.float32)
    TM = _pick_tm(R, L, vmem_limit)

    out = pl.pallas_call(
        _bn_relu_kernel,
        out_shape=jax.ShapeDtypeStruct((R, L), out_dtype),
        grid=(pl.cdiv(R, TM),),
        in_specs=[
            pl.BlockSpec((TM, L), lambda i: (i, 0)),
            pl.BlockSpec((1, L), lambda i: (0, 0)),
            pl.BlockSpec((1, L), lambda i: (0, 0)),
        ],
        out_specs=pl.BlockSpec((TM, L), lambda i: (i, 0)),
        compiler_params=pltpu.CompilerParams(
            dimension_semantics=("parallel",),
            vmem_limit_bytes=vmem_limit,
        ),
    )(y2d, scale_row, shift_row)
    return out.reshape(N, Ho, Wo, Cout)


def conv_block(x_nchw, params):
    """ConvBlock forward. Input/output NCHW (PyTorch convention), f32 output.

    The Conv2d biases (b1, b2) are intentionally not applied inside the kernels:
    under training-mode BatchNorm a per-channel bias is exactly cancelled by the
    batch-mean subtraction, so the output is unchanged.
    """
    x = jnp.transpose(x_nchw, (0, 2, 3, 1))   # NCHW -> NHWC
    # Stage 1 emits bf16 (it directly feeds stage 2's bf16 MXU operands).
    y = _conv_bn_relu_stage(x, params["w1"], params["g1"], params["beta1"], COMPUTE_DTYPE)
    y = _conv_bn_relu_stage(y, params["w2"], params["g2"], params["beta2"], jnp.float32)
    return jnp.transpose(y, (0, 3, 1, 2))     # NHWC -> NCHW


# ----------------------- pure-JAX references (for checking) -----------------------
def _ref_stage_f32(x_nhwc, w_hwio, b, gamma, beta):
    y = jax.lax.conv_general_dilated(
        x_nhwc, w_hwio, window_strides=(1, 1), padding="VALID",
        dimension_numbers=("NHWC", "HWIO", "NHWC"),
        preferred_element_type=jnp.float32)
    y = y + b.reshape(1, 1, 1, -1)
    mean = jnp.mean(y, axis=(0, 1, 2), keepdims=True)
    var = jnp.mean(jnp.square(y - mean), axis=(0, 1, 2), keepdims=True)
    y = (y - mean) * jax.lax.rsqrt(var + EPS)
    return jnp.maximum(y * gamma.reshape(1, 1, 1, -1) + beta.reshape(1, 1, 1, -1), 0.0)


def conv_block_ref_f32(x_nchw, p):
    x = jnp.transpose(x_nchw, (0, 2, 3, 1))
    y = _ref_stage_f32(x, p["w1"], p["b1"], p["g1"], p["beta1"])
    y = _ref_stage_f32(y, p["w2"], p["b2"], p["g2"], p["beta2"])
    return jnp.transpose(y, (0, 3, 1, 2))


def _ref_stage_matched(x_nhwc, w_hwio, gamma, beta):
    """Models kernel numerics: bf16 conv operands, f32 accumulation, bias dropped,
    bf16 storage of the conv activation, stats computed from the f32 conv values."""
    y = jax.lax.conv_general_dilated(
        x_nhwc.astype(COMPUTE_DTYPE), w_hwio.astype(COMPUTE_DTYPE),
        window_strides=(1, 1), padding="VALID",
        dimension_numbers=("NHWC", "HWIO", "NHWC"),
        preferred_element_type=jnp.float32)
    mean = jnp.mean(y, axis=(0, 1, 2))
    var = jnp.maximum(jnp.mean(y * y, axis=(0, 1, 2)) - mean * mean, 0.0)
    scale = gamma * jax.lax.rsqrt(var + EPS)
    shift = beta - mean * scale
    yq = y.astype(COMPUTE_DTYPE).astype(jnp.float32)     # bf16 storage of the conv
    return jnp.maximum(yq * scale + shift, 0.0)


def conv_block_ref_matched(x_nchw, p):
    x = jnp.transpose(x_nchw, (0, 2, 3, 1))
    y = _ref_stage_matched(x, p["w1"], p["g1"], p["beta1"])
    y = _ref_stage_matched(y, p["w2"], p["g2"], p["beta2"])
    return jnp.transpose(y, (0, 3, 1, 2))


# ------------------------------------ main ------------------------------------
if __name__ == "__main__":
    key = jax.random.PRNGKey(0)
    in_channels, out_channels = 4, 8
    N, H, W = 2, 16, 16

    ks = jax.random.split(key, 9)
    params = {
        # weights stored HWIO: (kh, kw, cin, cout)
        "w1": 0.1 * jax.random.normal(ks[0], (3, 3, in_channels, out_channels), jnp.float32),
        "b1": 0.1 * jax.random.normal(ks[1], (out_channels,), jnp.float32),
        "g1": 1.0 + 0.1 * jax.random.normal(ks[2], (out_channels,), jnp.float32),
        "beta1": 0.1 * jax.random.normal(ks[3], (out_channels,), jnp.float32),
        "w2": 0.1 * jax.random.normal(ks[4], (3, 3, out_channels, out_channels), jnp.float32),
        "b2": 0.1 * jax.random.normal(ks[5], (out_channels,), jnp.float32),
        "g2": 1.0 + 0.1 * jax.random.normal(ks[6], (out_channels,), jnp.float32),
        "beta2": 0.1 * jax.random.normal(ks[7], (out_channels,), jnp.float32),
    }
    x = jax.random.normal(ks[8], (N, in_channels, H, W), jnp.float32)

    out = jax.block_until_ready(jax.jit(conv_block)(x, params))
    assert out.shape == (N, out_channels, H - 4, W - 4), out.shape
    assert out.dtype == jnp.float32, out.dtype

    # Tight check vs a reference that models the kernel's numerics exactly
    # (bf16 operands, f32 accumulation, bf16 intermediate activation, no bias).
    ref_m = jax.block_until_ready(conv_block_ref_matched(x, params))
    err_m = float(jnp.max(jnp.abs(out - ref_m)))
    assert jnp.allclose(out, ref_m, rtol=2e-2, atol=2e-2), ("matched-ref err", err_m)

    # Loose sanity check vs the PyTorch-faithful pure-f32 reference (with biases);
    # the difference is bf16 operand + intermediate-activation quantization.
    ref_f = jax.block_until_ready(conv_block_ref_f32(x, params))
    err_f = float(jnp.max(jnp.abs(out - ref_f)))
    assert jnp.allclose(out, ref_f, rtol=1e-1, atol=1e-1), ("f32-ref err", err_f)

    print("KERNEL_OK")
</pallas_src>

<mosaic_0001>
module attributes {stable_mosaic.version = 11 : i64} {
  func.func @_bn_relu_kernel(%arg0: i32, %arg1: memref<16x112xbf16, #tpu.memory_space<vmem>>, %arg2: memref<1x112xf32, #tpu.memory_space<vmem>>, %arg3: memref<1x112xf32, #tpu.memory_space<vmem>>, %arg4: memref<16x112xbf16, #tpu.memory_space<vmem>>) attributes {dimension_semantics = [#tpu.dimension_semantics<parallel>], iteration_bounds = array<i64: 2>, scalar_prefetch = 0 : i64, scratch_operands = 0 : i64, tpu.core_type = #tpu.core_type<tc>, window_params = [{transform_indices = @transform_0, window_bounds = array<i64: 16, 112>}, {pipeline_mode = #tpu.pipeline_mode<synchronous>, transform_indices = @transform_1, window_bounds = array<i64: 1, 112>}, {pipeline_mode = #tpu.pipeline_mode<synchronous>, transform_indices = @transform_2, window_bounds = array<i64: 1, 112>}, {transform_indices = @transform_3, window_bounds = array<i64: 16, 112>}]} {
    %c0 = arith.constant 0 : index
    %c0_0 = arith.constant 0 : index
    %0 = vector.load %arg1[%c0, %c0_0] : memref<16x112xbf16, #tpu.memory_space<vmem>>, vector<16x112xbf16>
    %1 = arith.extf %0 : vector<16x112xbf16> to vector<16x112xf32>
    %c0_1 = arith.constant 0 : index
    %c0_2 = arith.constant 0 : index
    %2 = vector.load %arg2[%c0_1, %c0_2] : memref<1x112xf32, #tpu.memory_space<vmem>>, vector<1x112xf32>
    %3 = vector.broadcast %2 : vector<1x112xf32> to vector<16x112xf32>
    %4 = arith.mulf %1, %3 : vector<16x112xf32>
    %c0_3 = arith.constant 0 : index
    %c0_4 = arith.constant 0 : index
    %5 = vector.load %arg3[%c0_3, %c0_4] : memref<1x112xf32, #tpu.memory_space<vmem>>, vector<1x112xf32>
    %6 = vector.broadcast %5 : vector<1x112xf32> to vector<16x112xf32>
    %7 = arith.addf %4, %6 : vector<16x112xf32>
    %cst = arith.constant 0.000000e+00 : f32
    %8 = vector.broadcast %cst : f32 to vector<16x112xf32>
    %9 = arith.maximumf %7, %8 : vector<16x112xf32>
    %10 = arith.truncf %9 : vector<16x112xf32> to vector<16x112xbf16>
    %c0_5 = arith.constant 0 : index
    %c0_6 = arith.constant 0 : index
    %11 = vector.load %arg4[%c0_5, %c0_6] : memref<16x112xbf16, #tpu.memory_space<vmem>>, vector<16x112xbf16>
    tpu.vector_store %arg4[%c0_5, %c0_6], %10 {strides = array<i32>} : memref<16x112xbf16, #tpu.memory_space<vmem>>, vector<16x112xbf16>,
    return
  }
  func.func @transform_0(%arg0: i32) -> (i32, i32) {
    %c0_i32 = arith.constant 0 : i32
    %c0_i32_0 = arith.constant 0 : i32
    return %arg0, %c0_i32 : i32, i32
  }
  func.func @transform_1(%arg0: i32) -> (i32, i32) {
    %c0_i32 = arith.constant 0 : i32
    %c0_i32_0 = arith.constant 0 : i32
    %c0_i32_1 = arith.constant 0 : i32
    return %c0_i32, %c0_i32_0 : i32, i32
  }
  func.func @transform_2(%arg0: i32) -> (i32, i32) {
    %c0_i32 = arith.constant 0 : i32
    %c0_i32_0 = arith.constant 0 : i32
    %c0_i32_1 = arith.constant 0 : i32
    return %c0_i32, %c0_i32_0 : i32, i32
  }
  func.func @transform_3(%arg0: i32) -> (i32, i32) {
    %c0_i32 = arith.constant 0 : i32
    %c0_i32_0 = arith.constant 0 : i32
    return %arg0, %c0_i32 : i32, i32
  }
}

module attributes {stable_mosaic.version = 11 : i64} {
  func.func @_conv_stats_kernel(%arg0: i32, %arg1: i32, %arg2: memref<1x14x16x4xbf16, #tpu.memory_space<vmem>>, %arg3: memref<1x1x16x4xbf16, #tpu.memory_space<vmem>>, %arg4: memref<1x1x16x4xbf16, #tpu.memory_space<vmem>>, %arg5: memref<36x8xbf16, #tpu.memory_space<vmem>>, %arg6: memref<1x1x196x8xbf16, #tpu.memory_space<vmem>>, %arg7: memref<1x1x2x8xf32, #tpu.memory_space<vmem>>) attributes {dimension_semantics = [#tpu.dimension_semantics<parallel>, #tpu.dimension_semantics<parallel>], iteration_bounds = array<i64: 2, 1>, scalar_prefetch = 0 : i64, scratch_operands = 0 : i64, tpu.core_type = #tpu.core_type<tc>, window_params = [{transform_indices = @transform_0, window_bounds = array<i64: 1, 14, 16, 4>}, {transform_indices = @transform_1, window_bounds = array<i64: 1, 1, 16, 4>}, {transform_indices = @transform_2, window_bounds = array<i64: 1, 1, 16, 4>}, {pipeline_mode = #tpu.pipeline_mode<synchronous>, transform_indices = @transform_3, window_bounds = array<i64: 36, 8>}, {transform_indices = @transform_4, window_bounds = array<i64: 1, 1, 196, 8>}, {transform_indices = @transform_5, window_bounds = array<i64: 1, 1, 2, 8>}]} {
    %c0 = arith.constant 0 : index
    %c0_0 = arith.constant 0 : index
    %c0_1 = arith.constant 0 : index
    %c0_2 = arith.constant 0 : index
    %0 = vector.load %arg2[%c0, %c0_0, %c0_1, %c0_2] : memref<1x14x16x4xbf16, #tpu.memory_space<vmem>>, vector<1x1x16x4xbf16>
    %1 = vector.shape_cast %0 : vector<1x1x16x4xbf16> to vector<16x4xbf16>
    %c0_3 = arith.constant 0 : index
    %c1 = arith.constant 1 : index
    %c0_4 = arith.constant 0 : index
    %c0_5 = arith.constant 0 : index
    %2 = vector.load %arg2[%c0_3, %c1, %c0_4, %c0_5] : memref<1x14x16x4xbf16, #tpu.memory_space<vmem>>, vector<1x1x16x4xbf16>
    %3 = vector.shape_cast %2 : vector<1x1x16x4xbf16> to vector<16x4xbf16>
    %c0_6 = arith.constant 0 : index
    %c2 = arith.constant 2 : index
    %c0_7 = arith.constant 0 : index
    %c0_8 = arith.constant 0 : index
    %4 = vector.load %arg2[%c0_6, %c2, %c0_7, %c0_8] : memref<1x14x16x4xbf16, #tpu.memory_space<vmem>>, vector<1x1x16x4xbf16>
    %5 = vector.shape_cast %4 : vector<1x1x16x4xbf16> to vector<16x4xbf16>
    %c0_9 = arith.constant 0 : index
    %c3 = arith.constant 3 : index
    %c0_10 = arith.constant 0 : index
    %c0_11 = arith.constant 0 : index
    %6 = vector.load %arg2[%c0_9, %c3, %c0_10, %c0_11] : memref<1x14x16x4xbf16, #tpu.memory_space<vmem>>, vector<1x1x16x4xbf16>
    %7 = vector.shape_cast %6 : vector<1x1x16x4xbf16> to vector<16x4xbf16>
    %c0_12 = arith.constant 0 : index
    %c4 = arith.constant 4 : index
    %c0_13 = arith.constant 0 : index
    %c0_14 = arith.constant 0 : index
    %8 = vector.load %arg2[%c0_12, %c4, %c0_13, %c0_14] : memref<1x14x16x4xbf16, #tpu.memory_space<vmem>>, vector<1x1x16x4xbf16>
    %9 = vector.shape_cast %8 : vector<1x1x16x4xbf16> to vector<16x4xbf16>
    %c0_15 = arith.constant 0 : index
    %c5 = arith.constant 5 : index
    %c0_16 = arith.constant 0 : index
    %c0_17 = arith.constant 0 : index
    %10 = vector.load %arg2[%c0_15, %c5, %c0_16, %c0_17] : memref<1x14x16x4xbf16, #tpu.memory_space<vmem>>, vector<1x1x16x4xbf16>
    %11 = vector.shape_cast %10 : vector<1x1x16x4xbf16> to vector<16x4xbf16>
    %c0_18 = arith.constant 0 : index
    %c6 = arith.constant 6 : index
    %c0_19 = arith.constant 0 : index
    %c0_20 = arith.constant 0 : index
    %12 = vector.load %arg2[%c0_18, %c6, %c0_19, %c0_20] : memref<1x14x16x4xbf16, #tpu.memory_space<vmem>>, vector<1x1x16x4xbf16>
    %13 = vector.shape_cast %12 : vector<1x1x16x4xbf16> to vector<16x4xbf16>
    %c0_21 = arith.constant 0 : index
    %c7 = arith.constant 7 : index
    %c0_22 = arith.constant 0 : index
    %c0_23 = arith.constant 0 : index
    %14 = vector.load %arg2[%c0_21, %c7, %c0_22, %c0_23] : memref<1x14x16x4xbf16, #tpu.memory_space<vmem>>, vector<1x1x16x4xbf16>
    %15 = vector.shape_cast %14 : vector<1x1x16x4xbf16> to vector<16x4xbf16>
    %c0_24 = arith.constant 0 : index
    %c8 = arith.constant 8 : index
    %c0_25 = arith.constant 0 : index
    %c0_26 = arith.constant 0 : index
    %16 = vector.load %arg2[%c0_24, %c8, %c0_25, %c0_26] : memref<1x14x16x4xbf16, #tpu.memory_space<vmem>>, vector<1x1x16x4xbf16>
    %17 = vector.shape_cast %16 : vector<1x1x16x4xbf16> to vector<16x4xbf16>
    %c0_27 = arith.constant 0 : index
    %c9 = arith.constant 9 : index
    %c0_28 = arith.constant 0 : index
    %c0_29 = arith.constant 0 : index
    %18 = vector.load %arg2[%c0_27, %c9, %c0_28, %c0_29] : memref<1x14x16x4xbf16, #tpu.memory_space<vmem>>, vector<1x1x16x4xbf16>
    %19 = vector.shape_cast %18 : vector<1x1x16x4xbf16> to vector<16x4xbf16>
    %c0_30 = arith.constant 0 : index
    %c10 = arith.constant 10 : index
    %c0_31 = arith.constant 0 : index
    %c0_32 = arith.constant 0 : index
    %20 = vector.load %arg2[%c0_30, %c10, %c0_31, %c0_32] : memref<1x14x16x4xbf16, #tpu.memory_space<vmem>>, vector<1x1x16x4xbf16>
    %21 = vector.shape_cast %20 : vector<1x1x16x4xbf16> to vector<16x4xbf16>
    %c0_33 = arith.constant 0 : index
    %c11 = arith.constant 11 : index
    %c0_34 = arith.constant 0 : index
    %c0_35 = arith.constant 0 : index
    %22 = vector.load %arg2[%c0_33, %c11, %c0_34, %c0_35] : memref<1x14x16x4xbf16, #tpu.memory_space<vmem>>, vector<1x1x16x4xbf16>
    %23 = vector.shape_cast %22 : vector<1x1x16x4xbf16> to vector<16x4xbf16>
    %c0_36 = arith.constant 0 : index
    %c12 = arith.constant 12 : index
    %c0_37 = arith.constant 0 : index
    %c0_38 = arith.constant 0 : index
    %24 = vector.load %arg2[%c0_36, %c12, %c0_37, %c0_38] : memref<1x14x16x4xbf16, #tpu.memory_space<vmem>>, vector<1x1x16x4xbf16>
    %25 = vector.shape_cast %24 : vector<1x1x16x4xbf16> to vector<16x4xbf16>
    %c0_39 = arith.constant 0 : index
    %c13 = arith.constant 13 : index
    %c0_40 = arith.constant 0 : index
    %c0_41 = arith.constant 0 : index
    %26 = vector.load %arg2[%c0_39, %c13, %c0_40, %c0_41] : memref<1x14x16x4xbf16, #tpu.memory_space<vmem>>, vector<1x1x16x4xbf16>
    %27 = vector.shape_cast %26 : vector<1x1x16x4xbf16> to vector<16x4xbf16>
    %c0_42 = arith.constant 0 : index
    %c0_43 = arith.constant 0 : index
    %c0_44 = arith.constant 0 : index
    %c0_45 = arith.constant 0 : index
    %28 = vector.load %arg3[%c0_42, %c0_43, %c0_44, %c0_45] : memref<1x1x16x4xbf16, #tpu.memory_space<vmem>>, vector<1x1x16x4xbf16>
    %29 = vector.shape_cast %28 : vector<1x1x16x4xbf16> to vector<16x4xbf16>
    %c0_46 = arith.constant 0 : index
    %c0_47 = arith.constant 0 : index
    %c0_48 = arith.constant 0 : index
    %c0_49 = arith.constant 0 : index
    %30 = vector.load %arg4[%c0_46, %c0_47, %c0_48, %c0_49] : memref<1x1x16x4xbf16, #tpu.memory_space<vmem>>, vector<1x1x16x4xbf16>
    %31 = vector.shape_cast %30 : vector<1x1x16x4xbf16> to vector<16x4xbf16>
    %32 = tpu.concatenate %1, %3, %5 in 1 : vector<16x4xbf16>, vector<16x4xbf16>, vector<16x4xbf16> -> vector<16x12xbf16>
    %33 = vector.extract_strided_slice %32 {offsets = [0, 0], sizes = [14, 12], strides = [1, 1]} : vector<16x12xbf16> to vector<14x12xbf16>
    %34 = vector.extract_strided_slice %32 {offsets = [1, 0], sizes = [14, 12], strides = [1, 1]} : vector<16x12xbf16> to vector<14x12xbf16>
    %35 = vector.extract_strided_slice %32 {offsets = [2, 0], sizes = [14, 12], strides = [1, 1]} : vector<16x12xbf16> to vector<14x12xbf16>
    %36 = tpu.concatenate %33, %34, %35 in 1 : vector<14x12xbf16>, vector<14x12xbf16>, vector<14x12xbf16> -> vector<14x36xbf16>
    %37 = tpu.concatenate %3, %5, %7 in 1 : vector<16x4xbf16>, vector<16x4xbf16>, vector<16x4xbf16> -> vector<16x12xbf16>
    %38 = vector.extract_strided_slice %37 {offsets = [0, 0], sizes = [14, 12], strides = [1, 1]} : vector<16x12xbf16> to vector<14x12xbf16>
    %39 = vector.extract_strided_slice %37 {offsets = [1, 0], sizes = [14, 12], strides = [1, 1]} : vector<16x12xbf16> to vector<14x12xbf16>
    %40 = vector.extract_strided_slice %37 {offsets = [2, 0], sizes = [14, 12], strides = [1, 1]} : vector<16x12xbf16> to vector<14x12xbf16>
    %41 = tpu.concatenate %38, %39, %40 in 1 : vector<14x12xbf16>, vector<14x12xbf16>, vector<14x12xbf16> -> vector<14x36xbf16>
    %42 = tpu.concatenate %5, %7, %9 in 1 : vector<16x4xbf16>, vector<16x4xbf16>, vector<16x4xbf16> -> vector<16x12xbf16>
    %43 = vector.extract_strided_slice %42 {offsets = [0, 0], sizes = [14, 12], strides = [1, 1]} : vector<16x12xbf16> to vector<14x12xbf16>
    %44 = vector.extract_strided_slice %42 {offsets = [1, 0], sizes = [14, 12], strides = [1, 1]} : vector<16x12xbf16> to vector<14x12xbf16>
    %45 = vector.extract_strided_slice %42 {offsets = [2, 0], sizes = [14, 12], strides = [1, 1]} : vector<16x12xbf16> to vector<14x12xbf16>
    %46 = tpu.concatenate %43, %44, %45 in 1 : vector<14x12xbf16>, vector<14x12xbf16>, vector<14x12xbf16> -> vector<14x36xbf16>
    %47 = tpu.concatenate %7, %9, %11 in 1 : vector<16x4xbf16>, vector<16x4xbf16>, vector<16x4xbf16> -> vector<16x12xbf16>
    %48 = vector.extract_strided_slice %47 {offsets = [0, 0], sizes = [14, 12], strides = [1, 1]} : vector<16x12xbf16> to vector<14x12xbf16>
    %49 = vector.extract_strided_slice %47 {offsets = [1, 0], sizes = [14, 12], strides = [1, 1]} : vector<16x12xbf16> to vector<14x12xbf16>
    %50 = vector.extract_strided_slice %47 {offsets = [2, 0], sizes = [14, 12], strides = [1, 1]} : vector<16x12xbf16> to vector<14x12xbf16>
    %51 = tpu.concatenate %48, %49, %50 in 1 : vector<14x12xbf16>, vector<14x12xbf16>, vector<14x12xbf16> -> vector<14x36xbf16>
    %52 = tpu.concatenate %9, %11, %13 in 1 : vector<16x4xbf16>, vector<16x4xbf16>, vector<16x4xbf16> -> vector<16x12xbf16>
    %53 = vector.extract_strided_slice %52 {offsets = [0, 0], sizes = [14, 12], strides = [1, 1]} : vector<16x12xbf16> to vector<14x12xbf16>
    %54 = vector.extract_strided_slice %52 {offsets = [1, 0], sizes = [14, 12], strides = [1, 1]} : vector<16x12xbf16> to vector<14x12xbf16>
    %55 = vector.extract_strided_slice %52 {offsets = [2, 0], sizes = [14, 12], strides = [1, 1]} : vector<16x12xbf16> to vector<14x12xbf16>
    %56 = tpu.concatenate %53, %54, %55 in 1 : vector<14x12xbf16>, vector<14x12xbf16>, vector<14x12xbf16> -> vector<14x36xbf16>
    %57 = tpu.concatenate %11, %13, %15 in 1 : vector<16x4xbf16>, vector<16x4xbf16>, vector<16x4xbf16> -> vector<16x12xbf16>
    %58 = vector.extract_strided_slice %57 {offsets = [0, 0], sizes = [14, 12], strides = [1, 1]} : vector<16x12xbf16> to vector<14x12xbf16>
    %59 = vector.extract_strided_slice %57 {offsets = [1, 0], sizes = [14, 12], strides = [1, 1]} : vector<16x12xbf16> to vector<14x12xbf16>
    %60 = vector.extract_strided_slice %57 {offsets = [2, 0], sizes = [14, 12], strides = [1, 1]} : vector<16x12xbf16> to vector<14x12xbf16>
    %61 = tpu.concatenate %58, %59, %60 in 1 : vector<14x12xbf16>, vector<14x12xbf16>, vector<14x12xbf16> -> vector<14x36xbf16>
    %62 = tpu.concatenate %13, %15, %17 in 1 : vector<16x4xbf16>, vector<16x4xbf16>, vector<16x4xbf16> -> vector<16x12xbf16>
    %63 = vector.extract_strided_slice %62 {offsets = [0, 0], sizes = [14, 12], strides = [1, 1]} : vector<16x12xbf16> to vector<14x12xbf16>
    %64 = vector.extract_strided_slice %62 {offsets = [1, 0], sizes = [14, 12], strides = [1, 1]} : vector<16x12xbf16> to vector<14x12xbf16>
    %65 = vector.extract_strided_slice %62 {offsets = [2, 0], sizes = [14, 12], strides = [1, 1]} : vector<16x12xbf16> to vector<14x12xbf16>
    %66 = tpu.concatenate %63, %64, %65 in 1 : vector<14x12xbf16>, vector<14x12xbf16>, vector<14x12xbf16> -> vector<14x36xbf16>
    %67 = tpu.concatenate %15, %17, %19 in 1 : vector<16x4xbf16>, vector<16x4xbf16>, vector<16x4xbf16> -> vector<16x12xbf16>
    %68 = vector.extract_strided_slice %67 {offsets = [0, 0], sizes = [14, 12], strides = [1, 1]} : vector<16x12xbf16> to vector<14x12xbf16>
    %69 = vector.extract_strided_slice %67 {offsets = [1, 0], sizes = [14, 12], strides = [1, 1]} : vector<16x12xbf16> to vector<14x12xbf16>
    %70 = vector.extract_strided_slice %67 {offsets = [2, 0], sizes = [14, 12], strides = [1, 1]} : vector<16x12xbf16> to vector<14x12xbf16>
    %71 = tpu.concatenate %68, %69, %70 in 1 : vector<14x12xbf16>, vector<14x12xbf16>, vector<14x12xbf16> -> vector<14x36xbf16>
    %72 = tpu.concatenate %17, %19, %21 in 1 : vector<16x4xbf16>, vector<16x4xbf16>, vector<16x4xbf16> -> vector<16x12xbf16>
    %73 = vector.extract_strided_slice %72 {offsets = [0, 0], sizes = [14, 12], strides = [1, 1]} : vector<16x12xbf16> to vector<14x12xbf16>
    %74 = vector.extract_strided_slice %72 {offsets = [1, 0], sizes = [14, 12], strides = [1, 1]} : vector<16x12xbf16> to vector<14x12xbf16>
    %75 = vector.extract_strided_slice %72 {offsets = [2, 0], sizes = [14, 12], strides = [1, 1]} : vector<16x12xbf16> to vector<14x12xbf16>
    %76 = tpu.concatenate %73, %74, %75 in 1 : vector<14x12xbf16>, vector<14x12xbf16>, vector<14x12xbf16> -> vector<14x36xbf16>
    %77 = tpu.concatenate %19, %21, %23 in 1 : vector<16x4xbf16>, vector<16x4xbf16>, vector<16x4xbf16> -> vector<16x12xbf16>
    %78 = vector.extract_strided_slice %77 {offsets = [0, 0], sizes = [14, 12], strides = [1, 1]} : vector<16x12xbf16> to vector<14x12xbf16>
    %79 = vector.extract_strided_slice %77 {offsets = [1, 0], sizes = [14, 12], strides = [1, 1]} : vector<16x12xbf16> to vector<14x12xbf16>
    %80 = vector.extract_strided_slice %77 {offsets = [2, 0], sizes = [14, 12], strides = [1, 1]} : vector<16x12xbf16> to vector<14x12xbf16>
    %81 = tpu.concatenate %78, %79, %80 in 1 : vector<14x12xbf16>, vector<14x12xbf16>, vector<14x12xbf16> -> vector<14x36xbf16>
    %82 = tpu.concatenate %21, %23, %25 in 1 : vector<16x4xbf16>, vector<16x4xbf16>, vector<16x4xbf16> -> vector<16x12xbf16>
    %83 = vector.extract_strided_slice %82 {offsets = [0, 0], sizes = [14, 12], strides = [1, 1]} : vector<16x12xbf16> to vector<14x12xbf16>
    %84 = vector.extract_strided_slice %82 {offsets = [1, 0], sizes = [14, 12], strides = [1, 1]} : vector<16x12xbf16> to vector<14x12xbf16>
    %85 = vector.extract_strided_slice %82 {offsets = [2, 0], sizes = [14, 12], strides = [1, 1]} : vector<16x12xbf16> to vector<14x12xbf16>
    %86 = tpu.concatenate %83, %84, %85 in 1 : vector<14x12xbf16>, vector<14x12xbf16>, vector<14x12xbf16> -> vector<14x36xbf16>
    %87 = tpu.concatenate %23, %25, %27 in 1 : vector<16x4xbf16>, vector<16x4xbf16>, vector<16x4xbf16> -> vector<16x12xbf16>
    %88 = vector.extract_strided_slice %87 {offsets = [0, 0], sizes = [14, 12], strides = [1, 1]} : vector<16x12xbf16> to vector<14x12xbf16>
    %89 = vector.extract_strided_slice %87 {offsets = [1, 0], sizes = [14, 12], strides = [1, 1]} : vector<16x12xbf16> to vector<14x12xbf16>
    %90 = vector.extract_strided_slice %87 {offsets = [2, 0], sizes = [14, 12], strides = [1, 1]} : vector<16x12xbf16> to vector<14x12xbf16>
    %91 = tpu.concatenate %88, %89, %90 in 1 : vector<14x12xbf16>, vector<14x12xbf16>, vector<14x12xbf16> -> vector<14x36xbf16>
    %92 = tpu.concatenate %25, %27, %29 in 1 : vector<16x4xbf16>, vector<16x4xbf16>, vector<16x4xbf16> -> vector<16x12xbf16>
    %93 = vector.extract_strided_slice %92 {offsets = [0, 0], sizes = [14, 12], strides = [1, 1]} : vector<16x12xbf16> to vector<14x12xbf16>
    %94 = vector.extract_strided_slice %92 {offsets = [1, 0], sizes = [14, 12], strides = [1, 1]} : vector<16x12xbf16> to vector<14x12xbf16>
    %95 = vector.extract_strided_slice %92 {offsets = [2, 0], sizes = [14, 12], strides = [1, 1]} : vector<16x12xbf16> to vector<14x12xbf16>
    %96 = tpu.concatenate %93, %94, %95 in 1 : vector<14x12xbf16>, vector<14x12xbf16>, vector<14x12xbf16> -> vector<14x36xbf16>
    %97 = tpu.concatenate %27, %29, %31 in 1 : vector<16x4xbf16>, vector<16x4xbf16>, vector<16x4xbf16> -> vector<16x12xbf16>
    %98 = vector.extract_strided_slice %97 {offsets = [0, 0], sizes = [14, 12], strides = [1, 1]} : vector<16x12xbf16> to vector<14x12xbf16>
    %99 = vector.extract_strided_slice %97 {offsets = [1, 0], sizes = [14, 12], strides = [1, 1]} : vector<16x12xbf16> to vector<14x12xbf16>
    %100 = vector.extract_strided_slice %97 {offsets = [2, 0], sizes = [14, 12], strides = [1, 1]} : vector<16x12xbf16> to vector<14x12xbf16>
    %101 = tpu.concatenate %98, %99, %100 in 1 : vector<14x12xbf16>, vector<14x12xbf16>, vector<14x12xbf16> -> vector<14x36xbf16>
    %102 = tpu.concatenate %36, %41, %46, %51, %56, %61, %66, %71, %76, %81, %86, %91, %96, %101 in 0 : vector<14x36xbf16>, vector<14x36xbf16>, vector<14x36xbf16>, vector<14x36xbf16>, vector<14x36xbf16>, vector<14x36xbf16>, vector<14x36xbf16>, vector<14x36xbf16>, vector<14x36xbf16>, vector<14x36xbf16>, vector<14x36xbf16>, vector<14x36xbf16>, vector<14x36xbf16>, vector<14x36xbf16> -> vector<196x36xbf16>
    %c0_50 = arith.constant 0 : index
    %c0_51 = arith.constant 0 : index
    %103 = vector.load %arg5[%c0_50, %c0_51] : memref<36x8xbf16, #tpu.memory_space<vmem>>, vector<36x8xbf16>
    %cst = arith.constant dense<0.000000e+00> : vector<196x8xf32>
    %104 = tpu.matmul %102, %103, %cst {dimension_numbers = #tpu.dot_dimension_numbers<[1], [0], [0], [1], [0, 0, 1, 1], [], []>} : vector<196x36xbf16>, vector<36x8xbf16>, vector<196x8xf32> -> vector<196x8xf32>
    %105 = arith.truncf %104 : vector<196x8xf32> to vector<196x8xbf16>
    %c0_52 = arith.constant 0 : index
    %c0_53 = arith.constant 0 : index
    %c0_54 = arith.constant 0 : index
    %c0_55 = arith.constant 0 : index
    %106 = vector.load %arg6[%c0_52, %c0_53, %c0_54, %c0_55] : memref<1x1x196x8xbf16, #tpu.memory_space<vmem>>, vector<1x1x196x8xbf16>
    %107 = vector.shape_cast %106 : vector<1x1x196x8xbf16> to vector<196x8xbf16>
    %108 = vector.shape_cast %105 : vector<196x8xbf16> to vector<1x1x196x8xbf16>
    tpu.vector_store %arg6[%c0_52, %c0_53, %c0_54, %c0_55], %108 {strides = array<i32>} : memref<1x1x196x8xbf16, #tpu.memory_space<vmem>>, vector<1x1x196x8xbf16>,
    %cst_56 = arith.constant dense<0.000000e+00> : vector<8xf32>
    %109 = vector.multi_reduction <add>, %104, %cst_56 [0] : vector<196x8xf32> to vector<8xf32>
    %110 = vector.shape_cast %109 : vector<8xf32> to vector<1x8xf32>
    %111 = arith.mulf %104, %104 : vector<196x8xf32>
    %cst_57 = arith.constant dense<0.000000e+00> : vector<8xf32>
    %112 = vector.multi_reduction <add>, %111, %cst_57 [0] : vector<196x8xf32> to vector<8xf32>
    %113 = vector.shape_cast %112 : vector<8xf32> to vector<1x8xf32>
    %114 = tpu.concatenate %110, %113 in 0 : vector<1x8xf32>, vector<1x8xf32> -> vector<2x8xf32>
    %c0_58 = arith.constant 0 : index
    %c0_59 = arith.constant 0 : index
    %c0_60 = arith.constant 0 : index
    %c0_61 = arith.constant 0 : index
    %115 = vector.load %arg7[%c0_58, %c0_59, %c0_60, %c0_61] : memref<1x1x2x8xf32, #tpu.memory_space<vmem>>, vector<1x1x2x8xf32>
    %116 = vector.shape_cast %115 : vector<1x1x2x8xf32> to vector<2x8xf32>
    %117 = vector.shape_cast %114 : vector<2x8xf32> to vector<1x1x2x8xf32>
    tpu.vector_store %arg7[%c0_58, %c0_59, %c0_60, %c0_61], %117 {strides = array<i32>} : memref<1x1x2x8xf32, #tpu.memory_space<vmem>>, vector<1x1x2x8xf32>,
    return
  }
  func.func @transform_0(%arg0: i32, %arg1: i32) -> (i32, i32, i32, i32) {
    %c0_i32 = arith.constant 0 : i32
    %c0_i32_0 = arith.constant 0 : i32
    %c0_i32_1 = arith.constant 0 : i32
    return %arg0, %arg1, %c0_i32, %c0_i32_0 : i32, i32, i32, i32
  }
  func.func @transform_1(%arg0: i32, %arg1: i32) -> (i32, i32, i32, i32) {
    %c1_i32 = arith.constant 1 : i32
    %0 = arith.addi %arg1, %c1_i32 : i32
    %c14_i32 = arith.constant 14 : i32
    %1 = arith.muli %0, %c14_i32 : i32
    %c0_i32 = arith.constant 0 : i32
    %c0_i32_0 = arith.constant 0 : i32
    %c0_i32_1 = arith.constant 0 : i32
    return %arg0, %1, %c0_i32, %c0_i32_0 : i32, i32, i32, i32
  }
  func.func @transform_2(%arg0: i32, %arg1: i32) -> (i32, i32, i32, i32) {
    %c1_i32 = arith.constant 1 : i32
    %0 = arith.addi %arg1, %c1_i32 : i32
    %c14_i32 = arith.constant 14 : i32
    %1 = arith.muli %0, %c14_i32 : i32
    %c1_i32_0 = arith.constant 1 : i32
    %2 = arith.addi %1, %c1_i32_0 : i32
    %c0_i32 = arith.constant 0 : i32
    %c0_i32_1 = arith.constant 0 : i32
    %c0_i32_2 = arith.constant 0 : i32
    return %arg0, %2, %c0_i32, %c0_i32_1 : i32, i32, i32, i32
  }
  func.func @transform_3(%arg0: i32, %arg1: i32) -> (i32, i32) {
    %c0_i32 = arith.constant 0 : i32
    %c0_i32_0 = arith.constant 0 : i32
    %c0_i32_1 = arith.constant 0 : i32
    return %c0_i32, %c0_i32_0 : i32, i32
  }
  func.func @transform_4(%arg0: i32, %arg1: i32) -> (i32, i32, i32, i32) {
    %c0_i32 = arith.constant 0 : i32
    %c0_i32_0 = arith.constant 0 : i32
    %c0_i32_1 = arith.constant 0 : i32
    return %arg0, %arg1, %c0_i32, %c0_i32_0 : i32, i32, i32, i32
  }
  func.func @transform_5(%arg0: i32, %arg1: i32) -> (i32, i32, i32, i32) {
    %c0_i32 = arith.constant 0 : i32
    %c0_i32_0 = arith.constant 0 : i32
    %c0_i32_1 = arith.constant 0 : i32
    return %arg0, %arg1, %c0_i32, %c0_i32_0 : i32, i32, i32, i32
  }
}

module attributes {stable_mosaic.version = 11 : i64} {
  func.func @_conv_stats_kernel(%arg0: i32, %arg1: i32, %arg2: memref<1x12x14x8xbf16, #tpu.memory_space<vmem>>, %arg3: memref<1x1x14x8xbf16, #tpu.memory_space<vmem>>, %arg4: memref<1x1x14x8xbf16, #tpu.memory_space<vmem>>, %arg5: memref<72x8xbf16, #tpu.memory_space<vmem>>, %arg6: memref<1x1x144x8xbf16, #tpu.memory_space<vmem>>, %arg7: memref<1x1x2x8xf32, #tpu.memory_space<vmem>>) attributes {dimension_semantics = [#tpu.dimension_semantics<parallel>, #tpu.dimension_semantics<parallel>], iteration_bounds = array<i64: 2, 1>, scalar_prefetch = 0 : i64, scratch_operands = 0 : i64, tpu.core_type = #tpu.core_type<tc>, window_params = [{transform_indices = @transform_0, window_bounds = array<i64: 1, 12, 14, 8>}, {transform_indices = @transform_1, window_bounds = array<i64: 1, 1, 14, 8>}, {transform_indices = @transform_2, window_bounds = array<i64: 1, 1, 14, 8>}, {pipeline_mode = #tpu.pipeline_mode<synchronous>, transform_indices = @transform_3, window_bounds = array<i64: 72, 8>}, {transform_indices = @transform_4, window_bounds = array<i64: 1, 1, 144, 8>}, {transform_indices = @transform_5, window_bounds = array<i64: 1, 1, 2, 8>}]} {
    %c0 = arith.constant 0 : index
    %c0_0 = arith.constant 0 : index
    %c0_1 = arith.constant 0 : index
    %c0_2 = arith.constant 0 : index
    %0 = vector.load %arg2[%c0, %c0_0, %c0_1, %c0_2] : memref<1x12x14x8xbf16, #tpu.memory_space<vmem>>, vector<1x1x14x8xbf16>
    %1 = vector.shape_cast %0 : vector<1x1x14x8xbf16> to vector<14x8xbf16>
    %c0_3 = arith.constant 0 : index
    %c1 = arith.constant 1 : index
    %c0_4 = arith.constant 0 : index
    %c0_5 = arith.constant 0 : index
    %2 = vector.load %arg2[%c0_3, %c1, %c0_4, %c0_5] : memref<1x12x14x8xbf16, #tpu.memory_space<vmem>>, vector<1x1x14x8xbf16>
    %3 = vector.shape_cast %2 : vector<1x1x14x8xbf16> to vector<14x8xbf16>
    %c0_6 = arith.constant 0 : index
    %c2 = arith.constant 2 : index
    %c0_7 = arith.constant 0 : index
    %c0_8 = arith.constant 0 : index
    %4 = vector.load %arg2[%c0_6, %c2, %c0_7, %c0_8] : memref<1x12x14x8xbf16, #tpu.memory_space<vmem>>, vector<1x1x14x8xbf16>
    %5 = vector.shape_cast %4 : vector<1x1x14x8xbf16> to vector<14x8xbf16>
    %c0_9 = arith.constant 0 : index
    %c3 = arith.constant 3 : index
    %c0_10 = arith.constant 0 : index
    %c0_11 = arith.constant 0 : index
    %6 = vector.load %arg2[%c0_9, %c3, %c0_10, %c0_11] : memref<1x12x14x8xbf16, #tpu.memory_space<vmem>>, vector<1x1x14x8xbf16>
    %7 = vector.shape_cast %6 : vector<1x1x14x8xbf16> to vector<14x8xbf16>
    %c0_12 = arith.constant 0 : index
    %c4 = arith.constant 4 : index
    %c0_13 = arith.constant 0 : index
    %c0_14 = arith.constant 0 : index
    %8 = vector.load %arg2[%c0_12, %c4, %c0_13, %c0_14] : memref<1x12x14x8xbf16, #tpu.memory_space<vmem>>, vector<1x1x14x8xbf16>
    %9 = vector.shape_cast %8 : vector<1x1x14x8xbf16> to vector<14x8xbf16>
    %c0_15 = arith.constant 0 : index
    %c5 = arith.constant 5 : index
    %c0_16 = arith.constant 0 : index
    %c0_17 = arith.constant 0 : index
    %10 = vector.load %arg2[%c0_15, %c5, %c0_16, %c0_17] : memref<1x12x14x8xbf16, #tpu.memory_space<vmem>>, vector<1x1x14x8xbf16>
    %11 = vector.shape_cast %10 : vector<1x1x14x8xbf16> to vector<14x8xbf16>
    %c0_18 = arith.constant 0 : index
    %c6 = arith.constant 6 : index
    %c0_19 = arith.constant 0 : index
    %c0_20 = arith.constant 0 : index
    %12 = vector.load %arg2[%c0_18, %c6, %c0_19, %c0_20] : memref<1x12x14x8xbf16, #tpu.memory_space<vmem>>, vector<1x1x14x8xbf16>
    %13 = vector.shape_cast %12 : vector<1x1x14x8xbf16> to vector<14x8xbf16>
    %c0_21 = arith.constant 0 : index
    %c7 = arith.constant 7 : index
    %c0_22 = arith.constant 0 : index
    %c0_23 = arith.constant 0 : index
    %14 = vector.load %arg2[%c0_21, %c7, %c0_22, %c0_23] : memref<1x12x14x8xbf16, #tpu.memory_space<vmem>>, vector<1x1x14x8xbf16>
    %15 = vector.shape_cast %14 : vector<1x1x14x8xbf16> to vector<14x8xbf16>
    %c0_24 = arith.constant 0 : index
    %c8 = arith.constant 8 : index
    %c0_25 = arith.constant 0 : index
    %c0_26 = arith.constant 0 : index
    %16 = vector.load %arg2[%c0_24, %c8, %c0_25, %c0_26] : memref<1x12x14x8xbf16, #tpu.memory_space<vmem>>, vector<1x1x14x8xbf16>
    %17 = vector.shape_cast %16 : vector<1x1x14x8xbf16> to vector<14x8xbf16>
    %c0_27 = arith.constant 0 : index
    %c9 = arith.constant 9 : index
    %c0_28 = arith.constant 0 : index
    %c0_29 = arith.constant 0 : index
    %18 = vector.load %arg2[%c0_27, %c9, %c0_28, %c0_29] : memref<1x12x14x8xbf16, #tpu.memory_space<vmem>>, vector<1x1x14x8xbf16>
    %19 = vector.shape_cast %18 : vector<1x1x14x8xbf16> to vector<14x8xbf16>
    %c0_30 = arith.constant 0 : index
    %c10 = arith.constant 10 : index
    %c0_31 = arith.constant 0 : index
    %c0_32 = arith.constant 0 : index
    %20 = vector.load %arg2[%c0_30, %c10, %c0_31, %c0_32] : memref<1x12x14x8xbf16, #tpu.memory_space<vmem>>, vector<1x1x14x8xbf16>
    %21 = vector.shape_cast %20 : vector<1x1x14x8xbf16> to vector<14x8xbf16>
    %c0_33 = arith.constant 0 : index
    %c11 = arith.constant 11 : index
    %c0_34 = arith.constant 0 : index
    %c0_35 = arith.constant 0 : index
    %22 = vector.load %arg2[%c0_33, %c11, %c0_34, %c0_35] : memref<1x12x14x8xbf16, #tpu.memory_space<vmem>>, vector<1x1x14x8xbf16>
    %23 = vector.shape_cast %22 : vector<1x1x14x8xbf16> to vector<14x8xbf16>
    %c0_36 = arith.constant 0 : index
    %c0_37 = arith.constant 0 : index
    %c0_38 = arith.constant 0 : index
    %c0_39 = arith.constant 0 : index
    %24 = vector.load %arg3[%c0_36, %c0_37, %c0_38, %c0_39] : memref<1x1x14x8xbf16, #tpu.memory_space<vmem>>, vector<1x1x14x8xbf16>
    %25 = vector.shape_cast %24 : vector<1x1x14x8xbf16> to vector<14x8xbf16>
    %c0_40 = arith.constant 0 : index
    %c0_41 = arith.constant 0 : index
    %c0_42 = arith.constant 0 : index
    %c0_43 = arith.constant 0 : index
    %26 = vector.load %arg4[%c0_40, %c0_41, %c0_42, %c0_43] : memref<1x1x14x8xbf16, #tpu.memory_space<vmem>>, vector<1x1x14x8xbf16>
    %27 = vector.shape_cast %26 : vector<1x1x14x8xbf16> to vector<14x8xbf16>
    %28 = tpu.concatenate %1, %3, %5 in 1 : vector<14x8xbf16>, vector<14x8xbf16>, vector<14x8xbf16> -> vector<14x24xbf16>
    %29 = vector.extract_strided_slice %28 {offsets = [0, 0], sizes = [12, 24], strides = [1, 1]} : vector<14x24xbf16> to vector<12x24xbf16>
    %30 = vector.extract_strided_slice %28 {offsets = [1, 0], sizes = [12, 24], strides = [1, 1]} : vector<14x24xbf16> to vector<12x24xbf16>
    %31 = vector.extract_strided_slice %28 {offsets = [2, 0], sizes = [12, 24], strides = [1, 1]} : vector<14x24xbf16> to vector<12x24xbf16>
    %32 = tpu.concatenate %29, %30, %31 in 1 : vector<12x24xbf16>, vector<12x24xbf16>, vector<12x24xbf16> -> vector<12x72xbf16>
    %33 = tpu.concatenate %3, %5, %7 in 1 : vector<14x8xbf16>, vector<14x8xbf16>, vector<14x8xbf16> -> vector<14x24xbf16>
    %34 = vector.extract_strided_slice %33 {offsets = [0, 0], sizes = [12, 24], strides = [1, 1]} : vector<14x24xbf16> to vector<12x24xbf16>
    %35 = vector.extract_strided_slice %33 {offsets = [1, 0], sizes = [12, 24], strides = [1, 1]} : vector<14x24xbf16> to vector<12x24xbf16>
    %36 = vector.extract_strided_slice %33 {offsets = [2, 0], sizes = [12, 24], strides = [1, 1]} : vector<14x24xbf16> to vector<12x24xbf16>
    %37 = tpu.concatenate %34, %35, %36 in 1 : vector<12x24xbf16>, vector<12x24xbf16>, vector<12x24xbf16> -> vector<12x72xbf16>
    %38 = tpu.concatenate %5, %7, %9 in 1 : vector<14x8xbf16>, vector<14x8xbf16>, vector<14x8xbf16> -> vector<14x24xbf16>
    %39 = vector.extract_strided_slice %38 {offsets = [0, 0], sizes = [12, 24], strides = [1, 1]} : vector<14x24xbf16> to vector<12x24xbf16>
    %40 = vector.extract_strided_slice %38 {offsets = [1, 0], sizes = [12, 24], strides = [1, 1]} : vector<14x24xbf16> to vector<12x24xbf16>
    %41 = vector.extract_strided_slice %38 {offsets = [2, 0], sizes = [12, 24], strides = [1, 1]} : vector<14x24xbf16> to vector<12x24xbf16>
    %42 = tpu.concatenate %39, %40, %41 in 1 : vector<12x24xbf16>, vector<12x24xbf16>, vector<12x24xbf16> -> vector<12x72xbf16>
    %43 = tpu.concatenate %7, %9, %11 in 1 : vector<14x8xbf16>, vector<14x8xbf16>, vector<14x8xbf16> -> vector<14x24xbf16>
    %44 = vector.extract_strided_slice %43 {offsets = [0, 0], sizes = [12, 24], strides = [1, 1]} : vector<14x24xbf16> to vector<12x24xbf16>
    %45 = vector.extract_strided_slice %43 {offsets = [1, 0], sizes = [12, 24], strides = [1, 1]} : vector<14x24xbf16> to vector<12x24xbf16>
    %46 = vector.extract_strided_slice %43 {offsets = [2, 0], sizes = [12, 24], strides = [1, 1]} : vector<14x24xbf16> to vector<12x24xbf16>
    %47 = tpu.concatenate %44, %45, %46 in 1 : vector<12x24xbf16>, vector<12x24xbf16>, vector<12x24xbf16> -> vector<12x72xbf16>
    %48 = tpu.concatenate %9, %11, %13 in 1 : vector<14x8xbf16>, vector<14x8xbf16>, vector<14x8xbf16> -> vector<14x24xbf16>
    %49 = vector.extract_strided_slice %48 {offsets = [0, 0], sizes = [12, 24], strides = [1, 1]} : vector<14x24xbf16> to vector<12x24xbf16>
    %50 = vector.extract_strided_slice %48 {offsets = [1, 0], sizes = [12, 24], strides = [1, 1]} : vector<14x24xbf16> to vector<12x24xbf16>
    %51 = vector.extract_strided_slice %48 {offsets = [2, 0], sizes = [12, 24], strides = [1, 1]} : vector<14x24xbf16> to vector<12x24xbf16>
    %52 = tpu.concatenate %49, %50, %51 in 1 : vector<12x24xbf16>, vector<12x24xbf16>, vector<12x24xbf16> -> vector<12x72xbf16>
    %53 = tpu.concatenate %11, %13, %15 in 1 : vector<14x8xbf16>, vector<14x8xbf16>, vector<14x8xbf16> -> vector<14x24xbf16>
    %54 = vector.extract_strided_slice %53 {offsets = [0, 0], sizes = [12, 24], strides = [1, 1]} : vector<14x24xbf16> to vector<12x24xbf16>
    %55 = vector.extract_strided_slice %53 {offsets = [1, 0], sizes = [12, 24], strides = [1, 1]} : vector<14x24xbf16> to vector<12x24xbf16>
    %56 = vector.extract_strided_slice %53 {offsets = [2, 0], sizes = [12, 24], strides = [1, 1]} : vector<14x24xbf16> to vector<12x24xbf16>
    %57 = tpu.concatenate %54, %55, %56 in 1 : vector<12x24xbf16>, vector<12x24xbf16>, vector<12x24xbf16> -> vector<12x72xbf16>
    %58 = tpu.concatenate %13, %15, %17 in 1 : vector<14x8xbf16>, vector<14x8xbf16>, vector<14x8xbf16> -> vector<14x24xbf16>
    %59 = vector.extract_strided_slice %58 {offsets = [0, 0], sizes = [12, 24], strides = [1, 1]} : vector<14x24xbf16> to vector<12x24xbf16>
    %60 = vector.extract_strided_slice %58 {offsets = [1, 0], sizes = [12, 24], strides = [1, 1]} : vector<14x24xbf16> to vector<12x24xbf16>
    %61 = vector.extract_strided_slice %58 {offsets = [2, 0], sizes = [12, 24], strides = [1, 1]} : vector<14x24xbf16> to vector<12x24xbf16>
    %62 = tpu.concatenate %59, %60, %61 in 1 : vector<12x24xbf16>, vector<12x24xbf16>, vector<12x24xbf16> -> vector<12x72xbf16>
    %63 = tpu.concatenate %15, %17, %19 in 1 : vector<14x8xbf16>, vector<14x8xbf16>, vector<14x8xbf16> -> vector<14x24xbf16>
    %64 = vector.extract_strided_slice %63 {offsets = [0, 0], sizes = [12, 24], strides = [1, 1]} : vector<14x24xbf16> to vector<12x24xbf16>
    %65 = vector.extract_strided_slice %63 {offsets = [1, 0], sizes = [12, 24], strides = [1, 1]} : vector<14x24xbf16> to vector<12x24xbf16>
    %66 = vector.extract_strided_slice %63 {offsets = [2, 0], sizes = [12, 24], strides = [1, 1]} : vector<14x24xbf16> to vector<12x24xbf16>
    %67 = tpu.concatenate %64, %65, %66 in 1 : vector<12x24xbf16>, vector<12x24xbf16>, vector<12x24xbf16> -> vector<12x72xbf16>
    %68 = tpu.concatenate %17, %19, %21 in 1 : vector<14x8xbf16>, vector<14x8xbf16>, vector<14x8xbf16> -> vector<14x24xbf16>
    %69 = vector.extract_strided_slice %68 {offsets = [0, 0], sizes = [12, 24], strides = [1, 1]} : vector<14x24xbf16> to vector<12x24xbf16>
    %70 = vector.extract_strided_slice %68 {offsets = [1, 0], sizes = [12, 24], strides = [1, 1]} : vector<14x24xbf16> to vector<12x24xbf16>
    %71 = vector.extract_strided_slice %68 {offsets = [2, 0], sizes = [12, 24], strides = [1, 1]} : vector<14x24xbf16> to vector<12x24xbf16>
    %72 = tpu.concatenate %69, %70, %71 in 1 : vector<12x24xbf16>, vector<12x24xbf16>, vector<12x24xbf16> -> vector<12x72xbf16>
    %73 = tpu.concatenate %19, %21, %23 in 1 : vector<14x8xbf16>, vector<14x8xbf16>, vector<14x8xbf16> -> vector<14x24xbf16>
    %74 = vector.extract_strided_slice %73 {offsets = [0, 0], sizes = [12, 24], strides = [1, 1]} : vector<14x24xbf16> to vector<12x24xbf16>
    %75 = vector.extract_strided_slice %73 {offsets = [1, 0], sizes = [12, 24], strides = [1, 1]} : vector<14x24xbf16> to vector<12x24xbf16>
    %76 = vector.extract_strided_slice %73 {offsets = [2, 0], sizes = [12, 24], strides = [1, 1]} : vector<14x24xbf16> to vector<12x24xbf16>
    %77 = tpu.concatenate %74, %75, %76 in 1 : vector<12x24xbf16>, vector<12x24xbf16>, vector<12x24xbf16> -> vector<12x72xbf16>
    %78 = tpu.concatenate %21, %23, %25 in 1 : vector<14x8xbf16>, vector<14x8xbf16>, vector<14x8xbf16> -> vector<14x24xbf16>
    %79 = vector.extract_strided_slice %78 {offsets = [0, 0], sizes = [12, 24], strides = [1, 1]} : vector<14x24xbf16> to vector<12x24xbf16>
    %80 = vector.extract_strided_slice %78 {offsets = [1, 0], sizes = [12, 24], strides = [1, 1]} : vector<14x24xbf16> to vector<12x24xbf16>
    %81 = vector.extract_strided_slice %78 {offsets = [2, 0], sizes = [12, 24], strides = [1, 1]} : vector<14x24xbf16> to vector<12x24xbf16>
    %82 = tpu.concatenate %79, %80, %81 in 1 : vector<12x24xbf16>, vector<12x24xbf16>, vector<12x24xbf16> -> vector<12x72xbf16>
    %83 = tpu.concatenate %23, %25, %27 in 1 : vector<14x8xbf16>, vector<14x8xbf16>, vector<14x8xbf16> -> vector<14x24xbf16>
    %84 = vector.extract_strided_slice %83 {offsets = [0, 0], sizes = [12, 24], strides = [1, 1]} : vector<14x24xbf16> to vector<12x24xbf16>
    %85 = vector.extract_strided_slice %83 {offsets = [1, 0], sizes = [12, 24], strides = [1, 1]} : vector<14x24xbf16> to vector<12x24xbf16>
    %86 = vector.extract_strided_slice %83 {offsets = [2, 0], sizes = [12, 24], strides = [1, 1]} : vector<14x24xbf16> to vector<12x24xbf16>
    %87 = tpu.concatenate %84, %85, %86 in 1 : vector<12x24xbf16>, vector<12x24xbf16>, vector<12x24xbf16> -> vector<12x72xbf16>
    %88 = tpu.concatenate %32, %37, %42, %47, %52, %57, %62, %67, %72, %77, %82, %87 in 0 : vector<12x72xbf16>, vector<12x72xbf16>, vector<12x72xbf16>, vector<12x72xbf16>, vector<12x72xbf16>, vector<12x72xbf16>, vector<12x72xbf16>, vector<12x72xbf16>, vector<12x72xbf16>, vector<12x72xbf16>, vector<12x72xbf16>, vector<12x72xbf16> -> vector<144x72xbf16>
    %c0_44 = arith.constant 0 : index
    %c0_45 = arith.constant 0 : index
    %89 = vector.load %arg5[%c0_44, %c0_45] : memref<72x8xbf16, #tpu.memory_space<vmem>>, vector<72x8xbf16>
    %cst = arith.constant dense<0.000000e+00> : vector<144x8xf32>
    %90 = tpu.matmul %88, %89, %cst {dimension_numbers = #tpu.dot_dimension_numbers<[1], [0], [0], [1], [0, 0, 1, 1], [], []>} : vector<144x72xbf16>, vector<72x8xbf16>, vector<144x8xf32> -> vector<144x8xf32>
    %91 = arith.truncf %90 : vector<144x8xf32> to vector<144x8xbf16>
    %c0_46 = arith.constant 0 : index
    %c0_47 = arith.constant 0 : index
    %c0_48 = arith.constant 0 : index
    %c0_49 = arith.constant 0 : index
    %92 = vector.load %arg6[%c0_46, %c0_47, %c0_48, %c0_49] : memref<1x1x144x8xbf16, #tpu.memory_space<vmem>>, vector<1x1x144x8xbf16>
    %93 = vector.shape_cast %92 : vector<1x1x144x8xbf16> to vector<144x8xbf16>
    %94 = vector.shape_cast %91 : vector<144x8xbf16> to vector<1x1x144x8xbf16>
    tpu.vector_store %arg6[%c0_46, %c0_47, %c0_48, %c0_49], %94 {strides = array<i32>} : memref<1x1x144x8xbf16, #tpu.memory_space<vmem>>, vector<1x1x144x8xbf16>,
    %cst_50 = arith.constant dense<0.000000e+00> : vector<8xf32>
    %95 = vector.multi_reduction <add>, %90, %cst_50 [0] : vector<144x8xf32> to vector<8xf32>
    %96 = vector.shape_cast %95 : vector<8xf32> to vector<1x8xf32>
    %97 = arith.mulf %90, %90 : vector<144x8xf32>
    %cst_51 = arith.constant dense<0.000000e+00> : vector<8xf32>
    %98 = vector.multi_reduction <add>, %97, %cst_51 [0] : vector<144x8xf32> to vector<8xf32>
    %99 = vector.shape_cast %98 : vector<8xf32> to vector<1x8xf32>
    %100 = tpu.concatenate %96, %99 in 0 : vector<1x8xf32>, vector<1x8xf32> -> vector<2x8xf32>
    %c0_52 = arith.constant 0 : index
    %c0_53 = arith.constant 0 : index
    %c0_54 = arith.constant 0 : index
    %c0_55 = arith.constant 0 : index
    %101 = vector.load %arg7[%c0_52, %c0_53, %c0_54, %c0_55] : memref<1x1x2x8xf32, #tpu.memory_space<vmem>>, vector<1x1x2x8xf32>
    %102 = vector.shape_cast %101 : vector<1x1x2x8xf32> to vector<2x8xf32>
    %103 = vector.shape_cast %100 : vector<2x8xf32> to vector<1x1x2x8xf32>
    tpu.vector_store %arg7[%c0_52, %c0_53, %c0_54, %c0_55], %103 {strides = array<i32>} : memref<1x1x2x8xf32, #tpu.memory_space<vmem>>, vector<1x1x2x8xf32>,
    return
  }
  func.func @transform_0(%arg0: i32, %arg1: i32) -> (i32, i32, i32, i32) {
    %c0_i32 = arith.constant 0 : i32
    %c0_i32_0 = arith.constant 0 : i32
    %c0_i32_1 = arith.constant 0 : i32
    return %arg0, %arg1, %c0_i32, %c0_i32_0 : i32, i32, i32, i32
  }
  func.func @transform_1(%arg0: i32, %arg1: i32) -> (i32, i32, i32, i32) {
    %c1_i32 = arith.constant 1 : i32
    %0 = arith.addi %arg1, %c1_i32 : i32
    %c12_i32 = arith.constant 12 : i32
    %1 = arith.muli %0, %c12_i32 : i32
    %c0_i32 = arith.constant 0 : i32
    %c0_i32_0 = arith.constant 0 : i32
    %c0_i32_1 = arith.constant 0 : i32
    return %arg0, %1, %c0_i32, %c0_i32_0 : i32, i32, i32, i32
  }
  func.func @transform_2(%arg0: i32, %arg1: i32) -> (i32, i32, i32, i32) {
    %c1_i32 = arith.constant 1 : i32
    %0 = arith.addi %arg1, %c1_i32 : i32
    %c12_i32 = arith.constant 12 : i32
    %1 = arith.muli %0, %c12_i32 : i32
    %c1_i32_0 = arith.constant 1 : i32
    %2 = arith.addi %1, %c1_i32_0 : i32
    %c0_i32 = arith.constant 0 : i32
    %c0_i32_1 = arith.constant 0 : i32
    %c0_i32_2 = arith.constant 0 : i32
    return %arg0, %2, %c0_i32, %c0_i32_1 : i32, i32, i32, i32
  }
  func.func @transform_3(%arg0: i32, %arg1: i32) -> (i32, i32) {
    %c0_i32 = arith.constant 0 : i32
    %c0_i32_0 = arith.constant 0 : i32
    %c0_i32_1 = arith.constant 0 : i32
    return %c0_i32, %c0_i32_0 : i32, i32
  }
  func.func @transform_4(%arg0: i32, %arg1: i32) -> (i32, i32, i32, i32) {
    %c0_i32 = arith.constant 0 : i32
    %c0_i32_0 = arith.constant 0 : i32
    %c0_i32_1 = arith.constant 0 : i32
    return %arg0, %arg1, %c0_i32, %c0_i32_0 : i32, i32, i32, i32
  }
  func.func @transform_5(%arg0: i32, %arg1: i32) -> (i32, i32, i32, i32) {
    %c0_i32 = arith.constant 0 : i32
    %c0_i32_0 = arith.constant 0 : i32
    %c0_i32_1 = arith.constant 0 : i32
    return %arg0, %arg1, %c0_i32, %c0_i32_0 : i32, i32, i32, i32
  }
}

module attributes {stable_mosaic.version = 11 : i64} {
  func.func @_bn_relu_kernel(%arg0: i32, %arg1: memref<16x96xbf16, #tpu.memory_space<vmem>>, %arg2: memref<1x96xf32, #tpu.memory_space<vmem>>, %arg3: memref<1x96xf32, #tpu.memory_space<vmem>>, %arg4: memref<16x96xf32, #tpu.memory_space<vmem>>) attributes {dimension_semantics = [#tpu.dimension_semantics<parallel>], iteration_bounds = array<i64: 2>, scalar_prefetch = 0 : i64, scratch_operands = 0 : i64, tpu.core_type = #tpu.core_type<tc>, window_params = [{transform_indices = @transform_0, window_bounds = array<i64: 16, 96>}, {pipeline_mode = #tpu.pipeline_mode<synchronous>, transform_indices = @transform_1, window_bounds = array<i64: 1, 96>}, {pipeline_mode = #tpu.pipeline_mode<synchronous>, transform_indices = @transform_2, window_bounds = array<i64: 1, 96>}, {transform_indices = @transform_3, window_bounds = array<i64: 16, 96>}]} {
    %c0 = arith.constant 0 : index
    %c0_0 = arith.constant 0 : index
    %0 = vector.load %arg1[%c0, %c0_0] : memref<16x96xbf16, #tpu.memory_space<vmem>>, vector<16x96xbf16>
    %1 = arith.extf %0 : vector<16x96xbf16> to vector<16x96xf32>
    %c0_1 = arith.constant 0 : index
    %c0_2 = arith.constant 0 : index
    %2 = vector.load %arg2[%c0_1, %c0_2] : memref<1x96xf32, #tpu.memory_space<vmem>>, vector<1x96xf32>
    %3 = vector.broadcast %2 : vector<1x96xf32> to vector<16x96xf32>
    %4 = arith.mulf %1, %3 : vector<16x96xf32>
    %c0_3 = arith.constant 0 : index
    %c0_4 = arith.constant 0 : index
    %5 = vector.load %arg3[%c0_3, %c0_4] : memref<1x96xf32, #tpu.memory_space<vmem>>, vector<1x96xf32>
    %6 = vector.broadcast %5 : vector<1x96xf32> to vector<16x96xf32>
    %7 = arith.addf %4, %6 : vector<16x96xf32>
    %cst = arith.constant 0.000000e+00 : f32
    %8 = vector.broadcast %cst : f32 to vector<16x96xf32>
    %9 = arith.maximumf %7, %8 : vector<16x96xf32>
    %c0_5 = arith.constant 0 : index
    %c0_6 = arith.constant 0 : index
    %10 = vector.load %arg4[%c0_5, %c0_6] : memref<16x96xf32, #tpu.memory_space<vmem>>, vector<16x96xf32>
    tpu.vector_store %arg4[%c0_5, %c0_6], %9 {strides = array<i32>} : memref<16x96xf32, #tpu.memory_space<vmem>>, vector<16x96xf32>,
    return
  }
  func.func @transform_0(%arg0: i32) -> (i32, i32) {
    %c0_i32 = arith.constant 0 : i32
    %c0_i32_0 = arith.constant 0 : i32
    return %arg0, %c0_i32 : i32, i32
  }
  func.func @transform_1(%arg0: i32) -> (i32, i32) {
    %c0_i32 = arith.constant 0 : i32
    %c0_i32_0 = arith.constant 0 : i32
    %c0_i32_1 = arith.constant 0 : i32
    return %c0_i32, %c0_i32_0 : i32, i32
  }
  func.func @transform_2(%arg0: i32) -> (i32, i32) {
    %c0_i32 = arith.constant 0 : i32
    %c0_i32_0 = arith.constant 0 : i32
    %c0_i32_1 = arith.constant 0 : i32
    return %c0_i32, %c0_i32_0 : i32, i32
  }
  func.func @transform_3(%arg0: i32) -> (i32, i32) {
    %c0_i32 = arith.constant 0 : i32
    %c0_i32_0 = arith.constant 0 : i32
    return %arg0, %c0_i32 : i32, i32
  }
}

</mosaic_0001>

<llo_original>
// kernel: tile.23
$region0: #{tile.23}
  #allocation0 [shape = 's32[1]{0}', space=sflag, size = 0x4, scoped, tag = 'scoped memory for tile.23']
  %s0 = inlined_call_operand.vmem [shape: f32[8], index: 0, kind: input, shape index: {}]
  %s1 = inlined_call_operand.vmem [shape: f32[14,8], index: 1, kind: output, shape index: {}]
  // Predicated region
  $region2: #{tile.23} parent=0 // pred_check
    _
  $region3: #{tile.23} parent=0 // pred_check_branch
    %3 = sbr.rel (0) target = $region5
  $region4: #{tile.23} parent=0 // pred_region
    _
  $region5: #{tile.23} parent=0 // pred_fallthru
    _
  %v4 = vld [vmem:[%s0] ss:$0 sm:$0xff]
  %5 = vst [vmem:[%s1] sm:$0xff] %v4
  %s6 = scalar_lea.vmem %s1, 8
  %7 = vst [vmem:[%s6] sm:$0xff] %v4

// kernel: tile.24
$region0: #{tile.24}
  %s0 = inlined_call_operand.vmem [shape: f32[14,8], index: 0, kind: input, shape index: {}]
  %s1 = inlined_call_operand.vmem [shape: f32[1,112], index: 1, kind: output, shape index: {}]
  $region1: #{tile.24} parent=0
    #allocation0 [shape = 'u8[4096]{0}', space=vmem, size = 0x1000, scoped, tag = 'scoped mem for output reshape']
    %v2 = vld [vmem:[%s0] sm:$0x1]
    %vm3 = vcmask 64512
    %4 = vst.msk [vmem:[#allocation0] sm:$0x1] %vm3, %v2
    %s5 = scalar_lea.vmem %s0, 13
    %v6 = vld [vmem:[%s5] sm:$0x1]
    %7 = vrot.lane.b32.xlu0 %v6, 104
    %v8 = vpop.permute.xlu0 %7
    %vm9 = vcmask 917312
    %10 = vst.msk [vmem:[#allocation0] sm:$0x1] %vm9, %v8
    %s11 = scalar_lea.vmem %s0, 12
    %v12 = vld [vmem:[%s11] sm:$0x1]
    %13 = vrot.lane.b32.xlu0 %v12, 96
    %v14 = vpop.permute.xlu0 %13
    %vm15 = vcmask 851712
    %16 = vst.msk [vmem:[#allocation0] sm:$0x1] %vm15, %v14
    %s17 = scalar_lea.vmem %s0, 11
    %v18 = vld [vmem:[%s17] sm:$0x1]
    %19 = vrot.lane.b32.xlu0 %v18, 88
    %v20 = vpop.permute.xlu0 %19
    %vm21 = vcmask 786112
    %22 = vst.msk [vmem:[#allocation0] sm:$0x1] %vm21, %v20
    %s23 = scalar_lea.vmem %s0, 10
    %v24 = vld [vmem:[%s23] sm:$0x1]
    %25 = vrot.lane.b32.xlu0 %v24, 80
    %v26 = vpop.permute.xlu0 %25
    %vm27 = vcmask 720512
    %28 = vst.msk [vmem:[#allocation0] sm:$0x1] %vm27, %v26
    %s29 = scalar_lea.vmem %s0, 9
    %v30 = vld [vmem:[%s29] sm:$0x1]
    %31 = vrot.lane.b32.xlu0 %v30, 72
    %v32 = vpop.permute.xlu0 %31
    %vm33 = vcmask 654912
    %34 = vst.msk [vmem:[#allocation0] sm:$0x1] %vm33, %v32
    %s35 = scalar_lea.vmem %s0, 8
    %v36 = vld [vmem:[%s35] sm:$0x1]
    %37 = vrot.lane.b32.xlu0 %v36, 64
    %v38 = vpop.permute.xlu0 %37
    %vm39 = vcmask 589312
    %40 = vst.msk [vmem:[#allocation0] sm:$0x1] %vm39, %v38
    %s41 = scalar_lea.vmem %s0, 7
    %v42 = vld [vmem:[%s41] sm:$0x1]
    %43 = vrot.lane.b32.xlu0 %v42, 56
    %v44 = vpop.permute.xlu0 %43
    %vm45 = vcmask 523712
    %46 = vst.msk [vmem:[#allocation0] sm:$0x1] %vm45, %v44
    %s47 = scalar_lea.vmem %s0, 6
    %v48 = vld [vmem:[%s47] sm:$0x1]
    %49 = vrot.lane.b32.xlu0 %v48, 48
    %v50 = vpop.permute.xlu0 %49
    %vm51 = vcmask 458112
    %52 = vst.msk [vmem:[#allocation0] sm:$0x1] %vm51, %v50
    %s53 = scalar_lea.vmem %s0, 5
    %v54 = vld [vmem:[%s53] sm:$0x1]
    %55 = vrot.lane.b32.xlu0 %v54, 40
    %v56 = vpop.permute.xlu0 %55
    %vm57 = vcmask 392512
    %58 = vst.msk [vmem:[#allocation0] sm:$0x1] %vm57, %v56
    %s59 = scalar_lea.vmem %s0, 4
    %v60 = vld [vmem:[%s59] sm:$0x1]
    %61 = vrot.lane.b32.xlu0 %v60, 32
    %v62 = vpop.permute.xlu0 %61
    %vm63 = vcmask 326912
    %64 = vst.msk [vmem:[#allocation0] sm:$0x1] %vm63, %v62
    %s65 = scalar_lea.vmem %s0, 3
    %v66 = vld [vmem:[%s65] sm:$0x1]
    %67 = vrot.lane.b32.xlu0 %v66, 24
    %v68 = vpop.permute.xlu0 %67
    %vm69 = vcmask 261312
    %70 = vst.msk [vmem:[#allocation0] sm:$0x1] %vm69, %v68
    %s71 = scalar_lea.vmem %s0, 2
    %v72 = vld [vmem:[%s71] sm:$0x1]
    %73 = vrot.lane.b32.xlu0 %v72, 16
    %v74 = vpop.permute.xlu0 %73
    %vm75 = vcmask 195712
    %76 = vst.msk [vmem:[#allocation0] sm:$0x1] %vm75, %v74
    %s77 = scalar_lea.vmem %s0, 1
    %v78 = vld [vmem:[%s77] sm:$0x1]
    %79 = vrot.lane.b32.xlu0 %v78, 8
    %v80 = vpop.permute.xlu0 %79
    %vm81 = vcmask 130112
    %82 = vst.msk [vmem:[#allocation0] sm:$0x1] %vm81, %v80
    %s84 = ssub.s32 2, 1
    %v85 = vld [vmem:[#allocation0] sm:%s84]
    %s87 = ssub.s32 2, 1
    %88 = vst [vmem:[%s1] sm:%s87] %v85

// kernel: tile.33
$region0: #{tile.33}
  #allocation0 [shape = 's32[1]{0}', space=sflag, size = 0x4, scoped, tag = 'scoped memory for tile.33']
  %s0 = inlined_call_operand.vmem [shape: f32[8], index: 0, kind: input, shape index: {}]
  %s1 = inlined_call_operand.vmem [shape: f32[12,8], index: 1, kind: output, shape index: {}]
  // Predicated region
  $region2: #{tile.33} parent=0 // pred_check
    _
  $region3: #{tile.33} parent=0 // pred_check_branch
    %3 = sbr.rel (0) target = $region5
  $region4: #{tile.33} parent=0 // pred_region
    _
  $region5: #{tile.33} parent=0 // pred_fallthru
    _
  %v4 = vld [vmem:[%s0] ss:$0 sm:$0xff]
  %5 = vst [vmem:[%s1] sm:$0xff] %v4
  %s6 = scalar_lea.vmem %s1, 8
  %7 = vst [vmem:[%s6] sm:$0xff] %v4

// kernel: tile.34
$region0: #{tile.34}
  %s0 = inlined_call_operand.vmem [shape: f32[12,8], index: 0, kind: input, shape index: {}]
  %s1 = inlined_call_operand.vmem [shape: f32[1,96], index: 1, kind: output, shape index: {}]
  $region1: #{tile.34} parent=0
    #allocation0 [shape = 'u8[4096]{0}', space=vmem, size = 0x1000, scoped, tag = 'scoped mem for output reshape']
    %v2 = vld [vmem:[%s0] sm:$0x1]
    %vm3 = vcmask 64512
    %4 = vst.msk [vmem:[#allocation0] sm:$0x1] %vm3, %v2
    %s5 = scalar_lea.vmem %s0, 11
    %v6 = vld [vmem:[%s5] sm:$0x1]
    %7 = vrot.lane.b32.xlu0 %v6, 88
    %v8 = vpop.permute.xlu0 %7
    %vm9 = vcmask 786112
    %10 = vst.msk [vmem:[#allocation0] sm:$0x1] %vm9, %v8
    %s11 = scalar_lea.vmem %s0, 10
    %v12 = vld [vmem:[%s11] sm:$0x1]
    %13 = vrot.lane.b32.xlu0 %v12, 80
    %v14 = vpop.permute.xlu0 %13
    %vm15 = vcmask 720512
    %16 = vst.msk [vmem:[#allocation0] sm:$0x1] %vm15, %v14
    %s17 = scalar_lea.vmem %s0, 9
    %v18 = vld [vmem:[%s17] sm:$0x1]
    %19 = vrot.lane.b32.xlu0 %v18, 72
    %v20 = vpop.permute.xlu0 %19
    %vm21 = vcmask 654912
    %22 = vst.msk [vmem:[#allocation0] sm:$0x1] %vm21, %v20
    %s23 = scalar_lea.vmem %s0, 8
    %v24 = vld [vmem:[%s23] sm:$0x1]
    %25 = vrot.lane.b32.xlu0 %v24, 64
    %v26 = vpop.permute.xlu0 %25
    %vm27 = vcmask 589312
    %28 = vst.msk [vmem:[#allocation0] sm:$0x1] %vm27, %v26
    %s29 = scalar_lea.vmem %s0, 7
    %v30 = vld [vmem:[%s29] sm:$0x1]
    %31 = vrot.lane.b32.xlu0 %v30, 56
    %v32 = vpop.permute.xlu0 %31
    %vm33 = vcmask 523712
    %34 = vst.msk [vmem:[#allocation0] sm:$0x1] %vm33, %v32
    %s35 = scalar_lea.vmem %s0, 6
    %v36 = vld [vmem:[%s35] sm:$0x1]
    %37 = vrot.lane.b32.xlu0 %v36, 48
    %v38 = vpop.permute.xlu0 %37
    %vm39 = vcmask 458112
    %40 = vst.msk [vmem:[#allocation0] sm:$0x1] %vm39, %v38
    %s41 = scalar_lea.vmem %s0, 5
    %v42 = vld [vmem:[%s41] sm:$0x1]
    %43 = vrot.lane.b32.xlu0 %v42, 40
    %v44 = vpop.permute.xlu0 %43
    %vm45 = vcmask 392512
    %46 = vst.msk [vmem:[#allocation0] sm:$0x1] %vm45, %v44
    %s47 = scalar_lea.vmem %s0, 4
    %v48 = vld [vmem:[%s47] sm:$0x1]
    %49 = vrot.lane.b32.xlu0 %v48, 32
    %v50 = vpop.permute.xlu0 %49
    %vm51 = vcmask 326912
    %52 = vst.msk [vmem:[#allocation0] sm:$0x1] %vm51, %v50
    %s53 = scalar_lea.vmem %s0, 3
    %v54 = vld [vmem:[%s53] sm:$0x1]
    %55 = vrot.lane.b32.xlu0 %v54, 24
    %v56 = vpop.permute.xlu0 %55
    %vm57 = vcmask 261312
    %58 = vst.msk [vmem:[#allocation0] sm:$0x1] %vm57, %v56
    %s59 = scalar_lea.vmem %s0, 2
    %v60 = vld [vmem:[%s59] sm:$0x1]
    %61 = vrot.lane.b32.xlu0 %v60, 16
    %v62 = vpop.permute.xlu0 %61
    %vm63 = vcmask 195712
    %64 = vst.msk [vmem:[#allocation0] sm:$0x1] %vm63, %v62
    %s65 = scalar_lea.vmem %s0, 1
    %v66 = vld [vmem:[%s65] sm:$0x1]
    %67 = vrot.lane.b32.xlu0 %v66, 8
    %v68 = vpop.permute.xlu0 %67
    %vm69 = vcmask 130112
    %70 = vst.msk [vmem:[#allocation0] sm:$0x1] %vm69, %v68
    %s72 = ssub.s32 2, 1
    %v73 = vld [vmem:[#allocation0] sm:%s72]
    %s75 = ssub.s32 2, 1
    %76 = vst [vmem:[%s1] sm:%s75] %v73

// kernel: conv_block.5
$region0: #{conv_block.5}
  #allocation0 [shape = 'u32[]', space=smem, size = 0x4, offset = 0x4, fixed_abs, tag = 'smem constant byte address 0x4 - core index']
  #allocation1 [shape = 'u32[72,128]{1,0:T(1,128)}', space=vmem, size = 0x9000, scoped, tag = 'internal scratch']
  %s0 = inlined_call_operand.vmem [shape: bf16[28,112], index: 0, kind: input, shape index: {}]
  %s1 = inlined_call_operand.vmem [shape: f32[1,112], index: 1, kind: input, shape index: {}]
  %s2 = inlined_call_operand.vmem [shape: f32[1,112], index: 2, kind: input, shape index: {}]
  %s3 = inlined_call_operand.vmem [shape: bf16[28,112], index: 3, kind: output, shape index: {}]
  %s4 = sld [smem:[#allocation0]]
  $region45: #{conv_block.5} parent=0
    _
  %s6 = ssub.s32 1, %s4
  %s7 = scalar_select 0, %s6, %s4
  loop: start=0, step=1, limit=4
  $region2: #{conv_block.5} parent=0 // loop_pre_header
    _
  $region3: #{conv_block.5} parent=0 // loop_header
    %s9 = sphi 0, %s13
    %p10 = scmp.ge.s32.totalorder %s9, 4
    %s19 = sphi 0, %s21
    %s22 = sphi 0, %s19
    %s23 = sphi 0, %s22
    %s39 = sphi 0, %s23
    %s43 = sphi 0, %s43
    %s45 = sphi 0, %s43
    %s46 = sphi 0, %s45
    %s60 = sphi 0, %s46
    %s64 = sphi 0, %s64
    %s66 = sphi 0, %s64
    %s67 = sphi 0, %s66
    %s81 = sphi 0, %s67
    %s87 = sphi 0, %s89
    %s90 = sphi 0, %s87
    %s91 = sphi 0, %s90
    %s107 = sphi 0, %s91
  $region4: #{conv_block.5} parent=0 // loop_header_branch
    %12 = sbr.rel (%p10) target = $region8
  $region5: #{conv_block.5} parent=0 // loop_body
    %s14 = ssub.s32 %s9, 1
    %s15 = ssub.s32 %s9, 2
    %s16 = sadd.s32 %s9, 1
    %s17 = ssub.s32 %s9, %s16
    %p18 = scmp.eq.s32.totalorder %s17, 0
    %s20 = sadd.s32 %s19, 1
    %s21 = scalar_select %p18, %s19, %s20
    %p24 = pneg %p18
    %p25 = scmp.eq.s32.totalorder %s9, 1
    %p26 = por %p24, %p25
    %p27 = scmp.ne.s32.totalorder %s19, %s22
    %p28 = scmp.eq.s32.totalorder %s9, 0
    %p29 = por %p27, %p28
    %p30 = scmp.ne.s32.totalorder %s19, %s22
    %p31 = scmp.eq.s32.totalorder %s14, 1
    %p32 = por %p30, %p31
    %p33 = scmp.ne.s32.totalorder %s22, %s23
    %p34 = scmp.eq.s32.totalorder %s14, 0
    %p35 = por %p33, %p34
    %p36 = scmp.ne.s32.totalorder %s22, %s23
    %p37 = scmp.eq.s32.totalorder %s15, 1
    %p38 = por %p36, %p37
    %p40 = scmp.ne.s32.totalorder %s23, %s39
    %p41 = scmp.eq.s32.totalorder %s15, 0
    %p42 = por %p40, %p41
    %s44 = sadd.s32 %s43, 1
    %p47 = scmp.eq.s32.totalorder %s9, 1
    %p48 = scmp.ne.s32.totalorder %s43, %s45
    %p49 = scmp.eq.s32.totalorder %s9, 0
    %p50 = por %p48, %p49
    %p51 = scmp.ne.s32.totalorder %s43, %s45
    %p52 = scmp.eq.s32.totalorder %s14, 1
    %p53 = por %p51, %p52
    %p54 = scmp.ne.s32.totalorder %s45, %s46
    %p55 = scmp.eq.s32.totalorder %s14, 0
    %p56 = por %p54, %p55
    %p57 = scmp.ne.s32.totalorder %s45, %s46
    %p58 = scmp.eq.s32.totalorder %s15, 1
    %p59 = por %p57, %p58
    %p61 = scmp.ne.s32.totalorder %s46, %s60
    %p62 = scmp.eq.s32.totalorder %s15, 0
    %p63 = por %p61, %p62
    %s65 = sadd.s32 %s64, 1
    %p68 = scmp.eq.s32.totalorder %s9, 1
    %p69 = scmp.ne.s32.totalorder %s64, %s66
    %p70 = scmp.eq.s32.totalorder %s9, 0
    %p71 = por %p69, %p70
    %p72 = scmp.ne.s32.totalorder %s64, %s66
    %p73 = scmp.eq.s32.totalorder %s14, 1
    %p74 = por %p72, %p73
    %p75 = scmp.ne.s32.totalorder %s66, %s67
    %p76 = scmp.eq.s32.totalorder %s14, 0
    %p77 = por %p75, %p76
    %p78 = scmp.ne.s32.totalorder %s66, %s67
    %p79 = scmp.eq.s32.totalorder %s15, 1
    %p80 = por %p78, %p79
    %p82 = scmp.ne.s32.totalorder %s67, %s81
    %p83 = scmp.eq.s32.totalorder %s15, 0
    %p84 = por %p82, %p83
    %s85 = ssub.s32 %s9, %s16
    %p86 = scmp.eq.s32.totalorder %s85, 0
    %s88 = sadd.s32 %s87, 1
    %s89 = scalar_select %p86, %s87, %s88
    %p92 = pneg %p86
    %p93 = scmp.eq.s32.totalorder %s9, 1
    %p94 = por %p92, %p93
    %p95 = scmp.ne.s32.totalorder %s87, %s90
    %p96 = scmp.eq.s32.totalorder %s9, 0
    %p97 = por %p95, %p96
    %p98 = scmp.ne.s32.totalorder %s87, %s90
    %p99 = scmp.eq.s32.totalorder %s14, 1
    %p100 = por %p98, %p99
    %p101 = scmp.ne.s32.totalorder %s90, %s91
    %p102 = scmp.eq.s32.totalorder %s14, 0
    %p103 = por %p101, %p102
    %p104 = scmp.ne.s32.totalorder %s90, %s91
    %p105 = scmp.eq.s32.totalorder %s15, 1
    %p106 = por %p104, %p105
    %p108 = scmp.ne.s32.totalorder %s91, %s107
    %p109 = scmp.eq.s32.totalorder %s15, 0
    %p110 = por %p108, %p109
    %p111 = scmp.le.s32.totalorder 1, %s9
    %p112 = scmp.lt.s32.totalorder %s9, 3
    %p113 = pnand %p111, %p112
    %p114 = pneg %p113
    // Predicated region
    $region9: #{conv_block.5} parent=5 // pred_check
      _
    $region10: #{conv_block.5} parent=5 // pred_check_branch
      %116 = sbr.rel (%p113) target = $region12
    $region11: #{conv_block.5} parent=5 // pred_region
      %s117 = ssub.s32 %s9, 1
      // Predicated region
      $region13: #{conv_block.5} parent=11 // pred_check
        %p118 = pneg %p56
      $region14: #{conv_block.5} parent=11 // pred_check_branch
        %120 = sbr.rel (%p118) target = $region16
      $region15: #{conv_block.5} parent=11 // pred_region
        _
      $region16: #{conv_block.5} parent=11 // pred_fallthru
        _
      // Predicated region
      $region17: #{conv_block.5} parent=11 // pred_check
        %p121 = pneg %p77
      $region18: #{conv_block.5} parent=11 // pred_check_branch
        %123 = sbr.rel (%p121) target = $region20
      $region19: #{conv_block.5} parent=11 // pred_region
        _
      $region20: #{conv_block.5} parent=11 // pred_fallthru
        _
    $region12: #{conv_block.5} parent=5 // pred_fallthru
      _
    %p124 = scmp.lt.s32.totalorder %s9, 2
    // Predicated region
    $region21: #{conv_block.5} parent=5 // pred_check
      %p125 = pneg %p124
    $region22: #{conv_block.5} parent=5 // pred_check_branch
      %127 = sbr.rel (%p125) target = $region24
    $region23: #{conv_block.5} parent=5 // pred_region
      // Predicated region
      $region25: #{conv_block.5} parent=23 // pred_check
        %p128 = pneg %p29
      $region26: #{conv_block.5} parent=23 // pred_check_branch
        %130 = sbr.rel (%p128) target = $region28
      $region27: #{conv_block.5} parent=23 // pred_region
        %s131 = smul.u32 2, %s9
        %p132 = scmp.lt.s32.totalorder %s131, 3
        %s133 = scalar_select %p132, %s131, 3
        %s134 = smul.addr %s133, 4
        %s135 = scalar_lea.vmem %s0, %s134
        %s136 = smul.u32 2, %s9
      $region28: #{conv_block.5} parent=23 // pred_fallthru
        _
    $region24: #{conv_block.5} parent=5 // pred_fallthru
      _
    %p137 = scmp.le.s32.totalorder 1, %s9
    %p138 = scmp.lt.s32.totalorder %s9, 3
    %p139 = pnand %p137, %p138
    %p140 = pneg %p139
    // Predicated region
    $region29: #{conv_block.5} parent=5 // pred_check
      _
    $region30: #{conv_block.5} parent=5 // pred_check_branch
      %142 = sbr.rel (%p139) target = $region32
    $region31: #{conv_block.5} parent=5 // pred_region
      %s143 = ssub.s32 %s9, 1
      %s144 = smul.u32 2, %s14
      %p145 = scmp.lt.s32.totalorder %s144, 3
      %s146 = scalar_select %p145, %s144, 3
      %s147 = smul.addr %s146, 4
      %s148 = scalar_lea.vmem %s0, %s147
      %p149 = pneg %p35
      %p150 = pneg %p32
      %p151 = pneg %p56
      %p152 = pneg %p53
      %p153 = pneg %p77
      %p154 = pneg %p74
      %p155 = pneg %p103
      %p156 = pneg %p100
      %s157 = smul.u32 2, %s14
      %p158 = scmp.lt.s32.totalorder %s157, 3
      %s159 = scalar_select %p158, %s157, 3
      %s160 = smul.addr %s159, 4
      %s161 = scalar_lea.vmem %s3, %s160
      %s162 = smul.u32 2, %s14
      %p163 = scmp.lt.s32.totalorder %s162, 3
      %s164 = scalar_select %p163, %s162, 3
      %s165 = smul.addr %s164, 4
      %s166 = scalar_lea.vmem %s0, %s165
      %s167 = smul.u32 2, %s14
      %s168 = smul.u32 2, %s14
      %p169 = scmp.lt.s32.totalorder %s168, 3
      %s170 = scalar_select %p169, %s168, 3
      %s171 = smul.addr %s170, 4
      %s172 = scalar_lea.vmem %s3, %s171
      %s173 = smul.u32 2, %s14
      %v174 = vld [vmem:[%s166] sm:$0xf]
      %v175 = vld [vmem:[%s166 + $0x4] sm:$0xf]
      %v176 = vunpack.c.l.bf16 %v174
      %v177 = vunpack.c.l.bf16 %v175
      %v178 = vld [vmem:[%s1] sm:$0x1]
      %v180 = vperm.slane %v178, 0
      %v182 = vmul.f32 %v176, %v180
      %v183 = vmul.f32 %v177, %v180
      %v184 = vld [vmem:[%s2] sm:$0x1]
      %v186 = vperm.slane %v184, 0
      %v188 = vadd.f32 %v182, %v186
      %v189 = vadd.f32 %v183, %v186
      %v190 = vmax.f32 %v188, 0.0
      %v191 = vmax.f32 %v189, 0.0
      %v192 = vpack.c.bf16 %v190, %v190
      %v193 = vpack.c.bf16 %v191, %v191
      %vm194 = vcmask 912384
      %195 = vst.msk [vmem:[%s172] sm:$0xf] %vm194, %v192
      %196 = vst.msk [vmem:[%s172 + $0x4] sm:$0xf] %vm194, %v193
      %s197 = smul.u32 2, %s14
      %p198 = scmp.lt.s32.totalorder %s197, 3
      %s199 = scalar_select %p198, %s197, 3
      %s200 = smul.addr %s199, 4
      %s201 = scalar_lea.vmem %s3, %s200
      // Predicated region
      $region33: #{conv_block.5} parent=31 // pred_check
        %p202 = pneg %p100
      $region34: #{conv_block.5} parent=31 // pred_check_branch
        %204 = sbr.rel (%p202) target = $region36
      $region35: #{conv_block.5} parent=31 // pred_region
        %s205 = smul.u32 2, %s14
      $region36: #{conv_block.5} parent=31 // pred_fallthru
        _
    $region32: #{conv_block.5} parent=5 // pred_fallthru
      _
    %p206 = scmp.le.s32.totalorder 2, %s9
    // Predicated region
    $region37: #{conv_block.5} parent=5 // pred_check
      %p207 = pneg %p206
    $region38: #{conv_block.5} parent=5 // pred_check_branch
      %209 = sbr.rel (%p207) target = $region40
    $region39: #{conv_block.5} parent=5 // pred_region
      %s210 = ssub.s32 %s9, 2
      // Predicated region
      $region41: #{conv_block.5} parent=39 // pred_check
        %p211 = pneg %p106
      $region42: #{conv_block.5} parent=39 // pred_check_branch
        %213 = sbr.rel (%p211) target = $region44
      $region43: #{conv_block.5} parent=39 // pred_region
        %s214 = smul.u32 2, %s15
        %p215 = scmp.lt.s32.totalorder %s214, 3
        %s216 = scalar_select %p215, %s214, 3
        %s217 = smul.addr %s216, 4
        %s218 = scalar_lea.vmem %s3, %s217
      $region44: #{conv_block.5} parent=39 // pred_fallthru
        _
    $region40: #{conv_block.5} parent=5 // pred_fallthru
      _
  $region6: #{conv_block.5} parent=0 // loop_footer
    %s13 = sadd.s32 1, %s9
  $region7: #{conv_block.5} parent=0 // loop_footer_branch
    %8 = sbr.rel target = $region3
  $region8: #{conv_block.5} parent=0 // loop_exit
    _

// kernel: conv_block.4
$region0: #{conv_block.4}
  #allocation0 [shape = 'u32[]', space=smem, size = 0x4, offset = 0x4, fixed_abs, tag = 'smem constant byte address 0x4 - core index']
  #allocation1 [shape = 'u32[72,128]{1,0:T(1,128)}', space=vmem, size = 0x9000, scoped, tag = 'internal scratch']
  %s0 = inlined_call_operand.vmem [shape: bf16[2,16,16,4], index: 0, kind: input, shape index: {}, may-alias: {0,1,2}]
  %s1 = inlined_call_operand.vmem [shape: bf16[2,16,16,4], index: 1, kind: input, shape index: {}, may-alias: {0,1,2}]
  %s2 = inlined_call_operand.vmem [shape: bf16[2,16,16,4], index: 2, kind: input, shape index: {}, may-alias: {0,1,2}]
  %s3 = inlined_call_operand.vmem [shape: bf16[36,8], index: 3, kind: input, shape index: {}]
  %s4 = inlined_call_operand.vmem [shape: bf16[2,1,196,8], index: 4, kind: output, shape index: {0}]
  %s5 = inlined_call_operand.vmem [shape: f32[2,1,2,8], index: 5, kind: output, shape index: {1}]
  %6 = xla_tuple %s4, %s5
  %s7 = sld [smem:[#allocation0]]
  $region57: #{conv_block.4} parent=0
    _
  %s9 = ssub.s32 1, %s7
  %s10 = scalar_select 0, %s9, %s7
  loop: start=0, step=1, limit=4
  $region2: #{conv_block.4} parent=0 // loop_pre_header
    _
  $region3: #{conv_block.4} parent=0 // loop_header
    %s12 = sphi 0, %s16
    %p13 = scmp.ge.s32.totalorder %s12, 4
    %s19 = sphi 0, %s31
    %s20 = sphi 0, %s27
    %s21 = sphi 0, %s19
    %s22 = sphi 0, %s20
    %s23 = sphi 0, %s21
    %s24 = sphi 0, %s22
    %s36 = sphi 0, %s38
    %s39 = sphi 0, %s36
    %s40 = sphi 0, %s39
    %s56 = sphi 0, %s40
    %s68 = sphi 0, %s70
    %s71 = sphi 0, %s68
    %s72 = sphi 0, %s71
    %s88 = sphi 0, %s72
    %s102 = sphi 0, %s104
    %s105 = sphi 0, %s102
    %s106 = sphi 0, %s105
    %s122 = sphi 0, %s106
    %s126 = sphi 0, %s126
    %s128 = sphi 0, %s126
    %s129 = sphi 0, %s128
    %s143 = sphi 0, %s129
    %s151 = sphi 0, %s153
    %s154 = sphi 0, %s151
    %s155 = sphi 0, %s154
    %s171 = sphi 0, %s155
    %s179 = sphi 0, %s181
    %s182 = sphi 0, %s179
    %s183 = sphi 0, %s182
    %s199 = sphi 0, %s183
  $region4: #{conv_block.4} parent=0 // loop_header_branch
    %15 = sbr.rel (%p13) target = $region8
  $region5: #{conv_block.4} parent=0 // loop_body
    %s17 = ssub.s32 %s12, 1
    %s18 = ssub.s32 %s12, 2
    %s25 = sadd.s32 1, %s20
    %p26 = scmp.ge.s32.totalorder %s25, 1
    %s27 = scalar_select %p26, 0, %s25
    %s28 = sadd.s32 1, %s19
    %s29 = scalar_select %p26, %s28, %s19
    %p30 = scmp.ge.s32.totalorder %s29, 2
    %s31 = scalar_select %p30, 0, %s29
    %s32 = ssub.s32 %s19, %s31
    %s33 = ssub.s32 %s20, %s27
    %s34 = sor.u32 %s32, %s33
    %p35 = scmp.eq.s32.totalorder %s34, 0
    %s37 = sadd.s32 %s36, 1
    %s38 = scalar_select %p35, %s36, %s37
    %p41 = pneg %p35
    %p42 = scmp.eq.s32.totalorder %s12, 1
    %p43 = por %p41, %p42
    %p44 = scmp.ne.s32.totalorder %s36, %s39
    %p45 = scmp.eq.s32.totalorder %s12, 0
    %p46 = por %p44, %p45
    %p47 = scmp.ne.s32.totalorder %s36, %s39
    %p48 = scmp.eq.s32.totalorder %s17, 1
    %p49 = por %p47, %p48
    %p50 = scmp.ne.s32.totalorder %s39, %s40
    %p51 = scmp.eq.s32.totalorder %s17, 0
    %p52 = por %p50, %p51
    %p53 = scmp.ne.s32.totalorder %s39, %s40
    %p54 = scmp.eq.s32.totalorder %s18, 1
    %p55 = por %p53, %p54
    %p57 = scmp.ne.s32.totalorder %s40, %s56
    %p58 = scmp.eq.s32.totalorder %s18, 0
    %p59 = por %p57, %p58
    %s60 = sadd.s32 %s20, 1
    %s61 = smul.u32 %s60, 14
    %s62 = sadd.s32 %s27, 1
    %s63 = smul.u32 %s62, 14
    %s64 = ssub.s32 %s19, %s31
    %s65 = ssub.s32 %s61, %s63
    %s66 = sor.u32 %s64, %s65
    %p67 = scmp.eq.s32.totalorder %s66, 0
    %s69 = sadd.s32 %s68, 1
    %s70 = scalar_select %p67, %s68, %s69
    %p73 = pneg %p67
    %p74 = scmp.eq.s32.totalorder %s12, 1
    %p75 = por %p73, %p74
    %p76 = scmp.ne.s32.totalorder %s68, %s71
    %p77 = scmp.eq.s32.totalorder %s12, 0
    %p78 = por %p76, %p77
    %p79 = scmp.ne.s32.totalorder %s68, %s71
    %p80 = scmp.eq.s32.totalorder %s17, 1
    %p81 = por %p79, %p80
    %p82 = scmp.ne.s32.totalorder %s71, %s72
    %p83 = scmp.eq.s32.totalorder %s17, 0
    %p84 = por %p82, %p83
    %p85 = scmp.ne.s32.totalorder %s71, %s72
    %p86 = scmp.eq.s32.totalorder %s18, 1
    %p87 = por %p85, %p86
    %p89 = scmp.ne.s32.totalorder %s72, %s88
    %p90 = scmp.eq.s32.totalorder %s18, 0
    %p91 = por %p89, %p90
    %s92 = sadd.s32 %s20, 1
    %s93 = smul.u32 %s92, 14
    %s94 = sadd.s32 %s93, 1
    %s95 = sadd.s32 %s27, 1
    %s96 = smul.u32 %s95, 14
    %s97 = sadd.s32 %s96, 1
    %s98 = ssub.s32 %s19, %s31
    %s99 = ssub.s32 %s94, %s97
    %s100 = sor.u32 %s98, %s99
    %p101 = scmp.eq.s32.totalorder %s100, 0
    %s103 = sadd.s32 %s102, 1
    %s104 = scalar_select %p101, %s102, %s103
    %p107 = pneg %p101
    %p108 = scmp.eq.s32.totalorder %s12, 1
    %p109 = por %p107, %p108
    %p110 = scmp.ne.s32.totalorder %s102, %s105
    %p111 = scmp.eq.s32.totalorder %s12, 0
    %p112 = por %p110, %p111
    %p113 = scmp.ne.s32.totalorder %s102, %s105
    %p114 = scmp.eq.s32.totalorder %s17, 1
    %p115 = por %p113, %p114
    %p116 = scmp.ne.s32.totalorder %s105, %s106
    %p117 = scmp.eq.s32.totalorder %s17, 0
    %p118 = por %p116, %p117
    %p119 = scmp.ne.s32.totalorder %s105, %s106
    %p120 = scmp.eq.s32.totalorder %s18, 1
    %p121 = por %p119, %p120
    %p123 = scmp.ne.s32.totalorder %s106, %s122
    %p124 = scmp.eq.s32.totalorder %s18, 0
    %p125 = por %p123, %p124
    %s127 = sadd.s32 %s126, 1
    %p130 = scmp.eq.s32.totalorder %s12, 1
    %p131 = scmp.ne.s32.totalorder %s126, %s128
    %p132 = scmp.eq.s32.totalorder %s12, 0
    %p133 = por %p131, %p132
    %p134 = scmp.ne.s32.totalorder %s126, %s128
    %p135 = scmp.eq.s32.totalorder %s17, 1
    %p136 = por %p134, %p135
    %p137 = scmp.ne.s32.totalorder %s128, %s129
    %p138 = scmp.eq.s32.totalorder %s17, 0
    %p139 = por %p137, %p138
    %p140 = scmp.ne.s32.totalorder %s128, %s129
    %p141 = scmp.eq.s32.totalorder %s18, 1
    %p142 = por %p140, %p141
    %p144 = scmp.ne.s32.totalorder %s129, %s143
    %p145 = scmp.eq.s32.totalorder %s18, 0
    %p146 = por %p144, %p145
    %s147 = ssub.s32 %s19, %s31
    %s148 = ssub.s32 %s20, %s27
    %s149 = sor.u32 %s147, %s148
    %p150 = scmp.eq.s32.totalorder %s149, 0
    %s152 = sadd.s32 %s151, 1
    %s153 = scalar_select %p150, %s151, %s152
    %p156 = pneg %p150
    %p157 = scmp.eq.s32.totalorder %s12, 1
    %p158 = por %p156, %p157
    %p159 = scmp.ne.s32.totalorder %s151, %s154
    %p160 = scmp.eq.s32.totalorder %s12, 0
    %p161 = por %p159, %p160
    %p162 = scmp.ne.s32.totalorder %s151, %s154
    %p163 = scmp.eq.s32.totalorder %s17, 1
    %p164 = por %p162, %p163
    %p165 = scmp.ne.s32.totalorder %s154, %s155
    %p166 = scmp.eq.s32.totalorder %s17, 0
    %p167 = por %p165, %p166
    %p168 = scmp.ne.s32.totalorder %s154, %s155
    %p169 = scmp.eq.s32.totalorder %s18, 1
    %p170 = por %p168, %p169
    %p172 = scmp.ne.s32.totalorder %s155, %s171
    %p173 = scmp.eq.s32.totalorder %s18, 0
    %p174 = por %p172, %p173
    %s175 = ssub.s32 %s19, %s31
    %s176 = ssub.s32 %s20, %s27
    %s177 = sor.u32 %s175, %s176
    %p178 = scmp.eq.s32.totalorder %s177, 0
    %s180 = sadd.s32 %s179, 1
    %s181 = scalar_select %p178, %s179, %s180
    %p184 = pneg %p178
    %p185 = scmp.eq.s32.totalorder %s12, 1
    %p186 = por %p184, %p185
    %p187 = scmp.ne.s32.totalorder %s179, %s182
    %p188 = scmp.eq.s32.totalorder %s12, 0
    %p189 = por %p187, %p188
    %p190 = scmp.ne.s32.totalorder %s179, %s182
    %p191 = scmp.eq.s32.totalorder %s17, 1
    %p192 = por %p190, %p191
    %p193 = scmp.ne.s32.totalorder %s182, %s183
    %p194 = scmp.eq.s32.totalorder %s17, 0
    %p195 = por %p193, %p194
    %p196 = scmp.ne.s32.totalorder %s182, %s183
    %p197 = scmp.eq.s32.totalorder %s18, 1
    %p198 = por %p196, %p197
    %p200 = scmp.ne.s32.totalorder %s183, %s199
    %p201 = scmp.eq.s32.totalorder %s18, 0
    %p202 = por %p200, %p201
    %p203 = scmp.le.s32.totalorder 1, %s12
    %p204 = scmp.lt.s32.totalorder %s12, 3
    %p205 = pnand %p203, %p204
    %p206 = pneg %p205
    // Predicated region
    $region9: #{conv_block.4} parent=5 // pred_check
      _
    $region10: #{conv_block.4} parent=5 // pred_check_branch
      %208 = sbr.rel (%p205) target = $region12
    $region11: #{conv_block.4} parent=5 // pred_region
      %s209 = ssub.s32 %s12, 1
      // Predicated region
      $region13: #{conv_block.4} parent=11 // pred_check
        %p210 = pneg %p139
      $region14: #{conv_block.4} parent=11 // pred_check_branch
        %212 = sbr.rel (%p210) target = $region16
      $region15: #{conv_block.4} parent=11 // pred_region
        _
      $region16: #{conv_block.4} parent=11 // pred_fallthru
        _
    $region12: #{conv_block.4} parent=5 // pred_fallthru
      _
    %p213 = scmp.lt.s32.totalorder %s12, 2
    // Predicated region
    $region17: #{conv_block.4} parent=5 // pred_check
      %p214 = pneg %p213
    $region18: #{conv_block.4} parent=5 // pred_check_branch
      %216 = sbr.rel (%p214) target = $region20
    $region19: #{conv_block.4} parent=5 // pred_region
      // Predicated region
      $region21: #{conv_block.4} parent=19 // pred_check
        %p217 = pneg %p46
      $region22: #{conv_block.4} parent=19 // pred_check_branch
        %219 = sbr.rel (%p217) target = $region24
      $region23: #{conv_block.4} parent=19 // pred_region
        %s220 = smul.u32 14, %s20
        %s221 = ssub.s32 16, %s220
        %p222 = scmp.lt.s32.totalorder %s221, 14
        %s223 = scalar_select %p222, %s221, 14
        %s224 = smul.u32 4, %s223
        %s225 = smul.u32 %s224, 2
        %p226 = scmp.lt.s32.totalorder %s19, 1
        %s227 = scalar_select %p226, %s19, 1
        %p228 = scmp.lt.s32.totalorder %s220, 15
        %s229 = scalar_select %p228, %s220, 15
        %s230 = smul.addr %s229, 2
        %s231 = smul.addr %s227, 32
        %s232 = sadd.s32 %s230, %s231
        %s233 = smul.addr %s232, 4
        %s234 = scalar_lea.vmem %s0, %s233
        %s235 = smul.u32 14, %s20
        %s236 = ssub.s32 16, %s235
        %p237 = scmp.lt.s32.totalorder %s236, 14
        %s238 = scalar_select %p237, %s236, 14
        %s239 = smul.u32 4, %s238
        %s240 = smul.u32 %s239, 2
      $region24: #{conv_block.4} parent=19 // pred_fallthru
        _
      // Predicated region
      $region25: #{conv_block.4} parent=19 // pred_check
        %p241 = pneg %p78
      $region26: #{conv_block.4} parent=19 // pred_check_branch
        %243 = sbr.rel (%p241) target = $region28
      $region27: #{conv_block.4} parent=19 // pred_region
        %s244 = sadd.s32 %s20, 1
        %s245 = smul.u32 %s244, 14
        %p246 = scmp.lt.s32.totalorder %s19, 1
        %s247 = scalar_select %p246, %s19, 1
        %p248 = scmp.lt.s32.totalorder %s245, 15
        %s249 = scalar_select %p248, %s245, 15
        %s250 = smul.addr %s249, 2
        %s251 = smul.addr %s247, 32
        %s252 = sadd.s32 %s250, %s251
        %s253 = smul.addr %s252, 4
        %s254 = scalar_lea.vmem %s1, %s253
        %s255 = sadd.s32 %s20, 1
        %s256 = smul.u32 %s255, 14
      $region28: #{conv_block.4} parent=19 // pred_fallthru
        _
      // Predicated region
      $region29: #{conv_block.4} parent=19 // pred_check
        %p257 = pneg %p112
      $region30: #{conv_block.4} parent=19 // pred_check_branch
        %259 = sbr.rel (%p257) target = $region32
      $region31: #{conv_block.4} parent=19 // pred_region
        %s260 = sadd.s32 %s20, 1
        %s261 = smul.u32 %s260, 14
        %s262 = sadd.s32 %s261, 1
        %p263 = scmp.lt.s32.totalorder %s19, 1
        %s264 = scalar_select %p263, %s19, 1
        %p265 = scmp.lt.s32.totalorder %s262, 15
        %s266 = scalar_select %p265, %s262, 15
        %s267 = smul.addr %s266, 2
        %s268 = smul.addr %s264, 32
        %s269 = sadd.s32 %s267, %s268
        %s270 = smul.addr %s269, 4
        %s271 = scalar_lea.vmem %s2, %s270
        %s272 = sadd.s32 %s20, 1
        %s273 = smul.u32 %s272, 14
        %s274 = sadd.s32 %s273, 1
      $region32: #{conv_block.4} parent=19 // pred_fallthru
        _
    $region20: #{conv_block.4} parent=5 // pred_fallthru
      _
    %p275 = scmp.le.s32.totalorder 1, %s12
    %p276 = scmp.lt.s32.totalorder %s12, 3
    %p277 = pnand %p275, %p276
    %p278 = pneg %p277
    // Predicated region
    $region33: #{conv_block.4} parent=5 // pred_check
      _
    $region34: #{conv_block.4} parent=5 // pred_check_branch
      %280 = sbr.rel (%p277) target = $region36
    $region35: #{conv_block.4} parent=5 // pred_region
      %s281 = ssub.s32 %s12, 1
      %s282 = smul.u32 14, %s22
      %s283 = ssub.s32 16, %s282
      %p284 = scmp.lt.s32.totalorder %s283, 14
      %s285 = scalar_select %p284, %s283, 14
      %s286 = smul.u32 4, %s285
      %s287 = smul.u32 %s286, 2
      %p288 = scmp.lt.s32.totalorder %s21, 1
      %s289 = scalar_select %p288, %s21, 1
      %p290 = scmp.lt.s32.totalorder %s282, 15
      %s291 = scalar_select %p290, %s282, 15
      %s292 = smul.addr %s291, 2
      %s293 = smul.addr %s289, 32
      %s294 = sadd.s32 %s292, %s293
      %s295 = smul.addr %s294, 4
      %s296 = scalar_lea.vmem %s0, %s295
      %p297 = pneg %p52
      %p298 = pneg %p49
      %s299 = sadd.s32 %s22, 1
      %s300 = smul.u32 %s299, 14
      %p301 = scmp.lt.s32.totalorder %s21, 1
      %s302 = scalar_select %p301, %s21, 1
      %p303 = scmp.lt.s32.totalorder %s300, 15
      %s304 = scalar_select %p303, %s300, 15
      %s305 = smul.addr %s304, 2
      %s306 = smul.addr %s302, 32
      %s307 = sadd.s32 %s305, %s306
      %s308 = smul.addr %s307, 4
      %s309 = scalar_lea.vmem %s1, %s308
      %p310 = pneg %p84
      %p311 = pneg %p81
      %s312 = sadd.s32 %s22, 1
      %s313 = smul.u32 %s312, 14
      %s314 = sadd.s32 %s313, 1
      %p315 = scmp.lt.s32.totalorder %s21, 1
      %s316 = scalar_select %p315, %s21, 1
      %p317 = scmp.lt.s32.totalorder %s314, 15
      %s318 = scalar_select %p317, %s314, 15
      %s319 = smul.addr %s318, 2
      %s320 = smul.addr %s316, 32
      %s321 = sadd.s32 %s319, %s320
      %s322 = smul.addr %s321, 4
      %s323 = scalar_lea.vmem %s2, %s322
      %p324 = pneg %p118
      %p325 = pneg %p115
      %p326 = pneg %p139
      %p327 = pneg %p136
      %p328 = pneg %p167
      %p329 = pneg %p164
      %p330 = scmp.lt.s32.totalorder %s21, 1
      %s331 = scalar_select %p330, %s21, 1
      %p332 = scmp.lt.s32.totalorder %s22, 0
      %s333 = scalar_select %p332, %s22, 0
      %s334 = smul.addr %s333, 25
      %s335 = smul.addr %s331, 25
      %s336 = sadd.s32 %s334, %s335
      %s337 = smul.addr %s336, 4
      %s338 = scalar_lea.vmem %s4, %s337
      %p339 = pneg %p195
      %p340 = pneg %p192
      %p341 = scmp.lt.s32.totalorder %s21, 1
      %s342 = scalar_select %p341, %s21, 1
      %p343 = scmp.lt.s32.totalorder %s22, 0
      %s344 = scalar_select %p343, %s22, 0
      %s345 = sadd.s32 %s344, %s342
      %s346 = smul.addr %s345, 2
      %s347 = scalar_lea.vmem %s5, %s346
      %s348 = smul.u32 14, %s22
      %s349 = ssub.s32 16, %s348
      %p350 = scmp.lt.s32.totalorder %s349, 14
      %s351 = scalar_select %p350, %s349, 14
      %s352 = smul.u32 4, %s351
      %s353 = smul.u32 %s352, 2
      %p354 = scmp.lt.s32.totalorder %s21, 1
      %s355 = scalar_select %p354, %s21, 1
      %p356 = scmp.lt.s32.totalorder %s348, 15
      %s357 = scalar_select %p356, %s348, 15
      %s358 = smul.addr %s357, 2
      %s359 = smul.addr %s355, 32
      %s360 = sadd.s32 %s358, %s359
      %s361 = smul.addr %s360, 4
      %s362 = scalar_lea.vmem %s0, %s361
      %s363 = smul.u32 14, %s22
      %s364 = ssub.s32 16, %s363
      %p365 = scmp.lt.s32.totalorder %s364, 14
      %s366 = scalar_select %p365, %s364, 14
      %s367 = smul.u32 4, %s366
      %s368 = smul.u32 %s367, 2
      %s369 = sadd.s32 %s22, 1
      %s370 = smul.u32 %s369, 14
      %p371 = scmp.lt.s32.totalorder %s21, 1
      %s372 = scalar_select %p371, %s21, 1
      %p373 = scmp.lt.s32.totalorder %s370, 15
      %s374 = scalar_select %p373, %s370, 15
      %s375 = smul.addr %s374, 2
      %s376 = smul.addr %s372, 32
      %s377 = sadd.s32 %s375, %s376
      %s378 = smul.addr %s377, 4
      %s379 = scalar_lea.vmem %s1, %s378
      %s380 = sadd.s32 %s22, 1
      %s381 = smul.u32 %s380, 14
      %s382 = sadd.s32 %s22, 1
      %s383 = smul.u32 %s382, 14
      %s384 = sadd.s32 %s383, 1
      %p385 = scmp.lt.s32.totalorder %s21, 1
      %s386 = scalar_select %p385, %s21, 1
      %p387 = scmp.lt.s32.totalorder %s384, 15
      %s388 = scalar_select %p387, %s384, 15
      %s389 = smul.addr %s388, 2
      %s390 = smul.addr %s386, 32
      %s391 = sadd.s32 %s389, %s390
      %s392 = smul.addr %s391, 4
      %s393 = scalar_lea.vmem %s2, %s392
      %s394 = sadd.s32 %s22, 1
      %s395 = smul.u32 %s394, 14
      %s396 = sadd.s32 %s395, 1
      %p397 = scmp.lt.s32.totalorder %s21, 1
      %s398 = scalar_select %p397, %s21, 1
      %p399 = scmp.lt.s32.totalorder %s22, 0
      %s400 = scalar_select %p399, %s22, 0
      %s401 = smul.addr %s400, 25
      %s402 = smul.addr %s398, 25
      %s403 = sadd.s32 %s401, %s402
      %s404 = smul.addr %s403, 4
      %s405 = scalar_lea.vmem %s4, %s404
      %p406 = scmp.lt.s32.totalorder %s21, 1
      %s407 = scalar_select %p406, %s21, 1
      %p408 = scmp.lt.s32.totalorder %s22, 0
      %s409 = scalar_select %p408, %s22, 0
      %s410 = sadd.s32 %s409, %s407
      %s411 = smul.addr %s410, 2
      %s412 = scalar_lea.vmem %s5, %s411
      %v414 = vld [vmem:[%s362] sm:$0xf]
      %v415 = vld [vmem:[%s362 + $0x4] sm:$0xf]
      %s416 = scalar_lea.vmem %s362, 8
      %v417 = vld [vmem:[%s416] sm:$0xf]
      %v418 = vld [vmem:[%s416 + $0x4] sm:$0xf]
      %s419 = scalar_lea.vmem %s362, 16
      %v420 = vld [vmem:[%s419] sm:$0xf]
      %v421 = vld [vmem:[%s419 + $0x4] sm:$0xf]
      %s422 = scalar_lea.vmem %s362, 24
      %v423 = vld [vmem:[%s422] sm:$0xf]
      %v424 = vld [vmem:[%s422 + $0x4] sm:$0xf]
      %s425 = scalar_lea.vmem %s362, 32
      %v426 = vld [vmem:[%s425] sm:$0xf]
      %v427 = vld [vmem:[%s425 + $0x4] sm:$0xf]
      %s428 = scalar_lea.vmem %s362, 40
      %v429 = vld [vmem:[%s428] sm:$0xf]
      %v430 = vld [vmem:[%s428 + $0x4] sm:$0xf]
      %s431 = scalar_lea.vmem %s362, 48
      %v432 = vld [vmem:[%s431] sm:$0xf]
      %v433 = vld [vmem:[%s431 + $0x4] sm:$0xf]
      %s434 = scalar_lea.vmem %s362, 56
      %v435 = vld [vmem:[%s434] sm:$0xf]
      %v436 = vld [vmem:[%s434 + $0x4] sm:$0xf]
      %s437 = scalar_lea.vmem %s362, 64
      %v438 = vld [vmem:[%s437] sm:$0xf]
      %v439 = vld [vmem:[%s437 + $0x4] sm:$0xf]
      %s440 = scalar_lea.vmem %s362, 72
      %v441 = vld [vmem:[%s440] sm:$0xf]
      %v442 = vld [vmem:[%s440 + $0x4] sm:$0xf]
      %s443 = scalar_lea.vmem %s362, 80
      %v444 = vld [vmem:[%s443] sm:$0xf]
      %v445 = vld [vmem:[%s443 + $0x4] sm:$0xf]
      %s446 = scalar_lea.vmem %s362, 88
      %v447 = vld [vmem:[%s446] sm:$0xf]
      %v448 = vld [vmem:[%s446 + $0x4] sm:$0xf]
      %s449 = scalar_lea.vmem %s362, 96
      %v450 = vld [vmem:[%s449] sm:$0xf]
      %v451 = vld [vmem:[%s449 + $0x4] sm:$0xf]
      %s452 = scalar_lea.vmem %s362, 104
      %v453 = vld [vmem:[%s452] sm:$0xf]
      %v454 = vld [vmem:[%s452 + $0x4] sm:$0xf]
      %v455 = vld [vmem:[%s379] sm:$0xf]
      %v456 = vld [vmem:[%s379 + $0x4] sm:$0xf]
      %v457 = vld [vmem:[%s393] sm:$0xf]
      %v458 = vld [vmem:[%s393 + $0x4] sm:$0xf]
      %v461 = vunpack.c.l.b16 %v414
      %v462 = vunpack.c.l.b16 %v415
      %v463 = vpack.c.b16 %v462, %v461
      %v466 = vunpack.c.l.b16 %v417
      %v467 = vunpack.c.l.b16 %v418
      %v468 = vpack.c.b16 %v467, %v466
      %469 = vrot.lane.b32.xlu0 %v468, 4
      %v470 = vpop.permute.xlu0 %469
      %v473 = vunpack.c.l.b16 %v420
      %v474 = vunpack.c.l.b16 %v421
      %v475 = vpack.c.b16 %v474, %v473
      %476 = vrot.lane.b32.xlu0 %v475, 8
      %v477 = vpop.permute.xlu0 %476
      %vm478 = vcmask 31744
      %v481 = vsel %vm478, %v463, %v470
      %vm482 = vcmask 64512
      %v484 = vsel %vm482, %v481, %v477
      %v485 = vshrl.u32 %v484, 16
      %v487 = vshll.u32 %v484, 16
      %v489 = vrot.slane %v487, 1
      %v490 = vor.u32 %v485, %v489
      %491 = vrot.lane.b32.xlu0 %v490, 12
      %v492 = vpop.permute.xlu0 %491
      %v494 = vrot.slane %v484, 1
      %495 = vrot.lane.b32.xlu0 %v494, 24
      %v496 = vpop.permute.xlu0 %495
      %vm497 = vcmask 97280
      %v499 = vsel %vm497, %v484, %v492
      %vm500 = vcmask 195584
      %v502 = vsel %vm500, %v499, %v496
      %503 = vrot.lane.b32.xlu0 %v475, 4
      %v504 = vpop.permute.xlu0 %503
      %v507 = vunpack.c.l.b16 %v423
      %v508 = vunpack.c.l.b16 %v424
      %v509 = vpack.c.b16 %v508, %v507
      %510 = vrot.lane.b32.xlu0 %v509, 8
      %v511 = vpop.permute.xlu0 %510
      %v514 = vsel %vm478, %v468, %v504
      %v516 = vsel %vm482, %v514, %v511
      %v517 = vshrl.u32 %v516, 16
      %v519 = vshll.u32 %v516, 16
      %v521 = vrot.slane %v519, 1
      %v522 = vor.u32 %v517, %v521
      %523 = vrot.lane.b32.xlu0 %v522, 12
      %v524 = vpop.permute.xlu0 %523
      %v526 = vrot.slane %v516, 1
      %527 = vrot.lane.b32.xlu0 %v526, 24
      %v528 = vpop.permute.xlu0 %527
      %v530 = vsel %vm497, %v516, %v524
      %v532 = vsel %vm500, %v530, %v528
      %533 = vrot.lane.b32.xlu0 %v509, 4
      %v534 = vpop.permute.xlu0 %533
      %v537 = vunpack.c.l.b16 %v426
      %v538 = vunpack.c.l.b16 %v427
      %v539 = vpack.c.b16 %v538, %v537
      %540 = vrot.lane.b32.xlu0 %v539, 8
      %v541 = vpop.permute.xlu0 %540
      %v544 = vsel %vm478, %v475, %v534
      %v546 = vsel %vm482, %v544, %v541
      %v547 = vshrl.u32 %v546, 16
      %v549 = vshll.u32 %v546, 16
      %v551 = vrot.slane %v549, 1
      %v552 = vor.u32 %v547, %v551
      %553 = vrot.lane.b32.xlu0 %v552, 12
      %v554 = vpop.permute.xlu0 %553
      %v556 = vrot.slane %v546, 1
      %557 = vrot.lane.b32.xlu0 %v556, 24
      %v558 = vpop.permute.xlu0 %557
      %v560 = vsel %vm497, %v546, %v554
      %v562 = vsel %vm500, %v560, %v558
      %563 = vrot.lane.b32.xlu0 %v539, 4
      %v564 = vpop.permute.xlu0 %563
      %v567 = vunpack.c.l.b16 %v429
      %v568 = vunpack.c.l.b16 %v430
      %v569 = vpack.c.b16 %v568, %v567
      %570 = vrot.lane.b32.xlu0 %v569, 8
      %v571 = vpop.permute.xlu0 %570
      %v574 = vsel %vm478, %v509, %v564
      %v576 = vsel %vm482, %v574, %v571
      %v577 = vshrl.u32 %v576, 16
      %v579 = vshll.u32 %v576, 16
      %v581 = vrot.slane %v579, 1
      %v582 = vor.u32 %v577, %v581
      %583 = vrot.lane.b32.xlu0 %v582, 12
      %v584 = vpop.permute.xlu0 %583
      %v586 = vrot.slane %v576, 1
      %587 = vrot.lane.b32.xlu0 %v586, 24
      %v588 = vpop.permute.xlu0 %587
      %v590 = vsel %vm497, %v576, %v584
      %v592 = vsel %vm500, %v590, %v588
      %593 = vrot.lane.b32.xlu0 %v569, 4
      %v594 = vpop.permute.xlu0 %593
      %v597 = vunpack.c.l.b16 %v432
      %v598 = vunpack.c.l.b16 %v433
      %v599 = vpack.c.b16 %v598, %v597
      %600 = vrot.lane.b32.xlu0 %v599, 8
      %v601 = vpop.permute.xlu0 %600
      %v604 = vsel %vm478, %v539, %v594
      %v606 = vsel %vm482, %v604, %v601
      %v607 = vshrl.u32 %v606, 16
      %v609 = vshll.u32 %v606, 16
      %v611 = vrot.slane %v609, 1
      %v612 = vor.u32 %v607, %v611
      %613 = vrot.lane.b32.xlu0 %v612, 12
      %v614 = vpop.permute.xlu0 %613
      %v616 = vrot.slane %v606, 1
      %617 = vrot.lane.b32.xlu0 %v616, 24
      %v618 = vpop.permute.xlu0 %617
      %v620 = vsel %vm497, %v606, %v614
      %v622 = vsel %vm500, %v620, %v618
      %623 = vrot.lane.b32.xlu0 %v599, 4
      %v624 = vpop.permute.xlu0 %623
      %v627 = vunpack.c.l.b16 %v435
      %v628 = vunpack.c.l.b16 %v436
      %v629 = vpack.c.b16 %v628, %v627
      %630 = vrot.lane.b32.xlu0 %v629, 8
      %v631 = vpop.permute.xlu0 %630
      %v634 = vsel %vm478, %v569, %v624
      %v636 = vsel %vm482, %v634, %v631
      %v637 = vshrl.u32 %v636, 16
      %v639 = vshll.u32 %v636, 16
      %v641 = vrot.slane %v639, 1
      %v642 = vor.u32 %v637, %v641
      %643 = vrot.lane.b32.xlu0 %v642, 12
      %v644 = vpop.permute.xlu0 %643
      %v646 = vrot.slane %v636, 1
      %647 = vrot.lane.b32.xlu0 %v646, 24
      %v648 = vpop.permute.xlu0 %647
      %v650 = vsel %vm497, %v636, %v644
      %v652 = vsel %vm500, %v650, %v648
      %653 = vrot.lane.b32.xlu0 %v629, 4
      %v654 = vpop.permute.xlu0 %653
      %v657 = vunpack.c.l.b16 %v438
      %v658 = vunpack.c.l.b16 %v439
      %v659 = vpack.c.b16 %v658, %v657
      %660 = vrot.lane.b32.xlu0 %v659, 8
      %v661 = vpop.permute.xlu0 %660
      %v664 = vsel %vm478, %v599, %v654
      %v666 = vsel %vm482, %v664, %v661
      %v667 = vshrl.u32 %v666, 16
      %v669 = vshll.u32 %v666, 16
      %v671 = vrot.slane %v669, 1
      %v672 = vor.u32 %v667, %v671
      %673 = vrot.lane.b32.xlu0 %v672, 12
      %v674 = vpop.permute.xlu0 %673
      %v676 = vrot.slane %v666, 1
      %677 = vrot.lane.b32.xlu0 %v676, 24
      %v678 = vpop.permute.xlu0 %677
      %v680 = vsel %vm497, %v666, %v674
      %v682 = vsel %vm500, %v680, %v678
      %683 = vrot.lane.b32.xlu0 %v659, 4
      %v684 = vpop.permute.xlu0 %683
      %v687 = vunpack.c.l.b16 %v441
      %v688 = vunpack.c.l.b16 %v442
      %v689 = vpack.c.b16 %v688, %v687
      %690 = vrot.lane.b32.xlu0 %v689, 8
      %v691 = vpop.permute.xlu0 %690
      %v694 = vsel %vm478, %v629, %v684
      %v696 = vsel %vm482, %v694, %v691
      %v697 = vshrl.u32 %v696, 16
      %v699 = vshll.u32 %v696, 16
      %v701 = vrot.slane %v699, 1
      %v702 = vor.u32 %v697, %v701
      %703 = vrot.lane.b32.xlu0 %v702, 12
      %v704 = vpop.permute.xlu0 %703
      %v706 = vrot.slane %v696, 1
      %707 = vrot.lane.b32.xlu0 %v706, 24
      %v708 = vpop.permute.xlu0 %707
      %v710 = vsel %vm497, %v696, %v704
      %v712 = vsel %vm500, %v710, %v708
      %713 = vrot.lane.b32.xlu0 %v689, 4
      %v714 = vpop.permute.xlu0 %713
      %v717 = vunpack.c.l.b16 %v444
      %v718 = vunpack.c.l.b16 %v445
      %v719 = vpack.c.b16 %v718, %v717
      %720 = vrot.lane.b32.xlu0 %v719, 8
      %v721 = vpop.permute.xlu0 %720
      %v724 = vsel %vm478, %v659, %v714
      %v726 = vsel %vm482, %v724, %v721
      %v727 = vshrl.u32 %v726, 16
      %v729 = vshll.u32 %v726, 16
      %v731 = vrot.slane %v729, 1
      %v732 = vor.u32 %v727, %v731
      %733 = vrot.lane.b32.xlu0 %v732, 12
      %v734 = vpop.permute.xlu0 %733
      %v736 = vrot.slane %v726, 1
      %737 = vrot.lane.b32.xlu0 %v736, 24
      %v738 = vpop.permute.xlu0 %737
      %v740 = vsel %vm497, %v726, %v734
      %v742 = vsel %vm500, %v740, %v738
      %743 = vrot.lane.b32.xlu0 %v719, 4
      %v744 = vpop.permute.xlu0 %743
      %v747 = vunpack.c.l.b16 %v447
      %v748 = vunpack.c.l.b16 %v448
      %v749 = vpack.c.b16 %v748, %v747
      %750 = vrot.lane.b32.xlu0 %v749, 8
      %v751 = vpop.permute.xlu0 %750
      %v754 = vsel %vm478, %v689, %v744
      %v756 = vsel %vm482, %v754, %v751
      %v757 = vshrl.u32 %v756, 16
      %v759 = vshll.u32 %v756, 16
      %v761 = vrot.slane %v759, 1
      %v762 = vor.u32 %v757, %v761
      %763 = vrot.lane.b32.xlu0 %v762, 12
      %v764 = vpop.permute.xlu0 %763
      %v766 = vrot.slane %v756, 1
      %767 = vrot.lane.b32.xlu0 %v766, 24
      %v768 = vpop.permute.xlu0 %767
      %v770 = vsel %vm497, %v756, %v764
      %v772 = vsel %vm500, %v770, %v768
      %773 = vrot.lane.b32.xlu0 %v749, 4
      %v774 = vpop.permute.xlu0 %773
      %v777 = vunpack.c.l.b16 %v450
      %v778 = vunpack.c.l.b16 %v451
      %v779 = vpack.c.b16 %v778, %v777
      %780 = vrot.lane.b32.xlu0 %v779, 8
      %v781 = vpop.permute.xlu0 %780
      %v784 = vsel %vm478, %v719, %v774
      %v786 = vsel %vm482, %v784, %v781
      %v787 = vshrl.u32 %v786, 16
      %v789 = vshll.u32 %v786, 16
      %v791 = vrot.slane %v789, 1
      %v792 = vor.u32 %v787, %v791
      %793 = vrot.lane.b32.xlu0 %v792, 12
      %v794 = vpop.permute.xlu0 %793
      %v796 = vrot.slane %v786, 1
      %797 = vrot.lane.b32.xlu0 %v796, 24
      %v798 = vpop.permute.xlu0 %797
      %v800 = vsel %vm497, %v786, %v794
      %v802 = vsel %vm500, %v800, %v798
      %803 = vrot.lane.b32.xlu0 %v779, 4
      %v804 = vpop.permute.xlu0 %803
      %v807 = vunpack.c.l.b16 %v453
      %v808 = vunpack.c.l.b16 %v454
      %v809 = vpack.c.b16 %v808, %v807
      %810 = vrot.lane.b32.xlu0 %v809, 8
      %v811 = vpop.permute.xlu0 %810
      %v814 = vsel %vm478, %v749, %v804
      %v816 = vsel %vm482, %v814, %v811
      %v817 = vshrl.u32 %v816, 16
      %v819 = vshll.u32 %v816, 16
      %v821 = vrot.slane %v819, 1
      %v822 = vor.u32 %v817, %v821
      %823 = vrot.lane.b32.xlu0 %v822, 12
      %v824 = vpop.permute.xlu0 %823
      %v826 = vrot.slane %v816, 1
      %827 = vrot.lane.b32.xlu0 %v826, 24
      %v828 = vpop.permute.xlu0 %827
      %v830 = vsel %vm497, %v816, %v824
      %v832 = vsel %vm500, %v830, %v828
      %833 = vrot.lane.b32.xlu0 %v809, 4
      %v834 = vpop.permute.xlu0 %833
      %v837 = vunpack.c.l.b16 %v455
      %v838 = vunpack.c.l.b16 %v456
      %v839 = vpack.c.b16 %v838, %v837
      %840 = vrot.lane.b32.xlu0 %v839, 8
      %v841 = vpop.permute.xlu0 %840
      %v844 = vsel %vm478, %v779, %v834
      %v846 = vsel %vm482, %v844, %v841
      %v847 = vshrl.u32 %v846, 16
      %v849 = vshll.u32 %v846, 16
      %v851 = vrot.slane %v849, 1
      %v852 = vor.u32 %v847, %v851
      %853 = vrot.lane.b32.xlu0 %v852, 12
      %v854 = vpop.permute.xlu0 %853
      %v856 = vrot.slane %v846, 1
      %857 = vrot.lane.b32.xlu0 %v856, 24
      %v858 = vpop.permute.xlu0 %857
      %v860 = vsel %vm497, %v846, %v854
      %v862 = vsel %vm500, %v860, %v858
      %863 = vrot.lane.b32.xlu0 %v839, 4
      %v864 = vpop.permute.xlu0 %863
      %v867 = vunpack.c.l.b16 %v457
      %v868 = vunpack.c.l.b16 %v458
      %v869 = vpack.c.b16 %v868, %v867
      %870 = vrot.lane.b32.xlu0 %v869, 8
      %v871 = vpop.permute.xlu0 %870
      %v874 = vsel %vm478, %v809, %v864
      %v876 = vsel %vm482, %v874, %v871
      %v877 = vshrl.u32 %v876, 16
      %v879 = vshll.u32 %v876, 16
      %v881 = vrot.slane %v879, 1
      %v882 = vor.u32 %v877, %v881
      %883 = vrot.lane.b32.xlu0 %v882, 12
      %v884 = vpop.permute.xlu0 %883
      %v886 = vrot.slane %v876, 1
      %887 = vrot.lane.b32.xlu0 %v886, 24
      %v888 = vpop.permute.xlu0 %887
      %v890 = vsel %vm497, %v876, %v884
      %v892 = vsel %vm500, %v890, %v888
      %v894 = vrot.slane %v532, 1
      %v896 = vrot.slane %v562, 2
      %v898 = vrot.slane %v592, 3
      %v900 = vrot.slane %v622, 4
      %v902 = vrot.slane %v652, 5
      %v904 = vrot.slane %v682, 6
      %v906 = vrot.slane %v712, 7
      %v908 = vrot.slane %v772, 1
      %v910 = vrot.slane %v802, 2
      %v912 = vrot.slane %v832, 3
      %v914 = vrot.slane %v862, 4
      %v916 = vrot.slane %v892, 5
      %vm917 = vcmask 1046528
      %v919 = vsel %vm917, %v502, %v894
      %vm920 = vcmask 1045504
      %v922 = vsel %vm920, %v894, %v896
      %vm923 = vcmask 1044480
      %v925 = vsel %vm923, %v896, %v898
      %vm926 = vcmask 1043456
      %v928 = vsel %vm926, %v898, %v900
      %vm929 = vcmask 1042432
      %v931 = vsel %vm929, %v900, %v902
      %vm932 = vcmask 1041408
      %v934 = vsel %vm932, %v902, %v904
      %vm935 = vcmask 1040384
      %v937 = vsel %vm935, %v904, %v906
      %v939 = vsel %vm917, %v742, %v908
      %v941 = vsel %vm920, %v908, %v910
      %v943 = vsel %vm923, %v910, %v912
      %v945 = vsel %vm926, %v912, %v914
      %v947 = vsel %vm929, %v914, %v916
      %v948 = vld [vmem:[%s3] sm:$0xf]
      %v949 = vld [vmem:[%s3 + $0x4] sm:$0xf]
      %v950 = vld [vmem:[%s3 + $0x8] sm:$0xf]
      %v951 = vld [vmem:[%s3 + $0xc] sm:$0xf]
      %v952 = vld [vmem:[%s3 + $0x10] sm:$0x3]
      %v958 = vunpack.c.l.b16 %v948
      %v959 = vunpack.c.l.b16 %v949
      %v960 = vunpack.c.l.b16 %v950
      %v961 = vunpack.c.l.b16 %v951
      %v962 = vunpack.c.l.b16 %v952
      %v963 = vpack.c.b16 %v959, %v958
      %v964 = vpack.c.b16 %v961, %v960
      %v965 = vpack.c.b16 %v962, %v962
      %vm968 = vcmask 293888
      %v969 = vsel %vm968, %v919, 0
      %v971 = vsel %vm968, %v922, 0
      %v973 = vsel %vm968, %v925, 0
      %v975 = vsel %vm968, %v928, 0
      %v977 = vsel %vm968, %v931, 0
      %v979 = vsel %vm968, %v934, 0
      %v981 = vsel %vm968, %v937, 0
      %v983 = vsel %vm968, %v939, 0
      %v985 = vsel %vm968, %v941, 0
      %v987 = vsel %vm968, %v943, 0
      %v989 = vsel %vm968, %v945, 0
      %v991 = vsel %vm968, %v947, 0
      %v993 = vsel %vm968, %v916, 0
      %v996 = vsel %vm932, %v965, 0
      %998 = vmatpush.bf16.msra.mxu0 0
      %999 = vmatpush.bf16.msra.mxu0 0
      %1000 = vmatpush.bf16.msra.mxu0 0
      %1001 = vmatpush.bf16.msra.mxu0 0
      %1002 = vmatpush.bf16.msra.mxu0 0
      %1003 = vmatpush.bf16.msra.mxu0 %v996
      %1004 = vmatpush.bf16.msra.mxu0 %v964
      %1005 = vmatpush.bf16.msra.mxu0 %v963
      %1006 = vmatmul.bf16.gmra.mxu0 %v969
      %v1007 = vpop.f32.mrf.mxu0
      %v1008 = vadd.f32 0.0, %v1007
      %v1009 = vpop.f32.mrf.mxu0
      %v1010 = vadd.f32 0.0, %v1009
      %1011 = vmatmul.bf16.gmra.mxu0 %v971
      %v1012 = vpop.f32.mrf.mxu0
      %v1013 = vadd.f32 0.0, %v1012
      %v1014 = vpop.f32.mrf.mxu0
      %v1015 = vadd.f32 0.0, %v1014
      %1016 = vmatmul.bf16.gmra.mxu0 %v973
      %v1017 = vpop.f32.mrf.mxu0
      %v1018 = vadd.f32 0.0, %v1017
      %v1019 = vpop.f32.mrf.mxu0
      %v1020 = vadd.f32 0.0, %v1019
      %1021 = vmatmul.bf16.gmra.mxu0 %v975
      %v1022 = vpop.f32.mrf.mxu0
      %v1023 = vadd.f32 0.0, %v1022
      %v1024 = vpop.f32.mrf.mxu0
      %v1025 = vadd.f32 0.0, %v1024
      %1026 = vmatmul.bf16.gmra.mxu0 %v977
      %v1027 = vpop.f32.mrf.mxu0
      %v1028 = vadd.f32 0.0, %v1027
      %v1029 = vpop.f32.mrf.mxu0
      %v1030 = vadd.f32 0.0, %v1029
      %1031 = vmatmul.bf16.gmra.mxu0 %v979
      %v1032 = vpop.f32.mrf.mxu0
      %v1033 = vadd.f32 0.0, %v1032
      %v1034 = vpop.f32.mrf.mxu0
      %v1035 = vadd.f32 0.0, %v1034
      %1036 = vmatmul.bf16.gmra.mxu0 %v981
      %v1037 = vpop.f32.mrf.mxu0
      %v1038 = vadd.f32 0.0, %v1037
      %v1039 = vpop.f32.mrf.mxu0
      %v1040 = vadd.f32 0.0, %v1039
      %1041 = vmatmul.bf16.gmra.mxu0 %v983
      %v1042 = vpop.f32.mrf.mxu0
      %v1043 = vadd.f32 0.0, %v1042
      %v1044 = vpop.f32.mrf.mxu0
      %v1045 = vadd.f32 0.0, %v1044
      %1046 = vmatmul.bf16.gmra.mxu0 %v985
      %v1047 = vpop.f32.mrf.mxu0
      %v1048 = vadd.f32 0.0, %v1047
      %v1049 = vpop.f32.mrf.mxu0
      %v1050 = vadd.f32 0.0, %v1049
      %1051 = vmatmul.bf16.gmra.mxu0 %v987
      %v1052 = vpop.f32.mrf.mxu0
      %v1053 = vadd.f32 0.0, %v1052
      %v1054 = vpop.f32.mrf.mxu0
      %v1055 = vadd.f32 0.0, %v1054
      %1056 = vmatmul.bf16.gmra.mxu0 %v989
      %v1057 = vpop.f32.mrf.mxu0
      %v1058 = vadd.f32 0.0, %v1057
      %v1059 = vpop.f32.mrf.mxu0
      %v1060 = vadd.f32 0.0, %v1059
      %1061 = vmatmul.bf16.gmra.mxu0 %v991
      %v1062 = vpop.f32.mrf.mxu0
      %v1063 = vadd.f32 0.0, %v1062
      %v1064 = vpop.f32.mrf.mxu0
      %v1065 = vadd.f32 0.0, %v1064
      %1066 = vmatmul.bf16.gmra.mxu0 %v993
      %v1067 = vpop.f32.mrf.mxu0
      %v1068 = vadd.f32 0.0, %v1067
      %v1069 = vpop.f32.mrf.mxu0
      %1070 = vdwg.mxu0
      %v1071 = vpack.c.bf16 %v1008, %v1008
      %v1072 = vpack.c.bf16 %v1010, %v1010
      %v1073 = vpack.c.bf16 %v1013, %v1013
      %v1074 = vpack.c.bf16 %v1015, %v1015
      %v1075 = vpack.c.bf16 %v1018, %v1018
      %v1076 = vpack.c.bf16 %v1020, %v1020
      %v1077 = vpack.c.bf16 %v1023, %v1023
      %v1078 = vpack.c.bf16 %v1025, %v1025
      %v1079 = vpack.c.bf16 %v1028, %v1028
      %v1080 = vpack.c.bf16 %v1030, %v1030
      %v1081 = vpack.c.bf16 %v1033, %v1033
      %v1082 = vpack.c.bf16 %v1035, %v1035
      %v1083 = vpack.c.bf16 %v1038, %v1038
      %v1084 = vpack.c.bf16 %v1040, %v1040
      %v1085 = vpack.c.bf16 %v1043, %v1043
      %v1086 = vpack.c.bf16 %v1045, %v1045
      %v1087 = vpack.c.bf16 %v1048, %v1048
      %v1088 = vpack.c.bf16 %v1050, %v1050
      %v1089 = vpack.c.bf16 %v1053, %v1053
      %v1090 = vpack.c.bf16 %v1055, %v1055
      %v1091 = vpack.c.bf16 %v1058, %v1058
      %v1092 = vpack.c.bf16 %v1060, %v1060
      %v1093 = vpack.c.bf16 %v1063, %v1063
      %v1094 = vpack.c.bf16 %v1065, %v1065
      %v1095 = vpack.c.bf16 %v1068, %v1068
      %vm1096 = vcmask 60416
      %1097 = vst.msk [vmem:[%s405] sm:$0xf] %vm1096, %v1071
      %1098 = vst.msk [vmem:[%s405 + $0x4] sm:$0xf] %vm1096, %v1072
      %1099 = vst.msk [vmem:[%s405 + $0x8] sm:$0xf] %vm1096, %v1073
      %1100 = vst.msk [vmem:[%s405 + $0xc] sm:$0xf] %vm1096, %v1074
      %1101 = vst.msk [vmem:[%s405 + $0x10] sm:$0xf] %vm1096, %v1075
      %1102 = vst.msk [vmem:[%s405 + $0x14] sm:$0xf] %vm1096, %v1076
      %1103 = vst.msk [vmem:[%s405 + $0x18] sm:$0xf] %vm1096, %v1077
      %1104 = vst.msk [vmem:[%s405 + $0x1c] sm:$0xf] %vm1096, %v1078
      %1105 = vst.msk [vmem:[%s405 + $0x20] sm:$0xf] %vm1096, %v1079
      %1106 = vst.msk [vmem:[%s405 + $0x24] sm:$0xf] %vm1096, %v1080
      %1107 = vst.msk [vmem:[%s405 + $0x28] sm:$0xf] %vm1096, %v1081
      %1108 = vst.msk [vmem:[%s405 + $0x2c] sm:$0xf] %vm1096, %v1082
      %1109 = vst.msk [vmem:[%s405 + $0x30] sm:$0xf] %vm1096, %v1083
      %1110 = vst.msk [vmem:[%s405 + $0x34] sm:$0xf] %vm1096, %v1084
      %1111 = vst.msk [vmem:[%s405 + $0x38] sm:$0xf] %vm1096, %v1085
      %1112 = vst.msk [vmem:[%s405 + $0x3c] sm:$0xf] %vm1096, %v1086
      %1113 = vst.msk [vmem:[%s405 + $0x40] sm:$0xf] %vm1096, %v1087
      %1114 = vst.msk [vmem:[%s405 + $0x44] sm:$0xf] %vm1096, %v1088
      %1115 = vst.msk [vmem:[%s405 + $0x48] sm:$0xf] %vm1096, %v1089
      %1116 = vst.msk [vmem:[%s405 + $0x4c] sm:$0xf] %vm1096, %v1090
      %1117 = vst.msk [vmem:[%s405 + $0x50] sm:$0xf] %vm1096, %v1091
      %1118 = vst.msk [vmem:[%s405 + $0x54] sm:$0xf] %vm1096, %v1092
      %1119 = vst.msk [vmem:[%s405 + $0x58] sm:$0xf] %vm1096, %v1093
      %1120 = vst.msk [vmem:[%s405 + $0x5c] sm:$0xf] %vm1096, %v1094
      %vm1121 = vcmask 58368
      %1122 = vst.msk [vmem:[%s405 + $0x60] sm:$0x3] %vm1121, %v1095
      %v1123 = vsel %vm482, %v1008, 0.0
      %v1124 = vsel %vm482, %v1010, 0.0
      %v1125 = vadd.f32 %v1123, %v1124
      %v1126 = vsel %vm482, %v1013, 0.0
      %v1127 = vadd.f32 %v1125, %v1126
      %v1128 = vsel %vm482, %v1015, 0.0
      %v1129 = vadd.f32 %v1127, %v1128
      %v1130 = vsel %vm482, %v1018, 0.0
      %v1131 = vadd.f32 %v1129, %v1130
      %v1132 = vsel %vm482, %v1020, 0.0
      %v1133 = vadd.f32 %v1131, %v1132
      %v1134 = vsel %vm482, %v1023, 0.0
      %v1135 = vadd.f32 %v1133, %v1134
      %v1136 = vsel %vm482, %v1025, 0.0
      %v1137 = vadd.f32 %v1135, %v1136
      %v1138 = vsel %vm482, %v1028, 0.0
      %v1139 = vadd.f32 %v1137, %v1138
      %v1140 = vsel %vm482, %v1030, 0.0
      %v1141 = vadd.f32 %v1139, %v1140
      %v1142 = vsel %vm482, %v1033, 0.0
      %v1143 = vadd.f32 %v1141, %v1142
      %v1144 = vsel %vm482, %v1035, 0.0
      %v1145 = vadd.f32 %v1143, %v1144
      %v1146 = vsel %vm482, %v1038, 0.0
      %v1147 = vadd.f32 %v1145, %v1146
      %v1148 = vsel %vm482, %v1040, 0.0
      %v1149 = vadd.f32 %v1147, %v1148
      %v1150 = vsel %vm482, %v1043, 0.0
      %v1151 = vadd.f32 %v1149, %v1150
      %v1152 = vsel %vm482, %v1045, 0.0
      %v1153 = vadd.f32 %v1151, %v1152
      %v1154 = vsel %vm482, %v1048, 0.0
      %v1155 = vadd.f32 %v1153, %v1154
      %v1156 = vsel %vm482, %v1050, 0.0
      %v1157 = vadd.f32 %v1155, %v1156
      %v1158 = vsel %vm482, %v1053, 0.0
      %v1159 = vadd.f32 %v1157, %v1158
      %v1160 = vsel %vm482, %v1055, 0.0
      %v1161 = vadd.f32 %v1159, %v1160
      %v1162 = vsel %vm482, %v1058, 0.0
      %v1163 = vadd.f32 %v1161, %v1162
      %v1164 = vsel %vm482, %v1060, 0.0
      %v1165 = vadd.f32 %v1163, %v1164
      %v1166 = vsel %vm482, %v1063, 0.0
      %v1167 = vadd.f32 %v1165, %v1166
      %v1168 = vsel %vm482, %v1065, 0.0
      %v1169 = vadd.f32 %v1167, %v1168
      %v1170 = vsel %vm1096, %v1068, 0.0
      %v1171 = vadd.f32 %v1169, %v1170
      %v1172 = vrot.slane %v1171, 4
      %v1173 = vadd.f32 %v1171, %v1172
      %v1174 = vrot.slane %v1173, 2
      %v1175 = vadd.f32 %v1173, %v1174
      %v1176 = vrot.slane %v1175, 1
      %v1177 = vadd.f32 %v1175, %v1176
      %v1178 = vmul.f32 %v1008, %v1008
      %v1179 = vmul.f32 %v1010, %v1010
      %v1180 = vmul.f32 %v1013, %v1013
      %v1181 = vmul.f32 %v1015, %v1015
      %v1182 = vmul.f32 %v1018, %v1018
      %v1183 = vmul.f32 %v1020, %v1020
      %v1184 = vmul.f32 %v1023, %v1023
      %v1185 = vmul.f32 %v1025, %v1025
      %v1186 = vmul.f32 %v1028, %v1028
      %v1187 = vmul.f32 %v1030, %v1030
      %v1188 = vmul.f32 %v1033, %v1033
      %v1189 = vmul.f32 %v1035, %v1035
      %v1190 = vmul.f32 %v1038, %v1038
      %v1191 = vmul.f32 %v1040, %v1040
      %v1192 = vmul.f32 %v1043, %v1043
      %v1193 = vmul.f32 %v1045, %v1045
      %v1194 = vmul.f32 %v1048, %v1048
      %v1195 = vmul.f32 %v1050, %v1050
      %v1196 = vmul.f32 %v1053, %v1053
      %v1197 = vmul.f32 %v1055, %v1055
      %v1198 = vmul.f32 %v1058, %v1058
      %v1199 = vmul.f32 %v1060, %v1060
      %v1200 = vmul.f32 %v1063, %v1063
      %v1201 = vmul.f32 %v1065, %v1065
      %v1202 = vmul.f32 %v1068, %v1068
      %v1203 = vsel %vm482, %v1178, 0.0
      %v1204 = vsel %vm482, %v1179, 0.0
      %v1205 = vadd.f32 %v1203, %v1204
      %v1206 = vsel %vm482, %v1180, 0.0
      %v1207 = vadd.f32 %v1205, %v1206
      %v1208 = vsel %vm482, %v1181, 0.0
      %v1209 = vadd.f32 %v1207, %v1208
      %v1210 = vsel %vm482, %v1182, 0.0
      %v1211 = vadd.f32 %v1209, %v1210
      %v1212 = vsel %vm482, %v1183, 0.0
      %v1213 = vadd.f32 %v1211, %v1212
      %v1214 = vsel %vm482, %v1184, 0.0
      %v1215 = vadd.f32 %v1213, %v1214
      %v1216 = vsel %vm482, %v1185, 0.0
      %v1217 = vadd.f32 %v1215, %v1216
      %v1218 = vsel %vm482, %v1186, 0.0
      %v1219 = vadd.f32 %v1217, %v1218
      %v1220 = vsel %vm482, %v1187, 0.0
      %v1221 = vadd.f32 %v1219, %v1220
      %v1222 = vsel %vm482, %v1188, 0.0
      %v1223 = vadd.f32 %v1221, %v1222
      %v1224 = vsel %vm482, %v1189, 0.0
      %v1225 = vadd.f32 %v1223, %v1224
      %v1226 = vsel %vm482, %v1190, 0.0
      %v1227 = vadd.f32 %v1225, %v1226
      %v1228 = vsel %vm482, %v1191, 0.0
      %v1229 = vadd.f32 %v1227, %v1228
      %v1230 = vsel %vm482, %v1192, 0.0
      %v1231 = vadd.f32 %v1229, %v1230
      %v1232 = vsel %vm482, %v1193, 0.0
      %v1233 = vadd.f32 %v1231, %v1232
      %v1234 = vsel %vm482, %v1194, 0.0
      %v1235 = vadd.f32 %v1233, %v1234
      %v1236 = vsel %vm482, %v1195, 0.0
      %v1237 = vadd.f32 %v1235, %v1236
      %v1238 = vsel %vm482, %v1196, 0.0
      %v1239 = vadd.f32 %v1237, %v1238
      %v1240 = vsel %vm482, %v1197, 0.0
      %v1241 = vadd.f32 %v1239, %v1240
      %v1242 = vsel %vm482, %v1198, 0.0
      %v1243 = vadd.f32 %v1241, %v1242
      %v1244 = vsel %vm482, %v1199, 0.0
      %v1245 = vadd.f32 %v1243, %v1244
      %v1246 = vsel %vm482, %v1200, 0.0
      %v1247 = vadd.f32 %v1245, %v1246
      %v1248 = vsel %vm482, %v1201, 0.0
      %v1249 = vadd.f32 %v1247, %v1248
      %v1250 = vsel %vm1096, %v1202, 0.0
      %v1251 = vadd.f32 %v1249, %v1250
      %v1252 = vrot.slane %v1251, 4
      %v1253 = vadd.f32 %v1251, %v1252
      %v1254 = vrot.slane %v1253, 2
      %v1255 = vadd.f32 %v1253, %v1254
      %v1256 = vrot.slane %v1255, 1
      %v1257 = vadd.f32 %v1255, %v1256
      %v1258 = vsel %vm935, %v1177, %v1257
      %1259 = vst.msk [vmem:[%s412] sm:$0x3] %vm1121, %v1258
      %p1260 = scmp.lt.s32.totalorder %s21, 1
      %s1261 = scalar_select %p1260, %s21, 1
      %p1262 = scmp.lt.s32.totalorder %s22, 0
      %s1263 = scalar_select %p1262, %s22, 0
      %s1264 = smul.addr %s1263, 25
      %s1265 = smul.addr %s1261, 25
      %s1266 = sadd.s32 %s1264, %s1265
      %s1267 = smul.addr %s1266, 4
      %s1268 = scalar_lea.vmem %s4, %s1267
      %p1269 = scmp.lt.s32.totalorder %s21, 1
      %s1270 = scalar_select %p1269, %s21, 1
      %p1271 = scmp.lt.s32.totalorder %s22, 0
      %s1272 = scalar_select %p1271, %s22, 0
      %s1273 = sadd.s32 %s1272, %s1270
      %s1274 = smul.addr %s1273, 2
      %s1275 = scalar_lea.vmem %s5, %s1274
      // Predicated region
      $region37: #{conv_block.4} parent=35 // pred_check
        %p1276 = pneg %p164
      $region38: #{conv_block.4} parent=35 // pred_check_branch
        %1278 = sbr.rel (%p1276) target = $region40
      $region39: #{conv_block.4} parent=35 // pred_region
        _
      $region40: #{conv_block.4} parent=35 // pred_fallthru
        _
      // Predicated region
      $region41: #{conv_block.4} parent=35 // pred_check
        %p1279 = pneg %p192
      $region42: #{conv_block.4} parent=35 // pred_check_branch
        %1281 = sbr.rel (%p1279) target = $region44
      $region43: #{conv_block.4} parent=35 // pred_region
        _
      $region44: #{conv_block.4} parent=35 // pred_fallthru
        _
    $region36: #{conv_block.4} parent=5 // pred_fallthru
      _
    %p1282 = scmp.le.s32.totalorder 2, %s12
    // Predicated region
    $region45: #{conv_block.4} parent=5 // pred_check
      %p1283 = pneg %p1282
    $region46: #{conv_block.4} parent=5 // pred_check_branch
      %1285 = sbr.rel (%p1283) target = $region48
    $region47: #{conv_block.4} parent=5 // pred_region
      %s1286 = ssub.s32 %s12, 2
      // Predicated region
      $region49: #{conv_block.4} parent=47 // pred_check
        %p1287 = pneg %p170
      $region50: #{conv_block.4} parent=47 // pred_check_branch
        %1289 = sbr.rel (%p1287) target = $region52
      $region51: #{conv_block.4} parent=47 // pred_region
        %p1290 = scmp.lt.s32.totalorder %s23, 1
        %s1291 = scalar_select %p1290, %s23, 1
        %p1292 = scmp.lt.s32.totalorder %s24, 0
        %s1293 = scalar_select %p1292, %s24, 0
        %s1294 = smul.addr %s1293, 25
        %s1295 = smul.addr %s1291, 25
        %s1296 = sadd.s32 %s1294, %s1295
        %s1297 = smul.addr %s1296, 4
        %s1298 = scalar_lea.vmem %s4, %s1297
      $region52: #{conv_block.4} parent=47 // pred_fallthru
        _
      // Predicated region
      $region53: #{conv_block.4} parent=47 // pred_check
        %p1299 = pneg %p198
      $region54: #{conv_block.4} parent=47 // pred_check_branch
        %1301 = sbr.rel (%p1299) target = $region56
      $region55: #{conv_block.4} parent=47 // pred_region
        %p1302 = scmp.lt.s32.totalorder %s23, 1
        %s1303 = scalar_select %p1302, %s23, 1
        %p1304 = scmp.lt.s32.totalorder %s24, 0
        %s1305 = scalar_select %p1304, %s24, 0
        %s1306 = sadd.s32 %s1305, %s1303
        %s1307 = smul.addr %s1306, 2
        %s1308 = scalar_lea.vmem %s5, %s1307
      $region56: #{conv_block.4} parent=47 // pred_fallthru
        _
    $region48: #{conv_block.4} parent=5 // pred_fallthru
      _
  $region6: #{conv_block.4} parent=0 // loop_footer
    %s16 = sadd.s32 1, %s12
  $region7: #{conv_block.4} parent=0 // loop_footer_branch
    %11 = sbr.rel target = $region3
  $region8: #{conv_block.4} parent=0 // loop_exit
    _

// kernel: conv_block.6
$region0: #{conv_block.6}
  #allocation0 [shape = 'u32[]', space=smem, size = 0x4, offset = 0x4, fixed_abs, tag = 'smem constant byte address 0x4 - core index']
  #allocation1 [shape = 'u32[72,128]{1,0:T(1,128)}', space=vmem, size = 0x9000, scoped, tag = 'internal scratch']
  %s0 = inlined_call_operand.vmem [shape: bf16[2,14,14,8], index: 0, kind: input, shape index: {}, may-alias: {0,1,2}]
  %s1 = inlined_call_operand.vmem [shape: bf16[2,14,14,8], index: 1, kind: input, shape index: {}, may-alias: {0,1,2}]
  %s2 = inlined_call_operand.vmem [shape: bf16[2,14,14,8], index: 2, kind: input, shape index: {}, may-alias: {0,1,2}]
  %s3 = inlined_call_operand.vmem [shape: bf16[72,8], index: 3, kind: input, shape index: {}]
  %s4 = inlined_call_operand.vmem [shape: bf16[2,1,144,8], index: 4, kind: output, shape index: {0}]
  %s5 = inlined_call_operand.vmem [shape: f32[2,1,2,8], index: 5, kind: output, shape index: {1}]
  %6 = xla_tuple %s4, %s5
  %s7 = sld [smem:[#allocation0]]
  $region57: #{conv_block.6} parent=0
    _
  %s9 = ssub.s32 1, %s7
  %s10 = scalar_select 0, %s9, %s7
  loop: start=0, step=1, limit=4
  $region2: #{conv_block.6} parent=0 // loop_pre_header
    _
  $region3: #{conv_block.6} parent=0 // loop_header
    %s12 = sphi 0, %s16
    %p13 = scmp.ge.s32.totalorder %s12, 4
    %s19 = sphi 0, %s31
    %s20 = sphi 0, %s27
    %s21 = sphi 0, %s19
    %s22 = sphi 0, %s20
    %s23 = sphi 0, %s21
    %s24 = sphi 0, %s22
    %s36 = sphi 0, %s38
    %s39 = sphi 0, %s36
    %s40 = sphi 0, %s39
    %s56 = sphi 0, %s40
    %s68 = sphi 0, %s70
    %s71 = sphi 0, %s68
    %s72 = sphi 0, %s71
    %s88 = sphi 0, %s72
    %s102 = sphi 0, %s104
    %s105 = sphi 0, %s102
    %s106 = sphi 0, %s105
    %s122 = sphi 0, %s106
    %s126 = sphi 0, %s126
    %s128 = sphi 0, %s126
    %s129 = sphi 0, %s128
    %s143 = sphi 0, %s129
    %s151 = sphi 0, %s153
    %s154 = sphi 0, %s151
    %s155 = sphi 0, %s154
    %s171 = sphi 0, %s155
    %s179 = sphi 0, %s181
    %s182 = sphi 0, %s179
    %s183 = sphi 0, %s182
    %s199 = sphi 0, %s183
  $region4: #{conv_block.6} parent=0 // loop_header_branch
    %15 = sbr.rel (%p13) target = $region8
  $region5: #{conv_block.6} parent=0 // loop_body
    %s17 = ssub.s32 %s12, 1
    %s18 = ssub.s32 %s12, 2
    %s25 = sadd.s32 1, %s20
    %p26 = scmp.ge.s32.totalorder %s25, 1
    %s27 = scalar_select %p26, 0, %s25
    %s28 = sadd.s32 1, %s19
    %s29 = scalar_select %p26, %s28, %s19
    %p30 = scmp.ge.s32.totalorder %s29, 2
    %s31 = scalar_select %p30, 0, %s29
    %s32 = ssub.s32 %s19, %s31
    %s33 = ssub.s32 %s20, %s27
    %s34 = sor.u32 %s32, %s33
    %p35 = scmp.eq.s32.totalorder %s34, 0
    %s37 = sadd.s32 %s36, 1
    %s38 = scalar_select %p35, %s36, %s37
    %p41 = pneg %p35
    %p42 = scmp.eq.s32.totalorder %s12, 1
    %p43 = por %p41, %p42
    %p44 = scmp.ne.s32.totalorder %s36, %s39
    %p45 = scmp.eq.s32.totalorder %s12, 0
    %p46 = por %p44, %p45
    %p47 = scmp.ne.s32.totalorder %s36, %s39
    %p48 = scmp.eq.s32.totalorder %s17, 1
    %p49 = por %p47, %p48
    %p50 = scmp.ne.s32.totalorder %s39, %s40
    %p51 = scmp.eq.s32.totalorder %s17, 0
    %p52 = por %p50, %p51
    %p53 = scmp.ne.s32.totalorder %s39, %s40
    %p54 = scmp.eq.s32.totalorder %s18, 1
    %p55 = por %p53, %p54
    %p57 = scmp.ne.s32.totalorder %s40, %s56
    %p58 = scmp.eq.s32.totalorder %s18, 0
    %p59 = por %p57, %p58
    %s60 = sadd.s32 %s20, 1
    %s61 = smul.u32 %s60, 12
    %s62 = sadd.s32 %s27, 1
    %s63 = smul.u32 %s62, 12
    %s64 = ssub.s32 %s19, %s31
    %s65 = ssub.s32 %s61, %s63
    %s66 = sor.u32 %s64, %s65
    %p67 = scmp.eq.s32.totalorder %s66, 0
    %s69 = sadd.s32 %s68, 1
    %s70 = scalar_select %p67, %s68, %s69
    %p73 = pneg %p67
    %p74 = scmp.eq.s32.totalorder %s12, 1
    %p75 = por %p73, %p74
    %p76 = scmp.ne.s32.totalorder %s68, %s71
    %p77 = scmp.eq.s32.totalorder %s12, 0
    %p78 = por %p76, %p77
    %p79 = scmp.ne.s32.totalorder %s68, %s71
    %p80 = scmp.eq.s32.totalorder %s17, 1
    %p81 = por %p79, %p80
    %p82 = scmp.ne.s32.totalorder %s71, %s72
    %p83 = scmp.eq.s32.totalorder %s17, 0
    %p84 = por %p82, %p83
    %p85 = scmp.ne.s32.totalorder %s71, %s72
    %p86 = scmp.eq.s32.totalorder %s18, 1
    %p87 = por %p85, %p86
    %p89 = scmp.ne.s32.totalorder %s72, %s88
    %p90 = scmp.eq.s32.totalorder %s18, 0
    %p91 = por %p89, %p90
    %s92 = sadd.s32 %s20, 1
    %s93 = smul.u32 %s92, 12
    %s94 = sadd.s32 %s93, 1
    %s95 = sadd.s32 %s27, 1
    %s96 = smul.u32 %s95, 12
    %s97 = sadd.s32 %s96, 1
    %s98 = ssub.s32 %s19, %s31
    %s99 = ssub.s32 %s94, %s97
    %s100 = sor.u32 %s98, %s99
    %p101 = scmp.eq.s32.totalorder %s100, 0
    %s103 = sadd.s32 %s102, 1
    %s104 = scalar_select %p101, %s102, %s103
    %p107 = pneg %p101
    %p108 = scmp.eq.s32.totalorder %s12, 1
    %p109 = por %p107, %p108
    %p110 = scmp.ne.s32.totalorder %s102, %s105
    %p111 = scmp.eq.s32.totalorder %s12, 0
    %p112 = por %p110, %p111
    %p113 = scmp.ne.s32.totalorder %s102, %s105
    %p114 = scmp.eq.s32.totalorder %s17, 1
    %p115 = por %p113, %p114
    %p116 = scmp.ne.s32.totalorder %s105, %s106
    %p117 = scmp.eq.s32.totalorder %s17, 0
    %p118 = por %p116, %p117
    %p119 = scmp.ne.s32.totalorder %s105, %s106
    %p120 = scmp.eq.s32.totalorder %s18, 1
    %p121 = por %p119, %p120
    %p123 = scmp.ne.s32.totalorder %s106, %s122
    %p124 = scmp.eq.s32.totalorder %s18, 0
    %p125 = por %p123, %p124
    %s127 = sadd.s32 %s126, 1
    %p130 = scmp.eq.s32.totalorder %s12, 1
    %p131 = scmp.ne.s32.totalorder %s126, %s128
    %p132 = scmp.eq.s32.totalorder %s12, 0
    %p133 = por %p131, %p132
    %p134 = scmp.ne.s32.totalorder %s126, %s128
    %p135 = scmp.eq.s32.totalorder %s17, 1
    %p136 = por %p134, %p135
    %p137 = scmp.ne.s32.totalorder %s128, %s129
    %p138 = scmp.eq.s32.totalorder %s17, 0
    %p139 = por %p137, %p138
    %p140 = scmp.ne.s32.totalorder %s128, %s129
    %p141 = scmp.eq.s32.totalorder %s18, 1
    %p142 = por %p140, %p141
    %p144 = scmp.ne.s32.totalorder %s129, %s143
    %p145 = scmp.eq.s32.totalorder %s18, 0
    %p146 = por %p144, %p145
    %s147 = ssub.s32 %s19, %s31
    %s148 = ssub.s32 %s20, %s27
    %s149 = sor.u32 %s147, %s148
    %p150 = scmp.eq.s32.totalorder %s149, 0
    %s152 = sadd.s32 %s151, 1
    %s153 = scalar_select %p150, %s151, %s152
    %p156 = pneg %p150
    %p157 = scmp.eq.s32.totalorder %s12, 1
    %p158 = por %p156, %p157
    %p159 = scmp.ne.s32.totalorder %s151, %s154
    %p160 = scmp.eq.s32.totalorder %s12, 0
    %p161 = por %p159, %p160
    %p162 = scmp.ne.s32.totalorder %s151, %s154
    %p163 = scmp.eq.s32.totalorder %s17, 1
    %p164 = por %p162, %p163
    %p165 = scmp.ne.s32.totalorder %s154, %s155
    %p166 = scmp.eq.s32.totalorder %s17, 0
    %p167 = por %p165, %p166
    %p168 = scmp.ne.s32.totalorder %s154, %s155
    %p169 = scmp.eq.s32.totalorder %s18, 1
    %p170 = por %p168, %p169
    %p172 = scmp.ne.s32.totalorder %s155, %s171
    %p173 = scmp.eq.s32.totalorder %s18, 0
    %p174 = por %p172, %p173
    %s175 = ssub.s32 %s19, %s31
    %s176 = ssub.s32 %s20, %s27
    %s177 = sor.u32 %s175, %s176
    %p178 = scmp.eq.s32.totalorder %s177, 0
    %s180 = sadd.s32 %s179, 1
    %s181 = scalar_select %p178, %s179, %s180
    %p184 = pneg %p178
    %p185 = scmp.eq.s32.totalorder %s12, 1
    %p186 = por %p184, %p185
    %p187 = scmp.ne.s32.totalorder %s179, %s182
    %p188 = scmp.eq.s32.totalorder %s12, 0
    %p189 = por %p187, %p188
    %p190 = scmp.ne.s32.totalorder %s179, %s182
    %p191 = scmp.eq.s32.totalorder %s17, 1
    %p192 = por %p190, %p191
    %p193 = scmp.ne.s32.totalorder %s182, %s183
    %p194 = scmp.eq.s32.totalorder %s17, 0
    %p195 = por %p193, %p194
    %p196 = scmp.ne.s32.totalorder %s182, %s183
    %p197 = scmp.eq.s32.totalorder %s18, 1
    %p198 = por %p196, %p197
    %p200 = scmp.ne.s32.totalorder %s183, %s199
    %p201 = scmp.eq.s32.totalorder %s18, 0
    %p202 = por %p200, %p201
    %p203 = scmp.le.s32.totalorder 1, %s12
    %p204 = scmp.lt.s32.totalorder %s12, 3
    %p205 = pnand %p203, %p204
    %p206 = pneg %p205
    // Predicated region
    $region9: #{conv_block.6} parent=5 // pred_check
      _
    $region10: #{conv_block.6} parent=5 // pred_check_branch
      %208 = sbr.rel (%p205) target = $region12
    $region11: #{conv_block.6} parent=5 // pred_region
      %s209 = ssub.s32 %s12, 1
      // Predicated region
      $region13: #{conv_block.6} parent=11 // pred_check
        %p210 = pneg %p139
      $region14: #{conv_block.6} parent=11 // pred_check_branch
        %212 = sbr.rel (%p210) target = $region16
      $region15: #{conv_block.6} parent=11 // pred_region
        _
      $region16: #{conv_block.6} parent=11 // pred_fallthru
        _
    $region12: #{conv_block.6} parent=5 // pred_fallthru
      _
    %p213 = scmp.lt.s32.totalorder %s12, 2
    // Predicated region
    $region17: #{conv_block.6} parent=5 // pred_check
      %p214 = pneg %p213
    $region18: #{conv_block.6} parent=5 // pred_check_branch
      %216 = sbr.rel (%p214) target = $region20
    $region19: #{conv_block.6} parent=5 // pred_region
      // Predicated region
      $region21: #{conv_block.6} parent=19 // pred_check
        %p217 = pneg %p46
      $region22: #{conv_block.6} parent=19 // pred_check_branch
        %219 = sbr.rel (%p217) target = $region24
      $region23: #{conv_block.6} parent=19 // pred_region
        %s220 = smul.u32 12, %s20
        %s221 = ssub.s32 14, %s220
        %p222 = scmp.lt.s32.totalorder %s221, 12
        %s223 = scalar_select %p222, %s221, 12
        %s224 = smul.u32 4, %s223
        %s225 = smul.u32 %s224, 2
        %p226 = scmp.lt.s32.totalorder %s19, 1
        %s227 = scalar_select %p226, %s19, 1
        %p228 = scmp.lt.s32.totalorder %s220, 13
        %s229 = scalar_select %p228, %s220, 13
        %s230 = smul.addr %s229, 2
        %s231 = smul.addr %s227, 28
        %s232 = sadd.s32 %s230, %s231
        %s233 = smul.addr %s232, 4
        %s234 = scalar_lea.vmem %s0, %s233
        %s235 = smul.u32 12, %s20
        %s236 = ssub.s32 14, %s235
        %p237 = scmp.lt.s32.totalorder %s236, 12
        %s238 = scalar_select %p237, %s236, 12
        %s239 = smul.u32 4, %s238
        %s240 = smul.u32 %s239, 2
      $region24: #{conv_block.6} parent=19 // pred_fallthru
        _
      // Predicated region
      $region25: #{conv_block.6} parent=19 // pred_check
        %p241 = pneg %p78
      $region26: #{conv_block.6} parent=19 // pred_check_branch
        %243 = sbr.rel (%p241) target = $region28
      $region27: #{conv_block.6} parent=19 // pred_region
        %s244 = sadd.s32 %s20, 1
        %s245 = smul.u32 %s244, 12
        %p246 = scmp.lt.s32.totalorder %s19, 1
        %s247 = scalar_select %p246, %s19, 1
        %p248 = scmp.lt.s32.totalorder %s245, 13
        %s249 = scalar_select %p248, %s245, 13
        %s250 = smul.addr %s249, 2
        %s251 = smul.addr %s247, 28
        %s252 = sadd.s32 %s250, %s251
        %s253 = smul.addr %s252, 4
        %s254 = scalar_lea.vmem %s1, %s253
        %s255 = sadd.s32 %s20, 1
        %s256 = smul.u32 %s255, 12
      $region28: #{conv_block.6} parent=19 // pred_fallthru
        _
      // Predicated region
      $region29: #{conv_block.6} parent=19 // pred_check
        %p257 = pneg %p112
      $region30: #{conv_block.6} parent=19 // pred_check_branch
        %259 = sbr.rel (%p257) target = $region32
      $region31: #{conv_block.6} parent=19 // pred_region
        %s260 = sadd.s32 %s20, 1
        %s261 = smul.u32 %s260, 12
        %s262 = sadd.s32 %s261, 1
        %p263 = scmp.lt.s32.totalorder %s19, 1
        %s264 = scalar_select %p263, %s19, 1
        %p265 = scmp.lt.s32.totalorder %s262, 13
        %s266 = scalar_select %p265, %s262, 13
        %s267 = smul.addr %s266, 2
        %s268 = smul.addr %s264, 28
        %s269 = sadd.s32 %s267, %s268
        %s270 = smul.addr %s269, 4
        %s271 = scalar_lea.vmem %s2, %s270
        %s272 = sadd.s32 %s20, 1
        %s273 = smul.u32 %s272, 12
        %s274 = sadd.s32 %s273, 1
      $region32: #{conv_block.6} parent=19 // pred_fallthru
        _
    $region20: #{conv_block.6} parent=5 // pred_fallthru
      _
    %p275 = scmp.le.s32.totalorder 1, %s12
    %p276 = scmp.lt.s32.totalorder %s12, 3
    %p277 = pnand %p275, %p276
    %p278 = pneg %p277
    // Predicated region
    $region33: #{conv_block.6} parent=5 // pred_check
      _
    $region34: #{conv_block.6} parent=5 // pred_check_branch
      %280 = sbr.rel (%p277) target = $region36
    $region35: #{conv_block.6} parent=5 // pred_region
      %s281 = ssub.s32 %s12, 1
      %s282 = smul.u32 12, %s22
      %s283 = ssub.s32 14, %s282
      %p284 = scmp.lt.s32.totalorder %s283, 12
      %s285 = scalar_select %p284, %s283, 12
      %s286 = smul.u32 4, %s285
      %s287 = smul.u32 %s286, 2
      %p288 = scmp.lt.s32.totalorder %s21, 1
      %s289 = scalar_select %p288, %s21, 1
      %p290 = scmp.lt.s32.totalorder %s282, 13
      %s291 = scalar_select %p290, %s282, 13
      %s292 = smul.addr %s291, 2
      %s293 = smul.addr %s289, 28
      %s294 = sadd.s32 %s292, %s293
      %s295 = smul.addr %s294, 4
      %s296 = scalar_lea.vmem %s0, %s295
      %p297 = pneg %p52
      %p298 = pneg %p49
      %s299 = sadd.s32 %s22, 1
      %s300 = smul.u32 %s299, 12
      %p301 = scmp.lt.s32.totalorder %s21, 1
      %s302 = scalar_select %p301, %s21, 1
      %p303 = scmp.lt.s32.totalorder %s300, 13
      %s304 = scalar_select %p303, %s300, 13
      %s305 = smul.addr %s304, 2
      %s306 = smul.addr %s302, 28
      %s307 = sadd.s32 %s305, %s306
      %s308 = smul.addr %s307, 4
      %s309 = scalar_lea.vmem %s1, %s308
      %p310 = pneg %p84
      %p311 = pneg %p81
      %s312 = sadd.s32 %s22, 1
      %s313 = smul.u32 %s312, 12
      %s314 = sadd.s32 %s313, 1
      %p315 = scmp.lt.s32.totalorder %s21, 1
      %s316 = scalar_select %p315, %s21, 1
      %p317 = scmp.lt.s32.totalorder %s314, 13
      %s318 = scalar_select %p317, %s314, 13
      %s319 = smul.addr %s318, 2
      %s320 = smul.addr %s316, 28
      %s321 = sadd.s32 %s319, %s320
      %s322 = smul.addr %s321, 4
      %s323 = scalar_lea.vmem %s2, %s322
      %p324 = pneg %p118
      %p325 = pneg %p115
      %p326 = pneg %p139
      %p327 = pneg %p136
      %p328 = pneg %p167
      %p329 = pneg %p164
      %p330 = scmp.lt.s32.totalorder %s21, 1
      %s331 = scalar_select %p330, %s21, 1
      %p332 = scmp.lt.s32.totalorder %s22, 0
      %s333 = scalar_select %p332, %s22, 0
      %s334 = smul.addr %s333, 18
      %s335 = smul.addr %s331, 18
      %s336 = sadd.s32 %s334, %s335
      %s337 = smul.addr %s336, 4
      %s338 = scalar_lea.vmem %s4, %s337
      %p339 = pneg %p195
      %p340 = pneg %p192
      %p341 = scmp.lt.s32.totalorder %s21, 1
      %s342 = scalar_select %p341, %s21, 1
      %p343 = scmp.lt.s32.totalorder %s22, 0
      %s344 = scalar_select %p343, %s22, 0
      %s345 = sadd.s32 %s344, %s342
      %s346 = smul.addr %s345, 2
      %s347 = scalar_lea.vmem %s5, %s346
      %s348 = smul.u32 12, %s22
      %s349 = ssub.s32 14, %s348
      %p350 = scmp.lt.s32.totalorder %s349, 12
      %s351 = scalar_select %p350, %s349, 12
      %s352 = smul.u32 4, %s351
      %s353 = smul.u32 %s352, 2
      %p354 = scmp.lt.s32.totalorder %s21, 1
      %s355 = scalar_select %p354, %s21, 1
      %p356 = scmp.lt.s32.totalorder %s348, 13
      %s357 = scalar_select %p356, %s348, 13
      %s358 = smul.addr %s357, 2
      %s359 = smul.addr %s355, 28
      %s360 = sadd.s32 %s358, %s359
      %s361 = smul.addr %s360, 4
      %s362 = scalar_lea.vmem %s0, %s361
      %s363 = smul.u32 12, %s22
      %s364 = ssub.s32 14, %s363
      %p365 = scmp.lt.s32.totalorder %s364, 12
      %s366 = scalar_select %p365, %s364, 12
      %s367 = smul.u32 4, %s366
      %s368 = smul.u32 %s367, 2
      %s369 = sadd.s32 %s22, 1
      %s370 = smul.u32 %s369, 12
      %p371 = scmp.lt.s32.totalorder %s21, 1
      %s372 = scalar_select %p371, %s21, 1
      %p373 = scmp.lt.s32.totalorder %s370, 13
      %s374 = scalar_select %p373, %s370, 13
      %s375 = smul.addr %s374, 2
      %s376 = smul.addr %s372, 28
      %s377 = sadd.s32 %s375, %s376
      %s378 = smul.addr %s377, 4
      %s379 = scalar_lea.vmem %s1, %s378
      %s380 = sadd.s32 %s22, 1
      %s381 = smul.u32 %s380, 12
      %s382 = sadd.s32 %s22, 1
      %s383 = smul.u32 %s382, 12
      %s384 = sadd.s32 %s383, 1
      %p385 = scmp.lt.s32.totalorder %s21, 1
      %s386 = scalar_select %p385, %s21, 1
      %p387 = scmp.lt.s32.totalorder %s384, 13
      %s388 = scalar_select %p387, %s384, 13
      %s389 = smul.addr %s388, 2
      %s390 = smul.addr %s386, 28
      %s391 = sadd.s32 %s389, %s390
      %s392 = smul.addr %s391, 4
      %s393 = scalar_lea.vmem %s2, %s392
      %s394 = sadd.s32 %s22, 1
      %s395 = smul.u32 %s394, 12
      %s396 = sadd.s32 %s395, 1
      %p397 = scmp.lt.s32.totalorder %s21, 1
      %s398 = scalar_select %p397, %s21, 1
      %p399 = scmp.lt.s32.totalorder %s22, 0
      %s400 = scalar_select %p399, %s22, 0
      %s401 = smul.addr %s400, 18
      %s402 = smul.addr %s398, 18
      %s403 = sadd.s32 %s401, %s402
      %s404 = smul.addr %s403, 4
      %s405 = scalar_lea.vmem %s4, %s404
      %p406 = scmp.lt.s32.totalorder %s21, 1
      %s407 = scalar_select %p406, %s21, 1
      %p408 = scmp.lt.s32.totalorder %s22, 0
      %s409 = scalar_select %p408, %s22, 0
      %s410 = sadd.s32 %s409, %s407
      %s411 = smul.addr %s410, 2
      %s412 = scalar_lea.vmem %s5, %s411
      %v414 = vld [vmem:[%s362] sm:$0xf]
      %v415 = vld [vmem:[%s362 + $0x4] sm:$0x7]
      %s416 = scalar_lea.vmem %s362, 8
      %v417 = vld [vmem:[%s416] sm:$0xf]
      %v418 = vld [vmem:[%s416 + $0x4] sm:$0x7]
      %s419 = scalar_lea.vmem %s362, 16
      %v420 = vld [vmem:[%s419] sm:$0xf]
      %v421 = vld [vmem:[%s419 + $0x4] sm:$0x7]
      %s422 = scalar_lea.vmem %s362, 24
      %v423 = vld [vmem:[%s422] sm:$0xf]
      %v424 = vld [vmem:[%s422 + $0x4] sm:$0x7]
      %s425 = scalar_lea.vmem %s362, 32
      %v426 = vld [vmem:[%s425] sm:$0xf]
      %v427 = vld [vmem:[%s425 + $0x4] sm:$0x7]
      %s428 = scalar_lea.vmem %s362, 40
      %v429 = vld [vmem:[%s428] sm:$0xf]
      %v430 = vld [vmem:[%s428 + $0x4] sm:$0x7]
      %s431 = scalar_lea.vmem %s362, 48
      %v432 = vld [vmem:[%s431] sm:$0xf]
      %v433 = vld [vmem:[%s431 + $0x4] sm:$0x7]
      %s434 = scalar_lea.vmem %s362, 56
      %v435 = vld [vmem:[%s434] sm:$0xf]
      %v436 = vld [vmem:[%s434 + $0x4] sm:$0x7]
      %s437 = scalar_lea.vmem %s362, 64
      %v438 = vld [vmem:[%s437] sm:$0xf]
      %v439 = vld [vmem:[%s437 + $0x4] sm:$0x7]
      %s440 = scalar_lea.vmem %s362, 72
      %v441 = vld [vmem:[%s440] sm:$0xf]
      %v442 = vld [vmem:[%s440 + $0x4] sm:$0x7]
      %s443 = scalar_lea.vmem %s362, 80
      %v444 = vld [vmem:[%s443] sm:$0xf]
      %v445 = vld [vmem:[%s443 + $0x4] sm:$0x7]
      %s446 = scalar_lea.vmem %s362, 88
      %v447 = vld [vmem:[%s446] sm:$0xf]
      %v448 = vld [vmem:[%s446 + $0x4] sm:$0x7]
      %v449 = vld [vmem:[%s379] sm:$0xf]
      %v450 = vld [vmem:[%s379 + $0x4] sm:$0x7]
      %v451 = vld [vmem:[%s393] sm:$0xf]
      %v452 = vld [vmem:[%s393 + $0x4] sm:$0x7]
      %v455 = vunpack.c.l.b16 %v414
      %v456 = vunpack.c.l.b16 %v415
      %v457 = vpack.c.b16 %v456, %v455
      %v460 = vunpack.c.l.b16 %v417
      %v461 = vunpack.c.l.b16 %v418
      %v462 = vpack.c.b16 %v461, %v460
      %463 = vrot.lane.b32.xlu0 %v462, 8
      %v464 = vpop.permute.xlu0 %463
      %v467 = vunpack.c.l.b16 %v420
      %v468 = vunpack.c.l.b16 %v421
      %v469 = vpack.c.b16 %v468, %v467
      %470 = vrot.lane.b32.xlu0 %v469, 16
      %v471 = vpop.permute.xlu0 %470
      %vm472 = vcmask 64512
      %v475 = vsel %vm472, %v457, %v464
      %vm476 = vcmask 130048
      %v478 = vsel %vm476, %v475, %v471
      %v479 = vshrl.u32 %v478, 16
      %v481 = vshll.u32 %v478, 16
      %v483 = vrot.slane %v481, 1
      %v484 = vor.u32 %v479, %v483
      %485 = vrot.lane.b32.xlu0 %v484, 24
      %v486 = vpop.permute.xlu0 %485
      %v488 = vrot.slane %v478, 1
      %489 = vrot.lane.b32.xlu0 %v488, 48
      %v490 = vpop.permute.xlu0 %489
      %vm491 = vcmask 195584
      %v493 = vsel %vm491, %v478, %v486
      %vm494 = vcmask 392192
      %v496 = vsel %vm494, %v493, %v490
      %497 = vrot.lane.b32.xlu0 %v469, 8
      %v498 = vpop.permute.xlu0 %497
      %v501 = vunpack.c.l.b16 %v423
      %v502 = vunpack.c.l.b16 %v424
      %v503 = vpack.c.b16 %v502, %v501
      %504 = vrot.lane.b32.xlu0 %v503, 16
      %v505 = vpop.permute.xlu0 %504
      %v508 = vsel %vm472, %v462, %v498
      %v510 = vsel %vm476, %v508, %v505
      %v511 = vshrl.u32 %v510, 16
      %v513 = vshll.u32 %v510, 16
      %v515 = vrot.slane %v513, 1
      %v516 = vor.u32 %v511, %v515
      %517 = vrot.lane.b32.xlu0 %v516, 24
      %v518 = vpop.permute.xlu0 %517
      %v520 = vrot.slane %v510, 1
      %521 = vrot.lane.b32.xlu0 %v520, 48
      %v522 = vpop.permute.xlu0 %521
      %v524 = vsel %vm491, %v510, %v518
      %v526 = vsel %vm494, %v524, %v522
      %527 = vrot.lane.b32.xlu0 %v503, 8
      %v528 = vpop.permute.xlu0 %527
      %v531 = vunpack.c.l.b16 %v426
      %v532 = vunpack.c.l.b16 %v427
      %v533 = vpack.c.b16 %v532, %v531
      %534 = vrot.lane.b32.xlu0 %v533, 16
      %v535 = vpop.permute.xlu0 %534
      %v538 = vsel %vm472, %v469, %v528
      %v540 = vsel %vm476, %v538, %v535
      %v541 = vshrl.u32 %v540, 16
      %v543 = vshll.u32 %v540, 16
      %v545 = vrot.slane %v543, 1
      %v546 = vor.u32 %v541, %v545
      %547 = vrot.lane.b32.xlu0 %v546, 24
      %v548 = vpop.permute.xlu0 %547
      %v550 = vrot.slane %v540, 1
      %551 = vrot.lane.b32.xlu0 %v550, 48
      %v552 = vpop.permute.xlu0 %551
      %v554 = vsel %vm491, %v540, %v548
      %v556 = vsel %vm494, %v554, %v552
      %557 = vrot.lane.b32.xlu0 %v533, 8
      %v558 = vpop.permute.xlu0 %557
      %v561 = vunpack.c.l.b16 %v429
      %v562 = vunpack.c.l.b16 %v430
      %v563 = vpack.c.b16 %v562, %v561
      %564 = vrot.lane.b32.xlu0 %v563, 16
      %v565 = vpop.permute.xlu0 %564
      %v568 = vsel %vm472, %v503, %v558
      %v570 = vsel %vm476, %v568, %v565
      %v571 = vshrl.u32 %v570, 16
      %v573 = vshll.u32 %v570, 16
      %v575 = vrot.slane %v573, 1
      %v576 = vor.u32 %v571, %v575
      %577 = vrot.lane.b32.xlu0 %v576, 24
      %v578 = vpop.permute.xlu0 %577
      %v580 = vrot.slane %v570, 1
      %581 = vrot.lane.b32.xlu0 %v580, 48
      %v582 = vpop.permute.xlu0 %581
      %v584 = vsel %vm491, %v570, %v578
      %v586 = vsel %vm494, %v584, %v582
      %587 = vrot.lane.b32.xlu0 %v563, 8
      %v588 = vpop.permute.xlu0 %587
      %v591 = vunpack.c.l.b16 %v432
      %v592 = vunpack.c.l.b16 %v433
      %v593 = vpack.c.b16 %v592, %v591
      %594 = vrot.lane.b32.xlu0 %v593, 16
      %v595 = vpop.permute.xlu0 %594
      %v598 = vsel %vm472, %v533, %v588
      %v600 = vsel %vm476, %v598, %v595
      %v601 = vshrl.u32 %v600, 16
      %v603 = vshll.u32 %v600, 16
      %v605 = vrot.slane %v603, 1
      %v606 = vor.u32 %v601, %v605
      %607 = vrot.lane.b32.xlu0 %v606, 24
      %v608 = vpop.permute.xlu0 %607
      %v610 = vrot.slane %v600, 1
      %611 = vrot.lane.b32.xlu0 %v610, 48
      %v612 = vpop.permute.xlu0 %611
      %v614 = vsel %vm491, %v600, %v608
      %v616 = vsel %vm494, %v614, %v612
      %617 = vrot.lane.b32.xlu0 %v593, 8
      %v618 = vpop.permute.xlu0 %617
      %v621 = vunpack.c.l.b16 %v435
      %v622 = vunpack.c.l.b16 %v436
      %v623 = vpack.c.b16 %v622, %v621
      %624 = vrot.lane.b32.xlu0 %v623, 16
      %v625 = vpop.permute.xlu0 %624
      %v628 = vsel %vm472, %v563, %v618
      %v630 = vsel %vm476, %v628, %v625
      %v631 = vshrl.u32 %v630, 16
      %v633 = vshll.u32 %v630, 16
      %v635 = vrot.slane %v633, 1
      %v636 = vor.u32 %v631, %v635
      %637 = vrot.lane.b32.xlu0 %v636, 24
      %v638 = vpop.permute.xlu0 %637
      %v640 = vrot.slane %v630, 1
      %641 = vrot.lane.b32.xlu0 %v640, 48
      %v642 = vpop.permute.xlu0 %641
      %v644 = vsel %vm491, %v630, %v638
      %v646 = vsel %vm494, %v644, %v642
      %647 = vrot.lane.b32.xlu0 %v623, 8
      %v648 = vpop.permute.xlu0 %647
      %v651 = vunpack.c.l.b16 %v438
      %v652 = vunpack.c.l.b16 %v439
      %v653 = vpack.c.b16 %v652, %v651
      %654 = vrot.lane.b32.xlu0 %v653, 16
      %v655 = vpop.permute.xlu0 %654
      %v658 = vsel %vm472, %v593, %v648
      %v660 = vsel %vm476, %v658, %v655
      %v661 = vshrl.u32 %v660, 16
      %v663 = vshll.u32 %v660, 16
      %v665 = vrot.slane %v663, 1
      %v666 = vor.u32 %v661, %v665
      %667 = vrot.lane.b32.xlu0 %v666, 24
      %v668 = vpop.permute.xlu0 %667
      %v670 = vrot.slane %v660, 1
      %671 = vrot.lane.b32.xlu0 %v670, 48
      %v672 = vpop.permute.xlu0 %671
      %v674 = vsel %vm491, %v660, %v668
      %v676 = vsel %vm494, %v674, %v672
      %677 = vrot.lane.b32.xlu0 %v653, 8
      %v678 = vpop.permute.xlu0 %677
      %v681 = vunpack.c.l.b16 %v441
      %v682 = vunpack.c.l.b16 %v442
      %v683 = vpack.c.b16 %v682, %v681
      %684 = vrot.lane.b32.xlu0 %v683, 16
      %v685 = vpop.permute.xlu0 %684
      %v688 = vsel %vm472, %v623, %v678
      %v690 = vsel %vm476, %v688, %v685
      %v691 = vshrl.u32 %v690, 16
      %v693 = vshll.u32 %v690, 16
      %v695 = vrot.slane %v693, 1
      %v696 = vor.u32 %v691, %v695
      %697 = vrot.lane.b32.xlu0 %v696, 24
      %v698 = vpop.permute.xlu0 %697
      %v700 = vrot.slane %v690, 1
      %701 = vrot.lane.b32.xlu0 %v700, 48
      %v702 = vpop.permute.xlu0 %701
      %v704 = vsel %vm491, %v690, %v698
      %v706 = vsel %vm494, %v704, %v702
      %707 = vrot.lane.b32.xlu0 %v683, 8
      %v708 = vpop.permute.xlu0 %707
      %v711 = vunpack.c.l.b16 %v444
      %v712 = vunpack.c.l.b16 %v445
      %v713 = vpack.c.b16 %v712, %v711
      %714 = vrot.lane.b32.xlu0 %v713, 16
      %v715 = vpop.permute.xlu0 %714
      %v718 = vsel %vm472, %v653, %v708
      %v720 = vsel %vm476, %v718, %v715
      %v721 = vshrl.u32 %v720, 16
      %v723 = vshll.u32 %v720, 16
      %v725 = vrot.slane %v723, 1
      %v726 = vor.u32 %v721, %v725
      %727 = vrot.lane.b32.xlu0 %v726, 24
      %v728 = vpop.permute.xlu0 %727
      %v730 = vrot.slane %v720, 1
      %731 = vrot.lane.b32.xlu0 %v730, 48
      %v732 = vpop.permute.xlu0 %731
      %v734 = vsel %vm491, %v720, %v728
      %v736 = vsel %vm494, %v734, %v732
      %737 = vrot.lane.b32.xlu0 %v713, 8
      %v738 = vpop.permute.xlu0 %737
      %v741 = vunpack.c.l.b16 %v447
      %v742 = vunpack.c.l.b16 %v448
      %v743 = vpack.c.b16 %v742, %v741
      %744 = vrot.lane.b32.xlu0 %v743, 16
      %v745 = vpop.permute.xlu0 %744
      %v748 = vsel %vm472, %v683, %v738
      %v750 = vsel %vm476, %v748, %v745
      %v751 = vshrl.u32 %v750, 16
      %v753 = vshll.u32 %v750, 16
      %v755 = vrot.slane %v753, 1
      %v756 = vor.u32 %v751, %v755
      %757 = vrot.lane.b32.xlu0 %v756, 24
      %v758 = vpop.permute.xlu0 %757
      %v760 = vrot.slane %v750, 1
      %761 = vrot.lane.b32.xlu0 %v760, 48
      %v762 = vpop.permute.xlu0 %761
      %v764 = vsel %vm491, %v750, %v758
      %v766 = vsel %vm494, %v764, %v762
      %767 = vrot.lane.b32.xlu0 %v743, 8
      %v768 = vpop.permute.xlu0 %767
      %v771 = vunpack.c.l.b16 %v449
      %v772 = vunpack.c.l.b16 %v450
      %v773 = vpack.c.b16 %v772, %v771
      %774 = vrot.lane.b32.xlu0 %v773, 16
      %v775 = vpop.permute.xlu0 %774
      %v778 = vsel %vm472, %v713, %v768
      %v780 = vsel %vm476, %v778, %v775
      %v781 = vshrl.u32 %v780, 16
      %v783 = vshll.u32 %v780, 16
      %v785 = vrot.slane %v783, 1
      %v786 = vor.u32 %v781, %v785
      %787 = vrot.lane.b32.xlu0 %v786, 24
      %v788 = vpop.permute.xlu0 %787
      %v790 = vrot.slane %v780, 1
      %791 = vrot.lane.b32.xlu0 %v790, 48
      %v792 = vpop.permute.xlu0 %791
      %v794 = vsel %vm491, %v780, %v788
      %v796 = vsel %vm494, %v794, %v792
      %797 = vrot.lane.b32.xlu0 %v773, 8
      %v798 = vpop.permute.xlu0 %797
      %v801 = vunpack.c.l.b16 %v451
      %v802 = vunpack.c.l.b16 %v452
      %v803 = vpack.c.b16 %v802, %v801
      %804 = vrot.lane.b32.xlu0 %v803, 16
      %v805 = vpop.permute.xlu0 %804
      %v808 = vsel %vm472, %v743, %v798
      %v810 = vsel %vm476, %v808, %v805
      %v811 = vshrl.u32 %v810, 16
      %v813 = vshll.u32 %v810, 16
      %v815 = vrot.slane %v813, 1
      %v816 = vor.u32 %v811, %v815
      %817 = vrot.lane.b32.xlu0 %v816, 24
      %v818 = vpop.permute.xlu0 %817
      %v820 = vrot.slane %v810, 1
      %821 = vrot.lane.b32.xlu0 %v820, 48
      %v822 = vpop.permute.xlu0 %821
      %v824 = vsel %vm491, %v810, %v818
      %v826 = vsel %vm494, %v824, %v822
      %v828 = vrot.slane %v526, 2
      %v830 = vrot.slane %v556, 4
      %v832 = vrot.slane %v586, 6
      %v834 = vrot.slane %v646, 2
      %v836 = vrot.slane %v676, 4
      %v838 = vrot.slane %v706, 6
      %v840 = vrot.slane %v766, 2
      %v842 = vrot.slane %v796, 4
      %v844 = vrot.slane %v826, 6
      %vm845 = vcmask 1045504
      %v847 = vsel %vm845, %v496, %v828
      %vm848 = vcmask 1043456
      %v850 = vsel %vm848, %v828, %v830
      %vm851 = vcmask 1041408
      %v853 = vsel %vm851, %v830, %v832
      %v855 = vsel %vm845, %v616, %v834
      %v857 = vsel %vm848, %v834, %v836
      %v859 = vsel %vm851, %v836, %v838
      %v861 = vsel %vm845, %v736, %v840
      %v863 = vsel %vm848, %v840, %v842
      %v865 = vsel %vm851, %v842, %v844
      %v866 = vld [vmem:[%s3] sm:$0xf]
      %v867 = vld [vmem:[%s3 + $0x4] sm:$0xf]
      %v868 = vld [vmem:[%s3 + $0x8] sm:$0xf]
      %v869 = vld [vmem:[%s3 + $0xc] sm:$0xf]
      %v870 = vld [vmem:[%s3 + $0x10] sm:$0xf]
      %v871 = vld [vmem:[%s3 + $0x14] sm:$0xf]
      %v872 = vld [vmem:[%s3 + $0x18] sm:$0xf]
      %v873 = vld [vmem:[%s3 + $0x1c] sm:$0xf]
      %v874 = vld [vmem:[%s3 + $0x20] sm:$0xf]
      %v884 = vunpack.c.l.b16 %v866
      %v885 = vunpack.c.l.b16 %v867
      %v886 = vunpack.c.l.b16 %v868
      %v887 = vunpack.c.l.b16 %v869
      %v888 = vunpack.c.l.b16 %v870
      %v889 = vunpack.c.l.b16 %v871
      %v890 = vunpack.c.l.b16 %v872
      %v891 = vunpack.c.l.b16 %v873
      %v892 = vunpack.c.l.b16 %v874
      %v893 = vpack.c.b16 %v885, %v884
      %v894 = vpack.c.b16 %v887, %v886
      %v895 = vpack.c.b16 %v889, %v888
      %v896 = vpack.c.b16 %v891, %v890
      %v897 = vpack.c.b16 %v892, %v892
      %vm902 = vcmask 588800
      %v903 = vsel %vm902, %v847, 0
      %v905 = vsel %vm902, %v850, 0
      %v907 = vsel %vm902, %v853, 0
      %v909 = vsel %vm902, %v855, 0
      %v911 = vsel %vm902, %v857, 0
      %v913 = vsel %vm902, %v859, 0
      %v915 = vsel %vm902, %v861, 0
      %v917 = vsel %vm902, %v863, 0
      %v919 = vsel %vm902, %v865, 0
      %v922 = vsel %vm848, %v897, 0
      %924 = vmatpush.bf16.msra.mxu0 0
      %925 = vmatpush.bf16.msra.mxu0 0
      %926 = vmatpush.bf16.msra.mxu0 0
      %927 = vmatpush.bf16.msra.mxu0 %v922
      %928 = vmatpush.bf16.msra.mxu0 %v896
      %929 = vmatpush.bf16.msra.mxu0 %v895
      %930 = vmatpush.bf16.msra.mxu0 %v894
      %931 = vmatpush.bf16.msra.mxu0 %v893
      %932 = vmatmul.bf16.gmra.mxu0 %v903
      %v933 = vpop.f32.mrf.mxu0
      %v934 = vadd.f32 0.0, %v933
      %v935 = vpop.f32.mrf.mxu0
      %v936 = vadd.f32 0.0, %v935
      %937 = vmatmul.bf16.gmra.mxu0 %v905
      %v938 = vpop.f32.mrf.mxu0
      %v939 = vadd.f32 0.0, %v938
      %v940 = vpop.f32.mrf.mxu0
      %v941 = vadd.f32 0.0, %v940
      %942 = vmatmul.bf16.gmra.mxu0 %v907
      %v943 = vpop.f32.mrf.mxu0
      %v944 = vadd.f32 0.0, %v943
      %v945 = vpop.f32.mrf.mxu0
      %v946 = vadd.f32 0.0, %v945
      %947 = vmatmul.bf16.gmra.mxu0 %v909
      %v948 = vpop.f32.mrf.mxu0
      %v949 = vadd.f32 0.0, %v948
      %v950 = vpop.f32.mrf.mxu0
      %v951 = vadd.f32 0.0, %v950
      %952 = vmatmul.bf16.gmra.mxu0 %v911
      %v953 = vpop.f32.mrf.mxu0
      %v954 = vadd.f32 0.0, %v953
      %v955 = vpop.f32.mrf.mxu0
      %v956 = vadd.f32 0.0, %v955
      %957 = vmatmul.bf16.gmra.mxu0 %v913
      %v958 = vpop.f32.mrf.mxu0
      %v959 = vadd.f32 0.0, %v958
      %v960 = vpop.f32.mrf.mxu0
      %v961 = vadd.f32 0.0, %v960
      %962 = vmatmul.bf16.gmra.mxu0 %v915
      %v963 = vpop.f32.mrf.mxu0
      %v964 = vadd.f32 0.0, %v963
      %v965 = vpop.f32.mrf.mxu0
      %v966 = vadd.f32 0.0, %v965
      %967 = vmatmul.bf16.gmra.mxu0 %v917
      %v968 = vpop.f32.mrf.mxu0
      %v969 = vadd.f32 0.0, %v968
      %v970 = vpop.f32.mrf.mxu0
      %v971 = vadd.f32 0.0, %v970
      %972 = vmatmul.bf16.gmra.mxu0 %v919
      %v973 = vpop.f32.mrf.mxu0
      %v974 = vadd.f32 0.0, %v973
      %v975 = vpop.f32.mrf.mxu0
      %v976 = vadd.f32 0.0, %v975
      %977 = vdwg.mxu0
      %v978 = vpack.c.bf16 %v934, %v934
      %v979 = vpack.c.bf16 %v936, %v936
      %v980 = vpack.c.bf16 %v939, %v939
      %v981 = vpack.c.bf16 %v941, %v941
      %v982 = vpack.c.bf16 %v944, %v944
      %v983 = vpack.c.bf16 %v946, %v946
      %v984 = vpack.c.bf16 %v949, %v949
      %v985 = vpack.c.bf16 %v951, %v951
      %v986 = vpack.c.bf16 %v954, %v954
      %v987 = vpack.c.bf16 %v956, %v956
      %v988 = vpack.c.bf16 %v959, %v959
      %v989 = vpack.c.bf16 %v961, %v961
      %v990 = vpack.c.bf16 %v964, %v964
      %v991 = vpack.c.bf16 %v966, %v966
      %v992 = vpack.c.bf16 %v969, %v969
      %v993 = vpack.c.bf16 %v971, %v971
      %v994 = vpack.c.bf16 %v974, %v974
      %v995 = vpack.c.bf16 %v976, %v976
      %vm996 = vcmask 60416
      %997 = vst.msk [vmem:[%s405] sm:$0xf] %vm996, %v978
      %998 = vst.msk [vmem:[%s405 + $0x4] sm:$0xf] %vm996, %v979
      %999 = vst.msk [vmem:[%s405 + $0x8] sm:$0xf] %vm996, %v980
      %1000 = vst.msk [vmem:[%s405 + $0xc] sm:$0xf] %vm996, %v981
      %1001 = vst.msk [vmem:[%s405 + $0x10] sm:$0xf] %vm996, %v982
      %1002 = vst.msk [vmem:[%s405 + $0x14] sm:$0xf] %vm996, %v983
      %1003 = vst.msk [vmem:[%s405 + $0x18] sm:$0xf] %vm996, %v984
      %1004 = vst.msk [vmem:[%s405 + $0x1c] sm:$0xf] %vm996, %v985
      %1005 = vst.msk [vmem:[%s405 + $0x20] sm:$0xf] %vm996, %v986
      %1006 = vst.msk [vmem:[%s405 + $0x24] sm:$0xf] %vm996, %v987
      %1007 = vst.msk [vmem:[%s405 + $0x28] sm:$0xf] %vm996, %v988
      %1008 = vst.msk [vmem:[%s405 + $0x2c] sm:$0xf] %vm996, %v989
      %1009 = vst.msk [vmem:[%s405 + $0x30] sm:$0xf] %vm996, %v990
      %1010 = vst.msk [vmem:[%s405 + $0x34] sm:$0xf] %vm996, %v991
      %1011 = vst.msk [vmem:[%s405 + $0x38] sm:$0xf] %vm996, %v992
      %1012 = vst.msk [vmem:[%s405 + $0x3c] sm:$0xf] %vm996, %v993
      %1013 = vst.msk [vmem:[%s405 + $0x40] sm:$0xf] %vm996, %v994
      %1014 = vst.msk [vmem:[%s405 + $0x44] sm:$0xf] %vm996, %v995
      %v1015 = vsel %vm472, %v934, 0.0
      %v1016 = vsel %vm472, %v936, 0.0
      %v1017 = vadd.f32 %v1015, %v1016
      %v1018 = vsel %vm472, %v939, 0.0
      %v1019 = vadd.f32 %v1017, %v1018
      %v1020 = vsel %vm472, %v941, 0.0
      %v1021 = vadd.f32 %v1019, %v1020
      %v1022 = vsel %vm472, %v944, 0.0
      %v1023 = vadd.f32 %v1021, %v1022
      %v1024 = vsel %vm472, %v946, 0.0
      %v1025 = vadd.f32 %v1023, %v1024
      %v1026 = vsel %vm472, %v949, 0.0
      %v1027 = vadd.f32 %v1025, %v1026
      %v1028 = vsel %vm472, %v951, 0.0
      %v1029 = vadd.f32 %v1027, %v1028
      %v1030 = vsel %vm472, %v954, 0.0
      %v1031 = vadd.f32 %v1029, %v1030
      %v1032 = vsel %vm472, %v956, 0.0
      %v1033 = vadd.f32 %v1031, %v1032
      %v1034 = vsel %vm472, %v959, 0.0
      %v1035 = vadd.f32 %v1033, %v1034
      %v1036 = vsel %vm472, %v961, 0.0
      %v1037 = vadd.f32 %v1035, %v1036
      %v1038 = vsel %vm472, %v964, 0.0
      %v1039 = vadd.f32 %v1037, %v1038
      %v1040 = vsel %vm472, %v966, 0.0
      %v1041 = vadd.f32 %v1039, %v1040
      %v1042 = vsel %vm472, %v969, 0.0
      %v1043 = vadd.f32 %v1041, %v1042
      %v1044 = vsel %vm472, %v971, 0.0
      %v1045 = vadd.f32 %v1043, %v1044
      %v1046 = vsel %vm472, %v974, 0.0
      %v1047 = vadd.f32 %v1045, %v1046
      %v1048 = vsel %vm472, %v976, 0.0
      %v1049 = vadd.f32 %v1047, %v1048
      %v1050 = vrot.slane %v1049, 4
      %v1051 = vadd.f32 %v1049, %v1050
      %v1052 = vrot.slane %v1051, 2
      %v1053 = vadd.f32 %v1051, %v1052
      %v1054 = vrot.slane %v1053, 1
      %v1055 = vadd.f32 %v1053, %v1054
      %v1056 = vmul.f32 %v934, %v934
      %v1057 = vmul.f32 %v936, %v936
      %v1058 = vmul.f32 %v939, %v939
      %v1059 = vmul.f32 %v941, %v941
      %v1060 = vmul.f32 %v944, %v944
      %v1061 = vmul.f32 %v946, %v946
      %v1062 = vmul.f32 %v949, %v949
      %v1063 = vmul.f32 %v951, %v951
      %v1064 = vmul.f32 %v954, %v954
      %v1065 = vmul.f32 %v956, %v956
      %v1066 = vmul.f32 %v959, %v959
      %v1067 = vmul.f32 %v961, %v961
      %v1068 = vmul.f32 %v964, %v964
      %v1069 = vmul.f32 %v966, %v966
      %v1070 = vmul.f32 %v969, %v969
      %v1071 = vmul.f32 %v971, %v971
      %v1072 = vmul.f32 %v974, %v974
      %v1073 = vmul.f32 %v976, %v976
      %v1074 = vsel %vm472, %v1056, 0.0
      %v1075 = vsel %vm472, %v1057, 0.0
      %v1076 = vadd.f32 %v1074, %v1075
      %v1077 = vsel %vm472, %v1058, 0.0
      %v1078 = vadd.f32 %v1076, %v1077
      %v1079 = vsel %vm472, %v1059, 0.0
      %v1080 = vadd.f32 %v1078, %v1079
      %v1081 = vsel %vm472, %v1060, 0.0
      %v1082 = vadd.f32 %v1080, %v1081
      %v1083 = vsel %vm472, %v1061, 0.0
      %v1084 = vadd.f32 %v1082, %v1083
      %v1085 = vsel %vm472, %v1062, 0.0
      %v1086 = vadd.f32 %v1084, %v1085
      %v1087 = vsel %vm472, %v1063, 0.0
      %v1088 = vadd.f32 %v1086, %v1087
      %v1089 = vsel %vm472, %v1064, 0.0
      %v1090 = vadd.f32 %v1088, %v1089
      %v1091 = vsel %vm472, %v1065, 0.0
      %v1092 = vadd.f32 %v1090, %v1091
      %v1093 = vsel %vm472, %v1066, 0.0
      %v1094 = vadd.f32 %v1092, %v1093
      %v1095 = vsel %vm472, %v1067, 0.0
      %v1096 = vadd.f32 %v1094, %v1095
      %v1097 = vsel %vm472, %v1068, 0.0
      %v1098 = vadd.f32 %v1096, %v1097
      %v1099 = vsel %vm472, %v1069, 0.0
      %v1100 = vadd.f32 %v1098, %v1099
      %v1101 = vsel %vm472, %v1070, 0.0
      %v1102 = vadd.f32 %v1100, %v1101
      %v1103 = vsel %vm472, %v1071, 0.0
      %v1104 = vadd.f32 %v1102, %v1103
      %v1105 = vsel %vm472, %v1072, 0.0
      %v1106 = vadd.f32 %v1104, %v1105
      %v1107 = vsel %vm472, %v1073, 0.0
      %v1108 = vadd.f32 %v1106, %v1107
      %v1109 = vrot.slane %v1108, 4
      %v1110 = vadd.f32 %v1108, %v1109
      %v1111 = vrot.slane %v1110, 2
      %v1112 = vadd.f32 %v1110, %v1111
      %v1113 = vrot.slane %v1112, 1
      %v1114 = vadd.f32 %v1112, %v1113
      %vm1115 = vcmask 1040384
      %v1116 = vsel %vm1115, %v1055, %v1114
      %vm1117 = vcmask 58368
      %1118 = vst.msk [vmem:[%s412] sm:$0x3] %vm1117, %v1116
      %p1119 = scmp.lt.s32.totalorder %s21, 1
      %s1120 = scalar_select %p1119, %s21, 1
      %p1121 = scmp.lt.s32.totalorder %s22, 0
      %s1122 = scalar_select %p1121, %s22, 0
      %s1123 = smul.addr %s1122, 18
      %s1124 = smul.addr %s1120, 18
      %s1125 = sadd.s32 %s1123, %s1124
      %s1126 = smul.addr %s1125, 4
      %s1127 = scalar_lea.vmem %s4, %s1126
      %p1128 = scmp.lt.s32.totalorder %s21, 1
      %s1129 = scalar_select %p1128, %s21, 1
      %p1130 = scmp.lt.s32.totalorder %s22, 0
      %s1131 = scalar_select %p1130, %s22, 0
      %s1132 = sadd.s32 %s1131, %s1129
      %s1133 = smul.addr %s1132, 2
      %s1134 = scalar_lea.vmem %s5, %s1133
      // Predicated region
      $region37: #{conv_block.6} parent=35 // pred_check
        %p1135 = pneg %p164
      $region38: #{conv_block.6} parent=35 // pred_check_branch
        %1137 = sbr.rel (%p1135) target = $region40
      $region39: #{conv_block.6} parent=35 // pred_region
        _
      $region40: #{conv_block.6} parent=35 // pred_fallthru
        _
      // Predicated region
      $region41: #{conv_block.6} parent=35 // pred_check
        %p1138 = pneg %p192
      $region42: #{conv_block.6} parent=35 // pred_check_branch
        %1140 = sbr.rel (%p1138) target = $region44
      $region43: #{conv_block.6} parent=35 // pred_region
        _
      $region44: #{conv_block.6} parent=35 // pred_fallthru
        _
    $region36: #{conv_block.6} parent=5 // pred_fallthru
      _
    %p1141 = scmp.le.s32.totalorder 2, %s12
    // Predicated region
    $region45: #{conv_block.6} parent=5 // pred_check
      %p1142 = pneg %p1141
    $region46: #{conv_block.6} parent=5 // pred_check_branch
      %1144 = sbr.rel (%p1142) target = $region48
    $region47: #{conv_block.6} parent=5 // pred_region
      %s1145 = ssub.s32 %s12, 2
      // Predicated region
      $region49: #{conv_block.6} parent=47 // pred_check
        %p1146 = pneg %p170
      $region50: #{conv_block.6} parent=47 // pred_check_branch
        %1148 = sbr.rel (%p1146) target = $region52
      $region51: #{conv_block.6} parent=47 // pred_region
        %p1149 = scmp.lt.s32.totalorder %s23, 1
        %s1150 = scalar_select %p1149, %s23, 1
        %p1151 = scmp.lt.s32.totalorder %s24, 0
        %s1152 = scalar_select %p1151, %s24, 0
        %s1153 = smul.addr %s1152, 18
        %s1154 = smul.addr %s1150, 18
        %s1155 = sadd.s32 %s1153, %s1154
        %s1156 = smul.addr %s1155, 4
        %s1157 = scalar_lea.vmem %s4, %s1156
      $region52: #{conv_block.6} parent=47 // pred_fallthru
        _
      // Predicated region
      $region53: #{conv_block.6} parent=47 // pred_check
        %p1158 = pneg %p198
      $region54: #{conv_block.6} parent=47 // pred_check_branch
        %1160 = sbr.rel (%p1158) target = $region56
      $region55: #{conv_block.6} parent=47 // pred_region
        %p1161 = scmp.lt.s32.totalorder %s23, 1
        %s1162 = scalar_select %p1161, %s23, 1
        %p1163 = scmp.lt.s32.totalorder %s24, 0
        %s1164 = scalar_select %p1163, %s24, 0
        %s1165 = sadd.s32 %s1164, %s1162
        %s1166 = smul.addr %s1165, 2
        %s1167 = scalar_lea.vmem %s5, %s1166
      $region56: #{conv_block.6} parent=47 // pred_fallthru
        _
    $region48: #{conv_block.6} parent=5 // pred_fallthru
      _
  $region6: #{conv_block.6} parent=0 // loop_footer
    %s16 = sadd.s32 1, %s12
  $region7: #{conv_block.6} parent=0 // loop_footer_branch
    %11 = sbr.rel target = $region3
  $region8: #{conv_block.6} parent=0 // loop_exit
    _

// kernel: conv_block.7
$region0: #{conv_block.7}
  #allocation0 [shape = 'u32[]', space=smem, size = 0x4, offset = 0x4, fixed_abs, tag = 'smem constant byte address 0x4 - core index']
  #allocation1 [shape = 'u32[72,128]{1,0:T(1,128)}', space=vmem, size = 0x9000, scoped, tag = 'internal scratch']
  %s0 = inlined_call_operand.vmem [shape: bf16[24,96], index: 0, kind: input, shape index: {}]
  %s1 = inlined_call_operand.vmem [shape: f32[1,96], index: 1, kind: input, shape index: {}]
  %s2 = inlined_call_operand.vmem [shape: f32[1,96], index: 2, kind: input, shape index: {}]
  %s3 = inlined_call_operand.vmem [shape: f32[24,96], index: 3, kind: output, shape index: {}]
  %s4 = sld [smem:[#allocation0]]
  $region93: #{conv_block.7} parent=0
    _
  %s6 = ssub.s32 1, %s4
  %s7 = scalar_select 0, %s6, %s4
  $region1: #{conv_block.7} parent=0
    #allocation2 [shape = 'u8[16384]{0}', space=vmem, size = 0x4000, scoped, tag = 'output window, operand 0']
    loop: start=0, step=1, limit=4
    $region2: #{conv_block.7} parent=1 // loop_pre_header
      _
    $region3: #{conv_block.7} parent=1 // loop_header
      %s9 = sphi 0, %s13
      %p10 = scmp.ge.s32.totalorder %s9, 4
      %s19 = sphi 0, %s21
      %s22 = sphi 0, %s19
      %s23 = sphi 0, %s22
      %s39 = sphi 0, %s23
      %s43 = sphi 0, %s43
      %s45 = sphi 0, %s43
      %s46 = sphi 0, %s45
      %s60 = sphi 0, %s46
      %s64 = sphi 0, %s64
      %s66 = sphi 0, %s64
      %s67 = sphi 0, %s66
      %s81 = sphi 0, %s67
      %s87 = sphi 0, %s89
      %s90 = sphi 0, %s87
      %s91 = sphi 0, %s90
      %s107 = sphi 0, %s91
    $region4: #{conv_block.7} parent=1 // loop_header_branch
      %12 = sbr.rel (%p10) target = $region8
    $region5: #{conv_block.7} parent=1 // loop_body
      %s14 = ssub.s32 %s9, 1
      %s15 = ssub.s32 %s9, 2
      %s16 = sadd.s32 %s9, 1
      %s17 = ssub.s32 %s9, %s16
      %p18 = scmp.eq.s32.totalorder %s17, 0
      %s20 = sadd.s32 %s19, 1
      %s21 = scalar_select %p18, %s19, %s20
      %p24 = pneg %p18
      %p25 = scmp.eq.s32.totalorder %s9, 1
      %p26 = por %p24, %p25
      %p27 = scmp.ne.s32.totalorder %s19, %s22
      %p28 = scmp.eq.s32.totalorder %s9, 0
      %p29 = por %p27, %p28
      %p30 = scmp.ne.s32.totalorder %s19, %s22
      %p31 = scmp.eq.s32.totalorder %s14, 1
      %p32 = por %p30, %p31
      %p33 = scmp.ne.s32.totalorder %s22, %s23
      %p34 = scmp.eq.s32.totalorder %s14, 0
      %p35 = por %p33, %p34
      %p36 = scmp.ne.s32.totalorder %s22, %s23
      %p37 = scmp.eq.s32.totalorder %s15, 1
      %p38 = por %p36, %p37
      %p40 = scmp.ne.s32.totalorder %s23, %s39
      %p41 = scmp.eq.s32.totalorder %s15, 0
      %p42 = por %p40, %p41
      %s44 = sadd.s32 %s43, 1
      %p47 = scmp.eq.s32.totalorder %s9, 1
      %p48 = scmp.ne.s32.totalorder %s43, %s45
      %p49 = scmp.eq.s32.totalorder %s9, 0
      %p50 = por %p48, %p49
      %p51 = scmp.ne.s32.totalorder %s43, %s45
      %p52 = scmp.eq.s32.totalorder %s14, 1
      %p53 = por %p51, %p52
      %p54 = scmp.ne.s32.totalorder %s45, %s46
      %p55 = scmp.eq.s32.totalorder %s14, 0
      %p56 = por %p54, %p55
      %p57 = scmp.ne.s32.totalorder %s45, %s46
      %p58 = scmp.eq.s32.totalorder %s15, 1
      %p59 = por %p57, %p58
      %p61 = scmp.ne.s32.totalorder %s46, %s60
      %p62 = scmp.eq.s32.totalorder %s15, 0
      %p63 = por %p61, %p62
      %s65 = sadd.s32 %s64, 1
      %p68 = scmp.eq.s32.totalorder %s9, 1
      %p69 = scmp.ne.s32.totalorder %s64, %s66
      %p70 = scmp.eq.s32.totalorder %s9, 0
      %p71 = por %p69, %p70
      %p72 = scmp.ne.s32.totalorder %s64, %s66
      %p73 = scmp.eq.s32.totalorder %s14, 1
      %p74 = por %p72, %p73
      %p75 = scmp.ne.s32.totalorder %s66, %s67
      %p76 = scmp.eq.s32.totalorder %s14, 0
      %p77 = por %p75, %p76
      %p78 = scmp.ne.s32.totalorder %s66, %s67
      %p79 = scmp.eq.s32.totalorder %s15, 1
      %p80 = por %p78, %p79
      %p82 = scmp.ne.s32.totalorder %s67, %s81
      %p83 = scmp.eq.s32.totalorder %s15, 0
      %p84 = por %p82, %p83
      %s85 = ssub.s32 %s9, %s16
      %p86 = scmp.eq.s32.totalorder %s85, 0
      %s88 = sadd.s32 %s87, 1
      %s89 = scalar_select %p86, %s87, %s88
      %p92 = pneg %p86
      %p93 = scmp.eq.s32.totalorder %s9, 1
      %p94 = por %p92, %p93
      %p95 = scmp.ne.s32.totalorder %s87, %s90
      %p96 = scmp.eq.s32.totalorder %s9, 0
      %p97 = por %p95, %p96
      %p98 = scmp.ne.s32.totalorder %s87, %s90
      %p99 = scmp.eq.s32.totalorder %s14, 1
      %p100 = por %p98, %p99
      %p101 = scmp.ne.s32.totalorder %s90, %s91
      %p102 = scmp.eq.s32.totalorder %s14, 0
      %p103 = por %p101, %p102
      %p104 = scmp.ne.s32.totalorder %s90, %s91
      %p105 = scmp.eq.s32.totalorder %s15, 1
      %p106 = por %p104, %p105
      %p108 = scmp.ne.s32.totalorder %s91, %s107
      %p109 = scmp.eq.s32.totalorder %s15, 0
      %p110 = por %p108, %p109
      %p111 = scmp.le.s32.totalorder 1, %s9
      %p112 = scmp.lt.s32.totalorder %s9, 3
      %p113 = pnand %p111, %p112
      %p114 = pneg %p113
      // Predicated region
      $region9: #{conv_block.7} parent=5 // pred_check
        _
      $region10: #{conv_block.7} parent=5 // pred_check_branch
        %116 = sbr.rel (%p113) target = $region12
      $region11: #{conv_block.7} parent=5 // pred_region
        %s117 = ssub.s32 %s9, 1
        // Predicated region
        $region13: #{conv_block.7} parent=11 // pred_check
          %p118 = pneg %p56
        $region14: #{conv_block.7} parent=11 // pred_check_branch
          %120 = sbr.rel (%p118) target = $region16
        $region15: #{conv_block.7} parent=11 // pred_region
          _
        $region16: #{conv_block.7} parent=11 // pred_fallthru
          _
        // Predicated region
        $region17: #{conv_block.7} parent=11 // pred_check
          %p121 = pneg %p77
        $region18: #{conv_block.7} parent=11 // pred_check_branch
          %123 = sbr.rel (%p121) target = $region20
        $region19: #{conv_block.7} parent=11 // pred_region
          _
        $region20: #{conv_block.7} parent=11 // pred_fallthru
          _
      $region12: #{conv_block.7} parent=5 // pred_fallthru
        _
      %p124 = scmp.lt.s32.totalorder %s9, 2
      // Predicated region
      $region21: #{conv_block.7} parent=5 // pred_check
        %p125 = pneg %p124
      $region22: #{conv_block.7} parent=5 // pred_check_branch
        %127 = sbr.rel (%p125) target = $region24
      $region23: #{conv_block.7} parent=5 // pred_region
        // Predicated region
        $region25: #{conv_block.7} parent=23 // pred_check
          %p128 = pneg %p29
        $region26: #{conv_block.7} parent=23 // pred_check_branch
          %130 = sbr.rel (%p128) target = $region28
        $region27: #{conv_block.7} parent=23 // pred_region
          %s131 = smul.u32 2, %s9
          %s132 = ssub.s32 3, %s131
          %p133 = scmp.lt.s32.totalorder %s132, 2
          %s134 = scalar_select %p133, %s132, 2
          %s135 = smul.u32 4, %s134
          %p136 = scmp.lt.s32.totalorder %s131, 2
          %s137 = scalar_select %p136, %s131, 2
          %s138 = smul.addr %s137, 4
          %s139 = scalar_lea.vmem %s0, %s138
          %s140 = smul.u32 2, %s9
          %s141 = ssub.s32 3, %s140
          %p142 = scmp.lt.s32.totalorder %s141, 2
          %s143 = scalar_select %p142, %s141, 2
          %s144 = smul.u32 4, %s143
        $region28: #{conv_block.7} parent=23 // pred_fallthru
          _
      $region24: #{conv_block.7} parent=5 // pred_fallthru
        _
      %p145 = scmp.le.s32.totalorder 1, %s9
      %p146 = scmp.lt.s32.totalorder %s9, 3
      %p147 = pnand %p145, %p146
      %p148 = pneg %p147
      // Predicated region
      $region29: #{conv_block.7} parent=5 // pred_check
        _
      $region30: #{conv_block.7} parent=5 // pred_check_branch
        %150 = sbr.rel (%p147) target = $region32
      $region31: #{conv_block.7} parent=5 // pred_region
        %s151 = ssub.s32 %s9, 1
        %s152 = smul.u32 2, %s14
        %s153 = ssub.s32 3, %s152
        %p154 = scmp.lt.s32.totalorder %s153, 2
        %s155 = scalar_select %p154, %s153, 2
        %s156 = smul.u32 4, %s155
        %p157 = scmp.lt.s32.totalorder %s152, 2
        %s158 = scalar_select %p157, %s152, 2
        %s159 = smul.addr %s158, 4
        %s160 = scalar_lea.vmem %s0, %s159
        %p161 = pneg %p35
        %p162 = pneg %p32
        %p163 = pneg %p56
        %p164 = pneg %p53
        %p165 = pneg %p77
        %p166 = pneg %p74
        %p167 = pneg %p103
        %p168 = pneg %p100
        %s169 = sand.u32 %s90, 1
        %s170 = sand.u32 %s90, 1
        %s171 = smul.addr %s170, 16
        %s172 = scalar_lea.vmem [#allocation2], %s171
        %s173 = smul.u32 2, %s14
        %s174 = ssub.s32 3, %s173
        %p175 = scmp.lt.s32.totalorder %s174, 2
        %s176 = scalar_select %p175, %s174, 2
        %s177 = smul.u32 4, %s176
        %p178 = scmp.lt.s32.totalorder %s173, 2
        %s179 = scalar_select %p178, %s173, 2
        %s180 = smul.addr %s179, 4
        %s181 = scalar_lea.vmem %s0, %s180
        %s182 = smul.u32 2, %s14
        %s183 = ssub.s32 3, %s182
        %p184 = scmp.lt.s32.totalorder %s183, 2
        %s185 = scalar_select %p184, %s183, 2
        %s186 = smul.u32 4, %s185
        %s187 = smul.u32 2, %s14
        %s188 = ssub.s32 3, %s187
        %p189 = scmp.lt.s32.totalorder %s188, 2
        %s190 = scalar_select %p189, %s188, 2
        %s191 = smul.u32 8, %s190
        %v192 = vld [vmem:[%s181] sm:$0xf]
        %v193 = vld [vmem:[%s181 + $0x4] sm:$0xf]
        %v194 = vunpack.c.l.bf16 %v192
        %v195 = vunpack.c.l.bf16 %v193
        %v196 = vld [vmem:[%s1] sm:$0x1]
        %v198 = vperm.slane %v196, 0
        %v200 = vmul.f32 %v194, %v198
        %v201 = vmul.f32 %v195, %v198
        %v202 = vld [vmem:[%s2] sm:$0x1]
        %v204 = vperm.slane %v202, 0
        %v206 = vadd.f32 %v200, %v204
        %v207 = vadd.f32 %v201, %v204
        %v208 = vmax.f32 %v206, 0.0
        %v209 = vmax.f32 %v207, 0.0
        %vm210 = vcmask 785408
        %211 = vst.msk [vmem:[%s172] sm:$0xff] %vm210, %v208
        %212 = vst.msk [vmem:[%s172 + $0x8] sm:$0xff] %vm210, %v209
        %s213 = sand.u32 %s90, 1
        %s214 = sand.u32 %s90, 1
        %s215 = smul.addr %s214, 16
        %s216 = scalar_lea.vmem [#allocation2], %s215
        // Predicated region
        $region33: #{conv_block.7} parent=31 // pred_check
          %p217 = pneg %p100
        $region34: #{conv_block.7} parent=31 // pred_check_branch
          %219 = sbr.rel (%p217) target = $region36
        $region35: #{conv_block.7} parent=31 // pred_region
          %s220 = smul.u32 2, %s14
          %s221 = ssub.s32 3, %s220
          %p222 = scmp.lt.s32.totalorder %s221, 2
          %s223 = scalar_select %p222, %s221, 2
          %s224 = smul.u32 8, %s223
          %p225 = scmp.ne.s32.totalorder 0, %s224
          %s226 = smul.addr %s220, 8
          %s227 = scalar_lea.vmem %s3, %s226
          // Predicated region
          $region37: #{conv_block.7} parent=35 // pred_check
            %p228 = pneg %p225
          $region38: #{conv_block.7} parent=35 // pred_check_branch
            %230 = sbr.rel (%p228) target = $region40
          $region39: #{conv_block.7} parent=35 // pred_region
            // Predicated region
            $region41: #{conv_block.7} parent=39 // pred_check
              _
            $region42: #{conv_block.7} parent=39 // pred_check_branch
              %232 = sbr.rel (0) target = $region44
            $region43: #{conv_block.7} parent=39 // pred_region
              // Predicated region
              $region63: #{conv_block.7} parent=43 // pred_check
                _
              $region64: #{conv_block.7} parent=43 // pred_check_branch
                %284 = sbr.rel (0) target = $region66
              $region65: #{conv_block.7} parent=43 // pred_region
                %s285 = sshrl.u32 %s223, 1
                // While loop
                $region67: #{conv_block.7} parent=65 // loop_pre_header
                  _
                $region68: #{conv_block.7} parent=65 // loop_header
                  %s287 = sphi 0, %s289
                  %p288 = scmp.ge.s32.totalorder %s287, %s285
                  %s292 = sphi 0, %s301
                  %s293 = sphi %s216, %s304
                  %s294 = sphi %s227, %s305
                $region69: #{conv_block.7} parent=65 // loop_header_branch
                  %291 = sbr.rel (%p288) target = $region73
                $region70: #{conv_block.7} parent=65 // loop_body
                  %v295 = vld [vmem:[%s293] sm:$0xff]
                  %296 = vst [vmem:[%s294] sm:$0xff] %v295
                  %v297 = vld [vmem:[%s293 + $0x8] sm:$0xff]
                  %298 = vst [vmem:[%s294 + $0x8] sm:$0xff] %v297
                  %s299 = sadd.s32 1, %s292
                  %p300 = scmp.ge.s32.totalorder %s299, %s285
                  %s301 = scalar_select %p300, 0, %s299
                  %s302 = smul.u32 %s301, 16
                  %s303 = smul.u32 %s301, 16
                  %s304 = scalar_lea.vmem %s216, %s302 [#allocation2]
                  %s305 = scalar_lea.vmem %s227, %s303
                $region71: #{conv_block.7} parent=65 // loop_footer
                  %s289 = sadd.s32 %s287, 1
                $region72: #{conv_block.7} parent=65 // loop_footer_branch
                  %286 = sbr.rel target = $region68
                $region73: #{conv_block.7} parent=65 // loop_exit
                  _
                %s306 = sshrl.u32 %s223, 1
                %s307 = sand.u32 %s223, 1
                %s308 = smul.u32 %s306, 2
                %s309 = smul.u32 8, %s308
                %s310 = scalar_lea.vmem %s216, %s309 [#allocation2]
                %s311 = smul.u32 8, %s308
                %s312 = scalar_lea.vmem %s227, %s311
                // While loop
                $region74: #{conv_block.7} parent=65 // loop_pre_header
                  _
                $region75: #{conv_block.7} parent=65 // loop_header
                  %s314 = sphi 0, %s316
                  %p315 = scmp.ge.s32.totalorder %s314, %s307
                  %s319 = sphi 0, %s326
                  %s320 = sphi %s310, %s329
                  %s321 = sphi %s312, %s330
                $region76: #{conv_block.7} parent=65 // loop_header_branch
                  %318 = sbr.rel (%p315) target = $region80
                $region77: #{conv_block.7} parent=65 // loop_body
                  %v322 = vld [vmem:[%s320] sm:$0xff]
                  %323 = vst [vmem:[%s321] sm:$0xff] %v322
                  %s324 = sadd.s32 1, %s319
                  %p325 = scmp.ge.s32.totalorder %s324, %s307
                  %s326 = scalar_select %p325, 0, %s324
                  %s327 = smul.u32 %s326, 8
                  %s328 = smul.u32 %s326, 8
                  %s329 = scalar_lea.vmem %s310, %s327 [#allocation2]
                  %s330 = scalar_lea.vmem %s312, %s328
                $region78: #{conv_block.7} parent=65 // loop_footer
                  %s316 = sadd.s32 %s314, 1
                $region79: #{conv_block.7} parent=65 // loop_footer_branch
                  %313 = sbr.rel target = $region75
                $region80: #{conv_block.7} parent=65 // loop_exit
                  _
              $region66: #{conv_block.7} parent=43 // pred_fallthru
                _
              // Predicated region
              $region81: #{conv_block.7} parent=43 // pred_check
                _
              $region82: #{conv_block.7} parent=43 // pred_check_branch
                %332 = sbr.rel target = $region84
              $region83: #{conv_block.7} parent=43 // pred_region
                _
              $region84: #{conv_block.7} parent=43 // pred_fallthru
                _
            $region44: #{conv_block.7} parent=39 // pred_fallthru
              _
            // Predicated region
            $region45: #{conv_block.7} parent=39 // pred_check
              _
            $region46: #{conv_block.7} parent=39 // pred_check_branch
              %234 = sbr.rel target = $region48
            $region47: #{conv_block.7} parent=39 // pred_region
              %s236 = ssub.s32 256, 1
              %s237 = sshrl.u32 %s223, 1
              // While loop
              $region49: #{conv_block.7} parent=47 // loop_pre_header
                _
              $region50: #{conv_block.7} parent=47 // loop_header
                %s239 = sphi 0, %s241
                %p240 = scmp.ge.s32.totalorder %s239, %s237
                %s244 = sphi 0, %s253
                %s245 = sphi %s216, %s256
                %s246 = sphi %s227, %s257
              $region51: #{conv_block.7} parent=47 // loop_header_branch
                %243 = sbr.rel (%p240) target = $region55
              $region52: #{conv_block.7} parent=47 // loop_body
                %v247 = vld [vmem:[%s245] sm:%s236]
                %248 = vst [vmem:[%s246] sm:%s236] %v247
                %v249 = vld [vmem:[%s245 + $0x8] sm:%s236]
                %250 = vst [vmem:[%s246 + $0x8] sm:%s236] %v249
                %s251 = sadd.s32 1, %s244
                %p252 = scmp.ge.s32.totalorder %s251, %s237
                %s253 = scalar_select %p252, 0, %s251
                %s254 = smul.u32 %s253, 16
                %s255 = smul.u32 %s253, 16
                %s256 = scalar_lea.vmem %s216, %s254 [#allocation2]
                %s257 = scalar_lea.vmem %s227, %s255
              $region53: #{conv_block.7} parent=47 // loop_footer
                %s241 = sadd.s32 %s239, 1
              $region54: #{conv_block.7} parent=47 // loop_footer_branch
                %238 = sbr.rel target = $region50
              $region55: #{conv_block.7} parent=47 // loop_exit
                _
              %s258 = sshrl.u32 %s223, 1
              %s259 = sand.u32 %s223, 1
              %s260 = smul.u32 %s258, 2
              %s261 = smul.u32 8, %s260
              %s262 = scalar_lea.vmem %s216, %s261 [#allocation2]
              %s263 = smul.u32 8, %s260
              %s264 = scalar_lea.vmem %s227, %s263
              // While loop
              $region56: #{conv_block.7} parent=47 // loop_pre_header
                _
              $region57: #{conv_block.7} parent=47 // loop_header
                %s266 = sphi 0, %s268
                %p267 = scmp.ge.s32.totalorder %s266, %s259
                %s271 = sphi 0, %s278
                %s272 = sphi %s262, %s281
                %s273 = sphi %s264, %s282
              $region58: #{conv_block.7} parent=47 // loop_header_branch
                %270 = sbr.rel (%p267) target = $region62
              $region59: #{conv_block.7} parent=47 // loop_body
                %v274 = vld [vmem:[%s272] sm:%s236]
                %275 = vst [vmem:[%s273] sm:%s236] %v274
                %s276 = sadd.s32 1, %s271
                %p277 = scmp.ge.s32.totalorder %s276, %s259
                %s278 = scalar_select %p277, 0, %s276
                %s279 = smul.u32 %s278, 8
                %s280 = smul.u32 %s278, 8
                %s281 = scalar_lea.vmem %s262, %s279 [#allocation2]
                %s282 = scalar_lea.vmem %s264, %s280
              $region60: #{conv_block.7} parent=47 // loop_footer
                %s268 = sadd.s32 %s266, 1
              $region61: #{conv_block.7} parent=47 // loop_footer_branch
                %265 = sbr.rel target = $region57
              $region62: #{conv_block.7} parent=47 // loop_exit
                _
            $region48: #{conv_block.7} parent=39 // pred_fallthru
              _
          $region40: #{conv_block.7} parent=35 // pred_fallthru
            _
          %333 = vnop
        $region36: #{conv_block.7} parent=31 // pred_fallthru
          _
      $region32: #{conv_block.7} parent=5 // pred_fallthru
        _
      %p334 = scmp.le.s32.totalorder 2, %s9
      // Predicated region
      $region85: #{conv_block.7} parent=5 // pred_check
        %p335 = pneg %p334
      $region86: #{conv_block.7} parent=5 // pred_check_branch
        %337 = sbr.rel (%p335) target = $region88
      $region87: #{conv_block.7} parent=5 // pred_region
        %s338 = ssub.s32 %s9, 2
        // Predicated region
        $region89: #{conv_block.7} parent=87 // pred_check
          %p339 = pneg %p106
        $region90: #{conv_block.7} parent=87 // pred_check_branch
          %341 = sbr.rel (%p339) target = $region92
        $region91: #{conv_block.7} parent=87 // pred_region
          %s342 = sand.u32 %s91, 1
          %s343 = sand.u32 %s91, 1
          %s344 = smul.addr %s343, 16
          %s345 = scalar_lea.vmem [#allocation2], %s344
        $region92: #{conv_block.7} parent=87 // pred_fallthru
          _
      $region88: #{conv_block.7} parent=5 // pred_fallthru
        _
    $region6: #{conv_block.7} parent=1 // loop_footer
      %s13 = sadd.s32 1, %s9
    $region7: #{conv_block.7} parent=1 // loop_footer_branch
      %8 = sbr.rel target = $region3
    $region8: #{conv_block.7} parent=1 // loop_exit
      _

</llo_original>
